<compile_context>
chip_gen: v6e
topology: v6e:2x2x1
jax: 0.10.0
libtpu: 0.0.40
codegen_flags: <defaults>
</compile_context>

<pallas_src>
import functools

import jax
import jax.numpy as jnp
import numpy as np
from jax import lax
from jax.experimental import pallas as pl
from jax.experimental.pallas import tpu as pltpu


def _db1_kernel(x_ref, w_ref, b_ref, col_ref, out_ref, xpad_ref, *,
                H, W, d, cin, cout, tile, padL, hw, precision):
    """One lane-dense output tile of conv1x1(x) + conv3x3_dilated(x).

    x_ref   : (1, Cin, HW)        whole flattened image (resident across tiles)
    w_ref   : (Cout, 9*Cin)       3x3 taps, tap-major / channel-minor, 1x1 folded
    b_ref   : (Cout, 1)           combined bias b0 + b1 (f32)
    col_ref : (1, tile)           column index of each lane (tile-periodic const)
    out_ref : (1, Cout, tile)     lane-dense output tile
    xpad_ref: (Cin, HW + 2*padL)  zero-halo-padded copy of the image (scratch)
    """
    t = pl.program_id(1)
    win_w = tile + 2 * padL

    # Build the halo-padded image once per batch element; it stays resident in
    # scratch across the spatial tiles of this image.  padL is a multiple of
    # 128 so the copy and the zero fills are lane-aligned.
    @pl.when(t == 0)
    def _build_padded_image():
        zeros_pad = jnp.zeros((cin, padL), xpad_ref.dtype)
        xpad_ref[:, pl.ds(0, padL)] = zeros_pad
        xpad_ref[:, pl.ds(padL + hw, padL)] = zeros_pad
        xpad_ref[:, pl.ds(padL, hw)] = x_ref[0]

    base = pl.multiple_of(t * tile, tile)

    # Window of the padded image that covers every tap's shifted tile.
    # (128-aligned dynamic start; per-tap shifts are handled below with static
    #  pltpu.roll + aligned static slices, so no unaligned dynamic slicing.)
    win = xpad_ref[:, pl.ds(base, win_w)]                       # (Cin, win_w)

    # In-kernel boundary masks (replaces the HBM mask tensor of v2).
    # Flattened pixel index p = row*W + col; row >= d  <=>  p >= d*W, etc.
    p = base + lax.broadcasted_iota(jnp.int32, (1, tile), 1)    # global index
    col = col_ref[...]                                          # (1, tile) == p % W
    row_ok = (p >= d * W, None, p < (H - d) * W)                # dy = -d, 0, +d
    col_ok = (col >= d, None, col < (W - d))                    # dx = -d, 0, +d

    acc = jnp.zeros((cout, tile), jnp.float32)
    k = 0
    for iy in range(3):
        for ix in range(3):
            dy = (iy - 1) * d
            dx = (ix - 1) * d
            shift = dy * W + dx                                 # flattened tap offset
            off = padL + shift                                  # static, >= 0
            if off % 128 == 0:
                # Lane-aligned tap (e.g. the centre tap): plain static slice.
                xs = win[:, off:off + tile]
            else:
                # Static lane rotation (XLU) + aligned slice; rolled[p] =
                # win[p + off] for p < tile (no wrap since off + tile <= win_w).
                xs = pltpu.roll(win, shift=(-off) % win_w, axis=1)[:, :tile]
            part = jnp.dot(w_ref[:, k * cin:(k + 1) * cin], xs,
                           preferred_element_type=jnp.float32,
                           precision=precision)                 # (Cout, tile) f32
            rm, cm = row_ok[iy], col_ok[ix]
            if rm is not None or cm is not None:
                if rm is None:
                    ok = cm
                elif cm is None:
                    ok = rm
                else:
                    ok = jnp.logical_and(rm, cm)
                part = part * ok.astype(part.dtype)             # zero OOB taps
            acc = acc + part
            k += 1

    out_ref[0] = (acc + b_ref[...]).astype(out_ref.dtype)


def _round_up(x, m):
    return (x + m - 1) // m * m


def _pick_tile(hw, w, cap):
    """Largest spatial tile <= cap that divides HW and is a multiple of both
    128 (lane alignment) and W (so the column-index constant is tile-periodic).
    Falls back to the whole image if no such tile exists."""
    limit = min(cap, hw)
    for t in range(limit, 127, -1):
        if hw % t == 0 and t % 128 == 0 and t % w == 0:
            return t
    return hw


def db1_forward(x_nchw, w0, b0, w1, b1, d=1, tile_cap=8192):
    """Equivalent of DB_1.forward: conv1x1(x) + conv3x3_dilated(x).

    x_nchw : (N, Cin, H, W)
    w0     : (Cout, Cin, 1, 1), b0: (Cout,)   -- 1x1 conv params (PyTorch OIHW)
    w1     : (Cout, Cin, 3, 3), b1: (Cout,)   -- 3x3 dilated conv params
    returns: (N, Cout, H, W)
    """
    N, Cin, H, W = x_nchw.shape
    Cout = w0.shape[0]
    HW = H * W

    tile = _pick_tile(HW, W, tile_cap)
    assert HW % tile == 0
    assert tile % W == 0 or HW // tile == 1
    n_sp = HW // tile

    pad = d * W + d                      # max |flattened tap offset|
    padL = _round_up(pad, 128)           # lane-aligned halo width on each side

    # Free (metadata-only) reshape — no transpose, no pad, no extra HBM pass.
    x_flat = x_nchw.reshape(N, Cin, HW)

    # (Cout, Cin, 3, 3) -> (Cout, ky, kx, Cin) -> (Cout, 9*Cin), tap-major.
    # Tap k = ky*3 + kx pairs with (dy, dx) = ((ky-1)*d, (kx-1)*d) in the kernel.
    w_k = jnp.transpose(w1, (0, 2, 3, 1)).reshape(Cout, 9 * Cin)
    # Fold the 1x1 branch into the centre tap (ky=1, kx=1 -> tap index 4).
    w_k = w_k.at[:, 4 * Cin:5 * Cin].add(w0[:, :, 0, 0])
    w_k = w_k.astype(x_nchw.dtype)
    b_k = (b0 + b1).reshape(Cout, 1).astype(jnp.float32)

    # Tiny tile-periodic column-index constant (valid because tile % W == 0 or
    # there is a single tile); read once and resident, ~0 HBM traffic.
    col_ids = jnp.asarray((np.arange(tile) % W).reshape(1, tile), dtype=jnp.int32)

    # Explicit VMEM budget (v5e default scoped limit is only 16 MiB).
    isz = jnp.dtype(x_nchw.dtype).itemsize
    est = (2 * Cin * HW * isz                       # double-buffered image block
           + Cin * (HW + 2 * padL) * isz            # halo-padded scratch
           + 2 * Cout * tile * isz                  # double-buffered output block
           + 4 * Cin * (tile + 2 * padL) * 4        # in-kernel temporaries (approx)
           + 4 * Cout * tile * 4)
    vmem_limit = int(min(64 * 2 ** 20, max(2 * est, 32 * 2 ** 20)))

    # Exact f32 parity with the reference when x is f32; native bf16 otherwise.
    precision = lax.Precision.HIGHEST if x_nchw.dtype == jnp.float32 else None

    kernel = functools.partial(
        _db1_kernel, H=H, W=W, d=d, cin=Cin, cout=Cout, tile=tile,
        padL=padL, hw=HW, precision=precision)

    out_flat = pl.pallas_call(
        kernel,
        out_shape=jax.ShapeDtypeStruct((N, Cout, HW), x_nchw.dtype),
        grid_spec=pltpu.PrefetchScalarGridSpec(
            num_scalar_prefetch=0,
            grid=(N, n_sp),
            in_specs=[
                pl.BlockSpec((1, Cin, HW), lambda n, t: (n, 0, 0)),
                pl.BlockSpec((Cout, 9 * Cin), lambda n, t: (0, 0)),
                pl.BlockSpec((Cout, 1), lambda n, t: (0, 0)),
                pl.BlockSpec((1, tile), lambda n, t: (0, 0)),
            ],
            out_specs=pl.BlockSpec((1, Cout, tile), lambda n, t: (n, 0, t)),
            scratch_shapes=[pltpu.VMEM((Cin, HW + 2 * padL), x_nchw.dtype)],
        ),
        compiler_params=pltpu.CompilerParams(
            dimension_semantics=("parallel", "arbitrary"),
            vmem_limit_bytes=vmem_limit),
    )(x_flat, w_k, b_k, col_ids)

    return out_flat.reshape(N, Cout, H, W)


def _reference(x_nchw, w0, b0, w1, b1, d=1):
    """Pure-JAX reference using lax.conv_general_dilated (NCHW, like PyTorch)."""
    dn = lax.conv_dimension_numbers(x_nchw.shape, w0.shape,
                                    ("NCHW", "OIHW", "NCHW"))
    y0 = lax.conv_general_dilated(x_nchw, w0, window_strides=(1, 1),
                                  padding=((0, 0), (0, 0)),
                                  dimension_numbers=dn,
                                  precision=lax.Precision.HIGHEST
                                  ) + b0[None, :, None, None]
    y1 = lax.conv_general_dilated(x_nchw, w1, window_strides=(1, 1),
                                  padding=((d, d), (d, d)),
                                  rhs_dilation=(d, d),
                                  dimension_numbers=dn,
                                  precision=lax.Precision.HIGHEST
                                  ) + b1[None, :, None, None]
    return y0 + y1


def _run_case(N, Cin, H, W, d, tile_cap, seed):
    Cout = Cin // 2
    key = jax.random.PRNGKey(seed)
    kx, k0w, k0b, k1w, k1b = jax.random.split(key, 5)
    x = jax.random.normal(kx, (N, Cin, H, W), dtype=jnp.float32)
    # Deterministic synthetic parameters (PyTorch Conv2d layout: OIHW + bias).
    w0 = jax.random.normal(k0w, (Cout, Cin, 1, 1), dtype=jnp.float32) * 0.1
    b0 = jax.random.normal(k0b, (Cout,), dtype=jnp.float32) * 0.1
    w1 = jax.random.normal(k1w, (Cout, Cin, 3, 3), dtype=jnp.float32) * 0.1
    b1 = jax.random.normal(k1b, (Cout,), dtype=jnp.float32) * 0.1

    fwd = jax.jit(functools.partial(db1_forward, d=d, tile_cap=tile_cap))
    out = jax.block_until_ready(fwd(x, w0, b0, w1, b1))
    ref = jax.block_until_ready(_reference(x, w0, b0, w1, b1, d=d))
    assert out.shape == (N, Cout, H, W), out.shape
    err = float(jnp.max(jnp.abs(out - ref)))
    # With precision=HIGHEST the error is ~1e-6; 1e-3 still catches any
    # structural (mask / tap / layout) bug while being robust to MXU passes.
    assert err < 1e-3, err
    return err


if __name__ == "__main__":
    # Canonical small shape consistent with DB_1: in_channels=4 -> out=2, d=1.
    _run_case(2, 4, 16, 16, d=1, tile_cap=8192, seed=0)
    # Exercise multiple spatial tiles (tile=128 -> 2 grid steps) and dilation 2.
    _run_case(1, 4, 16, 16, d=2, tile_cap=128, seed=0)
    print("KERNEL_OK")
</pallas_src>

<mosaic_0001>
module attributes {stable_mosaic.version = 11 : i64} {
  func.func @_db1_kernel(%arg0: i32, %arg1: i32, %arg2: memref<1x4x256xf32, #tpu.memory_space<vmem>>, %arg3: memref<2x36xf32, #tpu.memory_space<vmem>>, %arg4: memref<2x1xf32, #tpu.memory_space<vmem>>, %arg5: memref<1x256xi32, #tpu.memory_space<vmem>>, %arg6: memref<1x2x256xf32, #tpu.memory_space<vmem>>, %arg7: memref<4x512xf32, #tpu.memory_space<vmem>>) attributes {dimension_semantics = [#tpu.dimension_semantics<parallel>, #tpu.dimension_semantics<arbitrary>], iteration_bounds = array<i64: 2, 1>, scalar_prefetch = 0 : i64, scratch_operands = 1 : i64, tpu.core_type = #tpu.core_type<tc>, window_params = [{transform_indices = @transform_0, window_bounds = array<i64: 1, 4, 256>}, {pipeline_mode = #tpu.pipeline_mode<synchronous>, transform_indices = @transform_1, window_bounds = array<i64: 2, 36>}, {pipeline_mode = #tpu.pipeline_mode<synchronous>, transform_indices = @transform_2, window_bounds = array<i64: 2, 1>}, {pipeline_mode = #tpu.pipeline_mode<synchronous>, transform_indices = @transform_3, window_bounds = array<i64: 1, 256>}, {transform_indices = @transform_4, window_bounds = array<i64: 1, 2, 256>}]} {
    %c0_i32 = arith.constant 0 : i32
    %0 = arith.cmpi eq, %arg1, %c0_i32 : i32
    %1 = arith.extui %0 : i1 to i32
    %c0_i32_0 = arith.constant 0 : i32
    %2 = arith.cmpi ne, %1, %c0_i32_0 : i32
    scf.if %2 {
      %cst_27 = arith.constant 0.000000e+00 : f32
      %106 = vector.broadcast %cst_27 : f32 to vector<4x128xf32>
      %c0_28 = arith.constant 0 : index
      %c0_29 = arith.constant 0 : index
      %107 = vector.load %arg7[%c0_28, %c0_29] : memref<4x512xf32, #tpu.memory_space<vmem>>, vector<4x128xf32>
      tpu.vector_store %arg7[%c0_28, %c0_29], %106 {strides = array<i32>} : memref<4x512xf32, #tpu.memory_space<vmem>>, vector<4x128xf32>,
      %c0_30 = arith.constant 0 : index
      %c384 = arith.constant 384 : index
      %108 = vector.load %arg7[%c0_30, %c384] : memref<4x512xf32, #tpu.memory_space<vmem>>, vector<4x128xf32>
      tpu.vector_store %arg7[%c0_30, %c384], %106 {strides = array<i32>} : memref<4x512xf32, #tpu.memory_space<vmem>>, vector<4x128xf32>,
      %c0_31 = arith.constant 0 : index
      %c0_32 = arith.constant 0 : index
      %c0_33 = arith.constant 0 : index
      %109 = vector.load %arg2[%c0_31, %c0_32, %c0_33] : memref<1x4x256xf32, #tpu.memory_space<vmem>>, vector<1x4x256xf32>
      %110 = vector.shape_cast %109 : vector<1x4x256xf32> to vector<4x256xf32>
      %c0_34 = arith.constant 0 : index
      %c128 = arith.constant 128 : index
      %111 = vector.load %arg7[%c0_34, %c128] : memref<4x512xf32, #tpu.memory_space<vmem>>, vector<4x256xf32>
      tpu.vector_store %arg7[%c0_34, %c128], %110 {strides = array<i32>} : memref<4x512xf32, #tpu.memory_space<vmem>>, vector<4x256xf32>,
    } else {
    }
    %c256_i32 = arith.constant 256 : i32
    %3 = arith.muli %arg1, %c256_i32 : i32
    %4 = tpu.assume_multiple %3, 256 : i32
    %c0 = arith.constant 0 : index
    %5 = arith.index_cast %4 : i32 to index
    %6 = vector.load %arg7[%c0, %5] : memref<4x512xf32, #tpu.memory_space<vmem>>, vector<4x512xf32>
    %7 = tpu.iota {dimensions = array<i32: 1>} : vector<1x256xi32>
    %8 = vector.broadcast %4 : i32 to vector<1x256xi32>
    %9 = arith.addi %8, %7 : vector<1x256xi32>
    %c0_1 = arith.constant 0 : index
    %c0_2 = arith.constant 0 : index
    %10 = vector.load %arg5[%c0_1, %c0_2] : memref<1x256xi32, #tpu.memory_space<vmem>>, vector<1x256xi32>
    %c16_i32 = arith.constant 16 : i32
    %11 = vector.broadcast %c16_i32 : i32 to vector<1x256xi32>
    %12 = arith.cmpi sge, %9, %11 : vector<1x256xi32>
    %c240_i32 = arith.constant 240 : i32
    %13 = vector.broadcast %c240_i32 : i32 to vector<1x256xi32>
    %14 = arith.cmpi slt, %9, %13 : vector<1x256xi32>
    %c1_i32 = arith.constant 1 : i32
    %15 = vector.broadcast %c1_i32 : i32 to vector<1x256xi32>
    %16 = arith.cmpi sge, %10, %15 : vector<1x256xi32>
    %c15_i32 = arith.constant 15 : i32
    %17 = vector.broadcast %c15_i32 : i32 to vector<1x256xi32>
    %18 = arith.cmpi slt, %10, %17 : vector<1x256xi32>
    %cst = arith.constant 0.000000e+00 : f32
    %19 = vector.broadcast %cst : f32 to vector<2x256xf32>
    %c401_i32 = arith.constant 401 : i32
    %20 = tpu.dynamic_rotate %6 by %c401_i32 dim 1 : vector<4x512xf32>, i32 -> vector<4x512xf32>
    %21 = vector.extract_strided_slice %20 {offsets = [0, 0], sizes = [4, 256], strides = [1, 1]} : vector<4x512xf32> to vector<4x256xf32>
    %c0_3 = arith.constant 0 : index
    %c0_4 = arith.constant 0 : index
    %22 = vector.load %arg3[%c0_3, %c0_4] : memref<2x36xf32, #tpu.memory_space<vmem>>, vector<2x4xf32>
    %cst_5 = arith.constant dense<0.000000e+00> : vector<2x256xf32>
    %23 = tpu.matmul %22, %21, %cst_5 {dimension_numbers = #tpu.dot_dimension_numbers<[1], [0], [0], [1], [0, 0, 1, 1], [], []>, precision = #tpu.contract_precision<fp32>} : vector<2x4xf32>, vector<4x256xf32>, vector<2x256xf32> -> vector<2x256xf32>
    %24 = arith.andi %12, %16 : vector<1x256xi1>
    %25 = arith.extui %24 : vector<1x256xi1> to vector<1x256xi32>
    %26 = arith.sitofp %25 : vector<1x256xi32> to vector<1x256xf32>
    %27 = vector.broadcast %26 : vector<1x256xf32> to vector<2x256xf32>
    %28 = arith.mulf %23, %27 : vector<2x256xf32>
    %29 = arith.addf %19, %28 : vector<2x256xf32>
    %c400_i32 = arith.constant 400 : i32
    %30 = tpu.dynamic_rotate %6 by %c400_i32 dim 1 : vector<4x512xf32>, i32 -> vector<4x512xf32>
    %31 = vector.extract_strided_slice %30 {offsets = [0, 0], sizes = [4, 256], strides = [1, 1]} : vector<4x512xf32> to vector<4x256xf32>
    %c0_6 = arith.constant 0 : index
    %c4 = arith.constant 4 : index
    %32 = vector.load %arg3[%c0_6, %c4] : memref<2x36xf32, #tpu.memory_space<vmem>>, vector<2x4xf32>
    %cst_7 = arith.constant dense<0.000000e+00> : vector<2x256xf32>
    %33 = tpu.matmul %32, %31, %cst_7 {dimension_numbers = #tpu.dot_dimension_numbers<[1], [0], [0], [1], [0, 0, 1, 1], [], []>, precision = #tpu.contract_precision<fp32>} : vector<2x4xf32>, vector<4x256xf32>, vector<2x256xf32> -> vector<2x256xf32>
    %34 = arith.extui %12 : vector<1x256xi1> to vector<1x256xi32>
    %35 = arith.sitofp %34 : vector<1x256xi32> to vector<1x256xf32>
    %36 = vector.broadcast %35 : vector<1x256xf32> to vector<2x256xf32>
    %37 = arith.mulf %33, %36 : vector<2x256xf32>
    %38 = arith.addf %29, %37 : vector<2x256xf32>
    %c399_i32 = arith.constant 399 : i32
    %39 = tpu.dynamic_rotate %6 by %c399_i32 dim 1 : vector<4x512xf32>, i32 -> vector<4x512xf32>
    %40 = vector.extract_strided_slice %39 {offsets = [0, 0], sizes = [4, 256], strides = [1, 1]} : vector<4x512xf32> to vector<4x256xf32>
    %c0_8 = arith.constant 0 : index
    %c8 = arith.constant 8 : index
    %41 = vector.load %arg3[%c0_8, %c8] : memref<2x36xf32, #tpu.memory_space<vmem>>, vector<2x4xf32>
    %cst_9 = arith.constant dense<0.000000e+00> : vector<2x256xf32>
    %42 = tpu.matmul %41, %40, %cst_9 {dimension_numbers = #tpu.dot_dimension_numbers<[1], [0], [0], [1], [0, 0, 1, 1], [], []>, precision = #tpu.contract_precision<fp32>} : vector<2x4xf32>, vector<4x256xf32>, vector<2x256xf32> -> vector<2x256xf32>
    %43 = arith.andi %12, %18 : vector<1x256xi1>
    %44 = arith.extui %43 : vector<1x256xi1> to vector<1x256xi32>
    %45 = arith.sitofp %44 : vector<1x256xi32> to vector<1x256xf32>
    %46 = vector.broadcast %45 : vector<1x256xf32> to vector<2x256xf32>
    %47 = arith.mulf %42, %46 : vector<2x256xf32>
    %48 = arith.addf %38, %47 : vector<2x256xf32>
    %c385_i32 = arith.constant 385 : i32
    %49 = tpu.dynamic_rotate %6 by %c385_i32 dim 1 : vector<4x512xf32>, i32 -> vector<4x512xf32>
    %50 = vector.extract_strided_slice %49 {offsets = [0, 0], sizes = [4, 256], strides = [1, 1]} : vector<4x512xf32> to vector<4x256xf32>
    %c0_10 = arith.constant 0 : index
    %c12 = arith.constant 12 : index
    %51 = vector.load %arg3[%c0_10, %c12] : memref<2x36xf32, #tpu.memory_space<vmem>>, vector<2x4xf32>
    %cst_11 = arith.constant dense<0.000000e+00> : vector<2x256xf32>
    %52 = tpu.matmul %51, %50, %cst_11 {dimension_numbers = #tpu.dot_dimension_numbers<[1], [0], [0], [1], [0, 0, 1, 1], [], []>, precision = #tpu.contract_precision<fp32>} : vector<2x4xf32>, vector<4x256xf32>, vector<2x256xf32> -> vector<2x256xf32>
    %53 = arith.extui %16 : vector<1x256xi1> to vector<1x256xi32>
    %54 = arith.sitofp %53 : vector<1x256xi32> to vector<1x256xf32>
    %55 = vector.broadcast %54 : vector<1x256xf32> to vector<2x256xf32>
    %56 = arith.mulf %52, %55 : vector<2x256xf32>
    %57 = arith.addf %48, %56 : vector<2x256xf32>
    %58 = vector.extract_strided_slice %6 {offsets = [0, 128], sizes = [4, 256], strides = [1, 1]} : vector<4x512xf32> to vector<4x256xf32>
    %c0_12 = arith.constant 0 : index
    %c16 = arith.constant 16 : index
    %59 = vector.load %arg3[%c0_12, %c16] : memref<2x36xf32, #tpu.memory_space<vmem>>, vector<2x4xf32>
    %cst_13 = arith.constant dense<0.000000e+00> : vector<2x256xf32>
    %60 = tpu.matmul %59, %58, %cst_13 {dimension_numbers = #tpu.dot_dimension_numbers<[1], [0], [0], [1], [0, 0, 1, 1], [], []>, precision = #tpu.contract_precision<fp32>} : vector<2x4xf32>, vector<4x256xf32>, vector<2x256xf32> -> vector<2x256xf32>
    %61 = arith.addf %57, %60 : vector<2x256xf32>
    %c383_i32 = arith.constant 383 : i32
    %62 = tpu.dynamic_rotate %6 by %c383_i32 dim 1 : vector<4x512xf32>, i32 -> vector<4x512xf32>
    %63 = vector.extract_strided_slice %62 {offsets = [0, 0], sizes = [4, 256], strides = [1, 1]} : vector<4x512xf32> to vector<4x256xf32>
    %c0_14 = arith.constant 0 : index
    %c20 = arith.constant 20 : index
    %64 = vector.load %arg3[%c0_14, %c20] : memref<2x36xf32, #tpu.memory_space<vmem>>, vector<2x4xf32>
    %cst_15 = arith.constant dense<0.000000e+00> : vector<2x256xf32>
    %65 = tpu.matmul %64, %63, %cst_15 {dimension_numbers = #tpu.dot_dimension_numbers<[1], [0], [0], [1], [0, 0, 1, 1], [], []>, precision = #tpu.contract_precision<fp32>} : vector<2x4xf32>, vector<4x256xf32>, vector<2x256xf32> -> vector<2x256xf32>
    %66 = arith.extui %18 : vector<1x256xi1> to vector<1x256xi32>
    %67 = arith.sitofp %66 : vector<1x256xi32> to vector<1x256xf32>
    %68 = vector.broadcast %67 : vector<1x256xf32> to vector<2x256xf32>
    %69 = arith.mulf %65, %68 : vector<2x256xf32>
    %70 = arith.addf %61, %69 : vector<2x256xf32>
    %c369_i32 = arith.constant 369 : i32
    %71 = tpu.dynamic_rotate %6 by %c369_i32 dim 1 : vector<4x512xf32>, i32 -> vector<4x512xf32>
    %72 = vector.extract_strided_slice %71 {offsets = [0, 0], sizes = [4, 256], strides = [1, 1]} : vector<4x512xf32> to vector<4x256xf32>
    %c0_16 = arith.constant 0 : index
    %c24 = arith.constant 24 : index
    %73 = vector.load %arg3[%c0_16, %c24] : memref<2x36xf32, #tpu.memory_space<vmem>>, vector<2x4xf32>
    %cst_17 = arith.constant dense<0.000000e+00> : vector<2x256xf32>
    %74 = tpu.matmul %73, %72, %cst_17 {dimension_numbers = #tpu.dot_dimension_numbers<[1], [0], [0], [1], [0, 0, 1, 1], [], []>, precision = #tpu.contract_precision<fp32>} : vector<2x4xf32>, vector<4x256xf32>, vector<2x256xf32> -> vector<2x256xf32>
    %75 = arith.andi %14, %16 : vector<1x256xi1>
    %76 = arith.extui %75 : vector<1x256xi1> to vector<1x256xi32>
    %77 = arith.sitofp %76 : vector<1x256xi32> to vector<1x256xf32>
    %78 = vector.broadcast %77 : vector<1x256xf32> to vector<2x256xf32>
    %79 = arith.mulf %74, %78 : vector<2x256xf32>
    %80 = arith.addf %70, %79 : vector<2x256xf32>
    %c368_i32 = arith.constant 368 : i32
    %81 = tpu.dynamic_rotate %6 by %c368_i32 dim 1 : vector<4x512xf32>, i32 -> vector<4x512xf32>
    %82 = vector.extract_strided_slice %81 {offsets = [0, 0], sizes = [4, 256], strides = [1, 1]} : vector<4x512xf32> to vector<4x256xf32>
    %c0_18 = arith.constant 0 : index
    %c28 = arith.constant 28 : index
    %83 = vector.load %arg3[%c0_18, %c28] : memref<2x36xf32, #tpu.memory_space<vmem>>, vector<2x4xf32>
    %cst_19 = arith.constant dense<0.000000e+00> : vector<2x256xf32>
    %84 = tpu.matmul %83, %82, %cst_19 {dimension_numbers = #tpu.dot_dimension_numbers<[1], [0], [0], [1], [0, 0, 1, 1], [], []>, precision = #tpu.contract_precision<fp32>} : vector<2x4xf32>, vector<4x256xf32>, vector<2x256xf32> -> vector<2x256xf32>
    %85 = arith.extui %14 : vector<1x256xi1> to vector<1x256xi32>
    %86 = arith.sitofp %85 : vector<1x256xi32> to vector<1x256xf32>
    %87 = vector.broadcast %86 : vector<1x256xf32> to vector<2x256xf32>
    %88 = arith.mulf %84, %87 : vector<2x256xf32>
    %89 = arith.addf %80, %88 : vector<2x256xf32>
    %c367_i32 = arith.constant 367 : i32
    %90 = tpu.dynamic_rotate %6 by %c367_i32 dim 1 : vector<4x512xf32>, i32 -> vector<4x512xf32>
    %91 = vector.extract_strided_slice %90 {offsets = [0, 0], sizes = [4, 256], strides = [1, 1]} : vector<4x512xf32> to vector<4x256xf32>
    %c0_20 = arith.constant 0 : index
    %c32 = arith.constant 32 : index
    %92 = vector.load %arg3[%c0_20, %c32] : memref<2x36xf32, #tpu.memory_space<vmem>>, vector<2x4xf32>
    %cst_21 = arith.constant dense<0.000000e+00> : vector<2x256xf32>
    %93 = tpu.matmul %92, %91, %cst_21 {dimension_numbers = #tpu.dot_dimension_numbers<[1], [0], [0], [1], [0, 0, 1, 1], [], []>, precision = #tpu.contract_precision<fp32>} : vector<2x4xf32>, vector<4x256xf32>, vector<2x256xf32> -> vector<2x256xf32>
    %94 = arith.andi %14, %18 : vector<1x256xi1>
    %95 = arith.extui %94 : vector<1x256xi1> to vector<1x256xi32>
    %96 = arith.sitofp %95 : vector<1x256xi32> to vector<1x256xf32>
    %97 = vector.broadcast %96 : vector<1x256xf32> to vector<2x256xf32>
    %98 = arith.mulf %93, %97 : vector<2x256xf32>
    %99 = arith.addf %89, %98 : vector<2x256xf32>
    %c0_22 = arith.constant 0 : index
    %c0_23 = arith.constant 0 : index
    %100 = vector.load %arg4[%c0_22, %c0_23] : memref<2x1xf32, #tpu.memory_space<vmem>>, vector<2x1xf32>
    %101 = vector.broadcast %100 : vector<2x1xf32> to vector<2x256xf32>
    %102 = arith.addf %99, %101 : vector<2x256xf32>
    %c0_24 = arith.constant 0 : index
    %c0_25 = arith.constant 0 : index
    %c0_26 = arith.constant 0 : index
    %103 = vector.load %arg6[%c0_24, %c0_25, %c0_26] : memref<1x2x256xf32, #tpu.memory_space<vmem>>, vector<1x2x256xf32>
    %104 = vector.shape_cast %103 : vector<1x2x256xf32> to vector<2x256xf32>
    %105 = vector.shape_cast %102 : vector<2x256xf32> to vector<1x2x256xf32>
    tpu.vector_store %arg6[%c0_24, %c0_25, %c0_26], %105 {strides = array<i32>} : memref<1x2x256xf32, #tpu.memory_space<vmem>>, vector<1x2x256xf32>,
    return
  }
  func.func @transform_0(%arg0: i32, %arg1: i32) -> (i32, i32, i32) {
    %c0_i32 = arith.constant 0 : i32
    %c0_i32_0 = arith.constant 0 : i32
    %c0_i32_1 = arith.constant 0 : i32
    return %arg0, %c0_i32, %c0_i32_0 : i32, i32, i32
  }
  func.func @transform_1(%arg0: i32, %arg1: i32) -> (i32, i32) {
    %c0_i32 = arith.constant 0 : i32
    %c0_i32_0 = arith.constant 0 : i32
    %c0_i32_1 = arith.constant 0 : i32
    return %c0_i32, %c0_i32_0 : i32, i32
  }
  func.func @transform_2(%arg0: i32, %arg1: i32) -> (i32, i32) {
    %c0_i32 = arith.constant 0 : i32
    %c0_i32_0 = arith.constant 0 : i32
    %c0_i32_1 = arith.constant 0 : i32
    return %c0_i32, %c0_i32_0 : i32, i32
  }
  func.func @transform_3(%arg0: i32, %arg1: i32) -> (i32, i32) {
    %c0_i32 = arith.constant 0 : i32
    %c0_i32_0 = arith.constant 0 : i32
    %c0_i32_1 = arith.constant 0 : i32
    return %c0_i32, %c0_i32_0 : i32, i32
  }
  func.func @transform_4(%arg0: i32, %arg1: i32) -> (i32, i32, i32) {
    %c0_i32 = arith.constant 0 : i32
    %c0_i32_0 = arith.constant 0 : i32
    return %arg0, %c0_i32, %arg1 : i32, i32, i32
  }
}

</mosaic_0001>

<llo_original>
// kernel: db1_forward.1
$region0: #{db1_forward.1}
  #allocation0 [shape = 'u32[]', space=smem, size = 0x4, offset = 0x4, fixed_abs, tag = 'smem constant byte address 0x4 - core index']
  #allocation1 [shape = 'u32[144,128]{1,0:T(1,128)}', space=vmem, size = 0x12000, scoped, tag = 'internal scratch']
  #allocation2 [shape = 'f32[4,512]{1,0:T(4,128)}', space=vmem, size = 0x2000, scoped, tag = 'scratch operand']
  %s0 = inlined_call_operand.vmem [shape: f32[2,4,256], index: 0, kind: input, shape index: {}]
  %s1 = inlined_call_operand.vmem [shape: f32[2,36], index: 1, kind: input, shape index: {}]
  %s2 = inlined_call_operand.vmem [shape: f32[2,1], index: 2, kind: input, shape index: {}]
  %s3 = inlined_call_operand.vmem [shape: s32[1,256], index: 3, kind: input, shape index: {}]
  %s4 = inlined_call_operand.vmem [shape: f32[2,2,256], index: 4, kind: output, shape index: {}]
  %s5 = sld [smem:[#allocation0]]
  $region53: #{db1_forward.1} parent=0
    _
  %s7 = ssub.s32 1, %s5
  %s8 = scalar_select 0, %s7, %s5
  loop: start=0, step=1, limit=4
  $region2: #{db1_forward.1} parent=0 // loop_pre_header
    _
  $region3: #{db1_forward.1} parent=0 // loop_header
    %s10 = sphi 0, %s14
    %p11 = scmp.ge.s32.totalorder %s10, 4
    %s17 = sphi 0, %s29
    %s18 = sphi 0, %s25
    %s19 = sphi 0, %s17
    %s20 = sphi 0, %s18
    %s21 = sphi 0, %s19
    %s22 = sphi 0, %s20
    %s32 = sphi 0, %s34
    %s35 = sphi 0, %s32
    %s36 = sphi 0, %s35
    %s52 = sphi 0, %s36
    %s56 = sphi 0, %s56
    %s58 = sphi 0, %s56
    %s59 = sphi 0, %s58
    %s73 = sphi 0, %s59
    %s77 = sphi 0, %s77
    %s79 = sphi 0, %s77
    %s80 = sphi 0, %s79
    %s94 = sphi 0, %s80
    %s98 = sphi 0, %s98
    %s100 = sphi 0, %s98
    %s101 = sphi 0, %s100
    %s115 = sphi 0, %s101
    %s123 = sphi 0, %s125
    %s126 = sphi 0, %s123
    %s127 = sphi 0, %s126
    %s143 = sphi 0, %s127
  $region4: #{db1_forward.1} parent=0 // loop_header_branch
    %13 = sbr.rel (%p11) target = $region8
  $region5: #{db1_forward.1} parent=0 // loop_body
    %s15 = ssub.s32 %s10, 1
    %s16 = ssub.s32 %s10, 2
    %s23 = sadd.s32 1, %s18
    %p24 = scmp.ge.s32.totalorder %s23, 1
    %s25 = scalar_select %p24, 0, %s23
    %s26 = sadd.s32 1, %s17
    %s27 = scalar_select %p24, %s26, %s17
    %p28 = scmp.ge.s32.totalorder %s27, 2
    %s29 = scalar_select %p28, 0, %s27
    %s30 = ssub.s32 %s17, %s29
    %p31 = scmp.eq.s32.totalorder %s30, 0
    %s33 = sadd.s32 %s32, 1
    %s34 = scalar_select %p31, %s32, %s33
    %p37 = pneg %p31
    %p38 = scmp.eq.s32.totalorder %s10, 1
    %p39 = por %p37, %p38
    %p40 = scmp.ne.s32.totalorder %s32, %s35
    %p41 = scmp.eq.s32.totalorder %s10, 0
    %p42 = por %p40, %p41
    %p43 = scmp.ne.s32.totalorder %s32, %s35
    %p44 = scmp.eq.s32.totalorder %s15, 1
    %p45 = por %p43, %p44
    %p46 = scmp.ne.s32.totalorder %s35, %s36
    %p47 = scmp.eq.s32.totalorder %s15, 0
    %p48 = por %p46, %p47
    %p49 = scmp.ne.s32.totalorder %s35, %s36
    %p50 = scmp.eq.s32.totalorder %s16, 1
    %p51 = por %p49, %p50
    %p53 = scmp.ne.s32.totalorder %s36, %s52
    %p54 = scmp.eq.s32.totalorder %s16, 0
    %p55 = por %p53, %p54
    %s57 = sadd.s32 %s56, 1
    %p60 = scmp.eq.s32.totalorder %s10, 1
    %p61 = scmp.ne.s32.totalorder %s56, %s58
    %p62 = scmp.eq.s32.totalorder %s10, 0
    %p63 = por %p61, %p62
    %p64 = scmp.ne.s32.totalorder %s56, %s58
    %p65 = scmp.eq.s32.totalorder %s15, 1
    %p66 = por %p64, %p65
    %p67 = scmp.ne.s32.totalorder %s58, %s59
    %p68 = scmp.eq.s32.totalorder %s15, 0
    %p69 = por %p67, %p68
    %p70 = scmp.ne.s32.totalorder %s58, %s59
    %p71 = scmp.eq.s32.totalorder %s16, 1
    %p72 = por %p70, %p71
    %p74 = scmp.ne.s32.totalorder %s59, %s73
    %p75 = scmp.eq.s32.totalorder %s16, 0
    %p76 = por %p74, %p75
    %s78 = sadd.s32 %s77, 1
    %p81 = scmp.eq.s32.totalorder %s10, 1
    %p82 = scmp.ne.s32.totalorder %s77, %s79
    %p83 = scmp.eq.s32.totalorder %s10, 0
    %p84 = por %p82, %p83
    %p85 = scmp.ne.s32.totalorder %s77, %s79
    %p86 = scmp.eq.s32.totalorder %s15, 1
    %p87 = por %p85, %p86
    %p88 = scmp.ne.s32.totalorder %s79, %s80
    %p89 = scmp.eq.s32.totalorder %s15, 0
    %p90 = por %p88, %p89
    %p91 = scmp.ne.s32.totalorder %s79, %s80
    %p92 = scmp.eq.s32.totalorder %s16, 1
    %p93 = por %p91, %p92
    %p95 = scmp.ne.s32.totalorder %s80, %s94
    %p96 = scmp.eq.s32.totalorder %s16, 0
    %p97 = por %p95, %p96
    %s99 = sadd.s32 %s98, 1
    %p102 = scmp.eq.s32.totalorder %s10, 1
    %p103 = scmp.ne.s32.totalorder %s98, %s100
    %p104 = scmp.eq.s32.totalorder %s10, 0
    %p105 = por %p103, %p104
    %p106 = scmp.ne.s32.totalorder %s98, %s100
    %p107 = scmp.eq.s32.totalorder %s15, 1
    %p108 = por %p106, %p107
    %p109 = scmp.ne.s32.totalorder %s100, %s101
    %p110 = scmp.eq.s32.totalorder %s15, 0
    %p111 = por %p109, %p110
    %p112 = scmp.ne.s32.totalorder %s100, %s101
    %p113 = scmp.eq.s32.totalorder %s16, 1
    %p114 = por %p112, %p113
    %p116 = scmp.ne.s32.totalorder %s101, %s115
    %p117 = scmp.eq.s32.totalorder %s16, 0
    %p118 = por %p116, %p117
    %s119 = ssub.s32 %s17, %s29
    %s120 = ssub.s32 %s18, %s25
    %s121 = sor.u32 %s119, %s120
    %p122 = scmp.eq.s32.totalorder %s121, 0
    %s124 = sadd.s32 %s123, 1
    %s125 = scalar_select %p122, %s123, %s124
    %p128 = pneg %p122
    %p129 = scmp.eq.s32.totalorder %s10, 1
    %p130 = por %p128, %p129
    %p131 = scmp.ne.s32.totalorder %s123, %s126
    %p132 = scmp.eq.s32.totalorder %s10, 0
    %p133 = por %p131, %p132
    %p134 = scmp.ne.s32.totalorder %s123, %s126
    %p135 = scmp.eq.s32.totalorder %s15, 1
    %p136 = por %p134, %p135
    %p137 = scmp.ne.s32.totalorder %s126, %s127
    %p138 = scmp.eq.s32.totalorder %s15, 0
    %p139 = por %p137, %p138
    %p140 = scmp.ne.s32.totalorder %s126, %s127
    %p141 = scmp.eq.s32.totalorder %s16, 1
    %p142 = por %p140, %p141
    %p144 = scmp.ne.s32.totalorder %s127, %s143
    %p145 = scmp.eq.s32.totalorder %s16, 0
    %p146 = por %p144, %p145
    %p147 = scmp.le.s32.totalorder 1, %s10
    %p148 = scmp.lt.s32.totalorder %s10, 3
    %p149 = pnand %p147, %p148
    %p150 = pneg %p149
    // Predicated region
    $region9: #{db1_forward.1} parent=5 // pred_check
      _
    $region10: #{db1_forward.1} parent=5 // pred_check_branch
      %152 = sbr.rel (%p149) target = $region12
    $region11: #{db1_forward.1} parent=5 // pred_region
      %s153 = ssub.s32 %s10, 1
      // Predicated region
      $region13: #{db1_forward.1} parent=11 // pred_check
        %p154 = pneg %p69
      $region14: #{db1_forward.1} parent=11 // pred_check_branch
        %156 = sbr.rel (%p154) target = $region16
      $region15: #{db1_forward.1} parent=11 // pred_region
        _
      $region16: #{db1_forward.1} parent=11 // pred_fallthru
        _
      // Predicated region
      $region17: #{db1_forward.1} parent=11 // pred_check
        %p157 = pneg %p90
      $region18: #{db1_forward.1} parent=11 // pred_check_branch
        %159 = sbr.rel (%p157) target = $region20
      $region19: #{db1_forward.1} parent=11 // pred_region
        _
      $region20: #{db1_forward.1} parent=11 // pred_fallthru
        _
      // Predicated region
      $region21: #{db1_forward.1} parent=11 // pred_check
        %p160 = pneg %p111
      $region22: #{db1_forward.1} parent=11 // pred_check_branch
        %162 = sbr.rel (%p160) target = $region24
      $region23: #{db1_forward.1} parent=11 // pred_region
        _
      $region24: #{db1_forward.1} parent=11 // pred_fallthru
        _
    $region12: #{db1_forward.1} parent=5 // pred_fallthru
      _
    %p163 = scmp.lt.s32.totalorder %s10, 2
    // Predicated region
    $region25: #{db1_forward.1} parent=5 // pred_check
      %p164 = pneg %p163
    $region26: #{db1_forward.1} parent=5 // pred_check_branch
      %166 = sbr.rel (%p164) target = $region28
    $region27: #{db1_forward.1} parent=5 // pred_region
      // Predicated region
      $region29: #{db1_forward.1} parent=27 // pred_check
        %p167 = pneg %p42
      $region30: #{db1_forward.1} parent=27 // pred_check_branch
        %169 = sbr.rel (%p167) target = $region32
      $region31: #{db1_forward.1} parent=27 // pred_region
        %p170 = scmp.lt.s32.totalorder %s17, 1
        %s171 = scalar_select %p170, %s17, 1
        %s172 = smul.addr %s171, 2
        %s173 = smul.addr %s172, 4
        %s174 = scalar_lea.vmem %s0, %s173
      $region32: #{db1_forward.1} parent=27 // pred_fallthru
        _
    $region28: #{db1_forward.1} parent=5 // pred_fallthru
      _
    %p175 = scmp.le.s32.totalorder 1, %s10
    %p176 = scmp.lt.s32.totalorder %s10, 3
    %p177 = pnand %p175, %p176
    %p178 = pneg %p177
    // Predicated region
    $region33: #{db1_forward.1} parent=5 // pred_check
      _
    $region34: #{db1_forward.1} parent=5 // pred_check_branch
      %180 = sbr.rel (%p177) target = $region36
    $region35: #{db1_forward.1} parent=5 // pred_region
      %s181 = ssub.s32 %s10, 1
      %p182 = scmp.lt.s32.totalorder %s19, 1
      %s183 = scalar_select %p182, %s19, 1
      %s184 = smul.addr %s183, 2
      %s185 = smul.addr %s184, 4
      %s186 = scalar_lea.vmem %s0, %s185
      %p187 = pneg %p48
      %p188 = pneg %p45
      %p189 = pneg %p69
      %p190 = pneg %p66
      %p191 = pneg %p90
      %p192 = pneg %p87
      %p193 = pneg %p111
      %p194 = pneg %p108
      %p195 = pneg %p139
      %p196 = pneg %p136
      %s197 = smul.u32 2, %s20
      %p198 = scmp.lt.s32.totalorder %s19, 1
      %s199 = scalar_select %p198, %s19, 1
      %p200 = scmp.lt.s32.totalorder %s197, 1
      %s201 = scalar_select %p200, %s197, 1
      %s202 = smul.addr %s199, 2
      %s203 = sadd.s32 %s201, %s202
      %s204 = smul.addr %s203, 2
      %s205 = scalar_lea.vmem %s4, %s204
      %p206 = scmp.lt.s32.totalorder %s19, 1
      %s207 = scalar_select %p206, %s19, 1
      %s208 = smul.addr %s207, 2
      %s209 = smul.addr %s208, 4
      %s210 = scalar_lea.vmem %s0, %s209
      %s211 = smul.u32 2, %s20
      %p212 = scmp.lt.s32.totalorder %s19, 1
      %s213 = scalar_select %p212, %s19, 1
      %p214 = scmp.lt.s32.totalorder %s211, 1
      %s215 = scalar_select %p214, %s211, 1
      %s216 = smul.addr %s213, 2
      %s217 = sadd.s32 %s215, %s216
      %s218 = smul.addr %s217, 2
      %s219 = scalar_lea.vmem %s4, %s218
      %s220 = smul.u32 2, %s20
      %p221 = scmp.eq.s32.totalorder %s20, 0
      // Predicated region
      $region37: #{db1_forward.1} parent=35 // pred_check
        %p222 = pneg %p221
      $region38: #{db1_forward.1} parent=35 // pred_check_branch
        %224 = sbr.rel (%p222) target = $region40
      $region39: #{db1_forward.1} parent=35 // pred_region
        %225 = vst [vmem:[#allocation2] sm:$0xf] 0.0
        %226 = vst [vmem:[#allocation2 + $0xc] sm:$0xf] 0.0
        %v227 = vld [vmem:[%s210] sm:$0xff]
        %228 = vst [vmem:[#allocation2 + $0x4] sm:$0xff] %v227
      $region40: #{db1_forward.1} parent=35 // pred_fallthru
        _
      %s229 = smul.u32 %s20, 256
      %s230 = sshra.s32 %s229, 7
      %s231 = sand.u32 %s229, 127
      %s232 = smul.addr %s230, 4
      %s233 = scalar_lea.vmem [#allocation2], %s232
      %v234 = vld [vmem:[%s233] sm:$0xff]
      %v235 = vld [vmem:[%s233 + $0x8] sm:$0xff]
      %v236 = vlaneseq
      %v237 = vand.u32 %v236, 127
      %v238 = vadd.s32 %v237, 128
      %v239 = vstv %s229
      %v240 = vadd.s32 %v239, %v237
      %v241 = vadd.s32 %v239, %v238
      %v242 = vld [vmem:[%s3] sm:$0x3]
      %vm243 = vcmp.ge.s32.totalorder %v240, 16
      %vm244 = vcmp.ge.s32.totalorder %v241, 16
      %vm245 = vcmp.lt.s32.totalorder %v240, 240
      %vm246 = vcmp.lt.s32.totalorder %v241, 240
      %vm247 = vcmp.ge.s32.totalorder %v242, 1
      %vm248 = vcmp.lt.s32.totalorder %v242, 15
      %v251 = vcombine.high %v234, %v234
      %253 = vrot.lane.b32.xlu0 %v234, 17
      %v254 = vpop.permute.xlu0 %253
      %255 = vrot.lane.b32.xlu0 %v251, 17
      %v256 = vpop.permute.xlu0 %255
      %257 = vrot.lane.b32.xlu0 %v235, 17
      %v258 = vpop.permute.xlu0 %257
      %vm259 = vcmp.lt.s32.totalorder %v237, 17
      %v260 = vsel %vm259, %v256, %v258
      %v261 = vsel %vm259, %v254, %v256
      %v262 = vld [vmem:[%s1] sm:$0x3]
      %vm263 = vcmask 31744
      %v265 = vsel %vm263, %v262, 0
      %vm267 = vcmask 1043456
      %v269 = vsel %vm267, %v261, 0
      %v272 = vsel %vm267, %v260, 0
      %274 = vmatprep.subr.mxu0 0.0
      %275 = vmatpush1.msra.mxu0 0.0
      %276 = vmatprep.subr.mxu0 0.0
      %277 = vmatpush1.msra.mxu0 0.0
      %278 = vmatprep.subr.mxu0 0.0
      %279 = vmatpush1.msra.mxu0 0.0
      %280 = vmatprep.subr.mxu0 0.0
      %281 = vmatpush1.msra.mxu0 0.0
      %282 = vmatprep.subr.mxu0 0.0
      %283 = vmatpush1.msra.mxu0 0.0
      %284 = vmatprep.subr.mxu0 0.0
      %285 = vmatpush1.msra.mxu0 0.0
      %286 = vmatprep.subr.mxu0 0.0
      %287 = vmatpush1.msra.mxu0 0.0
      %288 = vmatprep.subr.mxu0 0.0
      %289 = vmatpush1.msra.mxu0 0.0
      %290 = vmatprep.subr.mxu0 0.0
      %291 = vmatpush1.msra.mxu0 0.0
      %292 = vmatprep.subr.mxu0 0.0
      %293 = vmatpush1.msra.mxu0 0.0
      %294 = vmatprep.subr.mxu0 0.0
      %295 = vmatpush1.msra.mxu0 0.0
      %296 = vmatprep.subr.mxu0 0.0
      %297 = vmatpush1.msra.mxu0 0.0
      %298 = vmatprep.subr.mxu0 0.0
      %299 = vmatpush1.msra.mxu0 0.0
      %300 = vmatprep.subr.mxu0 0.0
      %301 = vmatpush1.msra.mxu0 0.0
      %302 = vmatprep.subr.mxu0 0.0
      %303 = vmatpush1.msra.mxu0 0.0
      %v304 = vand.u32 %v272, 4294901760
      %305 = vmatprep.subr.mxu0 %v304
      %v306 = vand.u32 %v269, 4294901760
      %307 = vmatpush1.msra.mxu0 %v306
      %308 = vmatprep.subr.mxu0 0.0
      %309 = vmatpush2.msra.mxu0 0.0
      %310 = vmatprep.subr.mxu0 0.0
      %311 = vmatpush2.msra.mxu0 0.0
      %312 = vmatprep.subr.mxu0 0.0
      %313 = vmatpush2.msra.mxu0 0.0
      %314 = vmatprep.subr.mxu0 0.0
      %315 = vmatpush2.msra.mxu0 0.0
      %316 = vmatprep.subr.mxu0 0.0
      %317 = vmatpush2.msra.mxu0 0.0
      %318 = vmatprep.subr.mxu0 0.0
      %319 = vmatpush2.msra.mxu0 0.0
      %320 = vmatprep.subr.mxu0 0.0
      %321 = vmatpush2.msra.mxu0 0.0
      %322 = vmatprep.subr.mxu0 0.0
      %323 = vmatpush2.msra.mxu0 0.0
      %324 = vmatprep.subr.mxu0 0.0
      %325 = vmatpush2.msra.mxu0 0.0
      %326 = vmatprep.subr.mxu0 0.0
      %327 = vmatpush2.msra.mxu0 0.0
      %328 = vmatprep.subr.mxu0 0.0
      %329 = vmatpush2.msra.mxu0 0.0
      %330 = vmatprep.subr.mxu0 0.0
      %331 = vmatpush2.msra.mxu0 0.0
      %332 = vmatprep.subr.mxu0 0.0
      %333 = vmatpush2.msra.mxu0 0.0
      %334 = vmatprep.subr.mxu0 0.0
      %335 = vmatpush2.msra.mxu0 0.0
      %336 = vmatprep.subr.mxu0 0.0
      %337 = vmatpush2.msra.mxu0 0.0
      %338 = vmatprep.subr.mxu0 0.0
      %339 = vmatpush2.msra.mxu0 0.0
      %340 = vmatprep.mubr.f32.mxu0 0.0
      %v341 = vand.u32 %v265, 4294901760
      %v342 = vsub.f32 %v265, %v341
      %v343 = vand.u32 %v342, 4294901760
      %v344 = vsub.f32 %v342, %v343
      %v345 = vand.u32 %v344, 4294901760
      %346 = vmatmul.mubr.f32.gmra.mxu0 %v345
      %v347 = vpop.f32.mrf.mxu0
      %v348 = vadd.f32 0.0, %v347
      %v349 = vpop.f32.mrf.mxu0
      %v350 = vadd.f32 0.0, %v349
      %351 = vdwg.mxu0
      %352 = vmatprep.subr.mxu0 0.0
      %353 = vmatpush1.msra.mxu0 0.0
      %354 = vmatprep.subr.mxu0 0.0
      %355 = vmatpush1.msra.mxu0 0.0
      %356 = vmatprep.subr.mxu0 0.0
      %357 = vmatpush1.msra.mxu0 0.0
      %358 = vmatprep.subr.mxu0 0.0
      %359 = vmatpush1.msra.mxu0 0.0
      %360 = vmatprep.subr.mxu0 0.0
      %361 = vmatpush1.msra.mxu0 0.0
      %362 = vmatprep.subr.mxu0 0.0
      %363 = vmatpush1.msra.mxu0 0.0
      %364 = vmatprep.subr.mxu0 0.0
      %365 = vmatpush1.msra.mxu0 0.0
      %366 = vmatprep.subr.mxu0 0.0
      %367 = vmatpush1.msra.mxu0 0.0
      %368 = vmatprep.subr.mxu0 0.0
      %369 = vmatpush1.msra.mxu0 0.0
      %370 = vmatprep.subr.mxu0 0.0
      %371 = vmatpush1.msra.mxu0 0.0
      %372 = vmatprep.subr.mxu0 0.0
      %373 = vmatpush1.msra.mxu0 0.0
      %374 = vmatprep.subr.mxu0 0.0
      %375 = vmatpush1.msra.mxu0 0.0
      %376 = vmatprep.subr.mxu0 0.0
      %377 = vmatpush1.msra.mxu0 0.0
      %378 = vmatprep.subr.mxu0 0.0
      %379 = vmatpush1.msra.mxu0 0.0
      %380 = vmatprep.subr.mxu0 0.0
      %381 = vmatpush1.msra.mxu0 0.0
      %v382 = vand.u32 %v272, 4294901760
      %v383 = vsub.f32 %v272, %v382
      %v384 = vand.u32 %v383, 4294901760
      %v385 = vsub.f32 %v383, %v384
      %v386 = vand.u32 %v385, 4294901760
      %387 = vmatprep.subr.mxu0 %v386
      %v388 = vand.u32 %v269, 4294901760
      %v389 = vsub.f32 %v269, %v388
      %v390 = vand.u32 %v389, 4294901760
      %v391 = vsub.f32 %v389, %v390
      %v392 = vand.u32 %v391, 4294901760
      %393 = vmatpush1.msra.mxu0 %v392
      %394 = vmatprep.subr.mxu0 0.0
      %395 = vmatpush2.msra.mxu0 0.0
      %396 = vmatprep.subr.mxu0 0.0
      %397 = vmatpush2.msra.mxu0 0.0
      %398 = vmatprep.subr.mxu0 0.0
      %399 = vmatpush2.msra.mxu0 0.0
      %400 = vmatprep.subr.mxu0 0.0
      %401 = vmatpush2.msra.mxu0 0.0
      %402 = vmatprep.subr.mxu0 0.0
      %403 = vmatpush2.msra.mxu0 0.0
      %404 = vmatprep.subr.mxu0 0.0
      %405 = vmatpush2.msra.mxu0 0.0
      %406 = vmatprep.subr.mxu0 0.0
      %407 = vmatpush2.msra.mxu0 0.0
      %408 = vmatprep.subr.mxu0 0.0
      %409 = vmatpush2.msra.mxu0 0.0
      %410 = vmatprep.subr.mxu0 0.0
      %411 = vmatpush2.msra.mxu0 0.0
      %412 = vmatprep.subr.mxu0 0.0
      %413 = vmatpush2.msra.mxu0 0.0
      %414 = vmatprep.subr.mxu0 0.0
      %415 = vmatpush2.msra.mxu0 0.0
      %416 = vmatprep.subr.mxu0 0.0
      %417 = vmatpush2.msra.mxu0 0.0
      %418 = vmatprep.subr.mxu0 0.0
      %419 = vmatpush2.msra.mxu0 0.0
      %420 = vmatprep.subr.mxu0 0.0
      %421 = vmatpush2.msra.mxu0 0.0
      %422 = vmatprep.subr.mxu0 0.0
      %423 = vmatpush2.msra.mxu0 0.0
      %424 = vmatprep.subr.mxu0 0.0
      %425 = vmatpush2.msra.mxu0 0.0
      %426 = vmatprep.mubr.f32.mxu0 0.0
      %v427 = vand.u32 %v265, 4294901760
      %428 = vmatmul.mubr.f32.gmra.mxu0 %v427
      %v429 = vpop.f32.mrf.mxu0
      %v430 = vadd.f32 %v348, %v429
      %v431 = vpop.f32.mrf.mxu0
      %v432 = vadd.f32 %v350, %v431
      %433 = vdwg.mxu0
      %434 = vmatprep.subr.mxu0 0.0
      %435 = vmatpush1.msra.mxu0 0.0
      %436 = vmatprep.subr.mxu0 0.0
      %437 = vmatpush1.msra.mxu0 0.0
      %438 = vmatprep.subr.mxu0 0.0
      %439 = vmatpush1.msra.mxu0 0.0
      %440 = vmatprep.subr.mxu0 0.0
      %441 = vmatpush1.msra.mxu0 0.0
      %442 = vmatprep.subr.mxu0 0.0
      %443 = vmatpush1.msra.mxu0 0.0
      %444 = vmatprep.subr.mxu0 0.0
      %445 = vmatpush1.msra.mxu0 0.0
      %446 = vmatprep.subr.mxu0 0.0
      %447 = vmatpush1.msra.mxu0 0.0
      %448 = vmatprep.subr.mxu0 0.0
      %449 = vmatpush1.msra.mxu0 0.0
      %450 = vmatprep.subr.mxu0 0.0
      %451 = vmatpush1.msra.mxu0 0.0
      %452 = vmatprep.subr.mxu0 0.0
      %453 = vmatpush1.msra.mxu0 0.0
      %454 = vmatprep.subr.mxu0 0.0
      %455 = vmatpush1.msra.mxu0 0.0
      %456 = vmatprep.subr.mxu0 0.0
      %457 = vmatpush1.msra.mxu0 0.0
      %458 = vmatprep.subr.mxu0 0.0
      %459 = vmatpush1.msra.mxu0 0.0
      %460 = vmatprep.subr.mxu0 0.0
      %461 = vmatpush1.msra.mxu0 0.0
      %462 = vmatprep.subr.mxu0 0.0
      %463 = vmatpush1.msra.mxu0 0.0
      %v464 = vand.u32 %v272, 4294901760
      %v465 = vsub.f32 %v272, %v464
      %466 = vmatprep.subr.mxu0 %v465
      %v467 = vand.u32 %v269, 4294901760
      %v468 = vsub.f32 %v269, %v467
      %469 = vmatpush1.msra.mxu0 %v468
      %470 = vmatprep.subr.mxu0 0.0
      %471 = vmatpush2.msra.mxu0 0.0
      %472 = vmatprep.subr.mxu0 0.0
      %473 = vmatpush2.msra.mxu0 0.0
      %474 = vmatprep.subr.mxu0 0.0
      %475 = vmatpush2.msra.mxu0 0.0
      %476 = vmatprep.subr.mxu0 0.0
      %477 = vmatpush2.msra.mxu0 0.0
      %478 = vmatprep.subr.mxu0 0.0
      %479 = vmatpush2.msra.mxu0 0.0
      %480 = vmatprep.subr.mxu0 0.0
      %481 = vmatpush2.msra.mxu0 0.0
      %482 = vmatprep.subr.mxu0 0.0
      %483 = vmatpush2.msra.mxu0 0.0
      %484 = vmatprep.subr.mxu0 0.0
      %485 = vmatpush2.msra.mxu0 0.0
      %486 = vmatprep.subr.mxu0 0.0
      %487 = vmatpush2.msra.mxu0 0.0
      %488 = vmatprep.subr.mxu0 0.0
      %489 = vmatpush2.msra.mxu0 0.0
      %490 = vmatprep.subr.mxu0 0.0
      %491 = vmatpush2.msra.mxu0 0.0
      %492 = vmatprep.subr.mxu0 0.0
      %493 = vmatpush2.msra.mxu0 0.0
      %494 = vmatprep.subr.mxu0 0.0
      %495 = vmatpush2.msra.mxu0 0.0
      %496 = vmatprep.subr.mxu0 0.0
      %497 = vmatpush2.msra.mxu0 0.0
      %498 = vmatprep.subr.mxu0 0.0
      %499 = vmatpush2.msra.mxu0 0.0
      %500 = vmatprep.subr.mxu0 0.0
      %501 = vmatpush2.msra.mxu0 0.0
      %502 = vmatprep.mubr.f32.mxu0 0.0
      %v503 = vand.u32 %v265, 4294901760
      %v504 = vsub.f32 %v265, %v503
      %505 = vmatmul.mubr.f32.gmra.mxu0 %v504
      %v506 = vpop.f32.mrf.mxu0
      %v507 = vadd.f32 %v430, %v506
      %v508 = vpop.f32.mrf.mxu0
      %v509 = vadd.f32 %v432, %v508
      %510 = vdwg.mxu0
      %511 = vmatprep.subr.mxu0 0.0
      %512 = vmatpush1.msra.mxu0 0.0
      %513 = vmatprep.subr.mxu0 0.0
      %514 = vmatpush1.msra.mxu0 0.0
      %515 = vmatprep.subr.mxu0 0.0
      %516 = vmatpush1.msra.mxu0 0.0
      %517 = vmatprep.subr.mxu0 0.0
      %518 = vmatpush1.msra.mxu0 0.0
      %519 = vmatprep.subr.mxu0 0.0
      %520 = vmatpush1.msra.mxu0 0.0
      %521 = vmatprep.subr.mxu0 0.0
      %522 = vmatpush1.msra.mxu0 0.0
      %523 = vmatprep.subr.mxu0 0.0
      %524 = vmatpush1.msra.mxu0 0.0
      %525 = vmatprep.subr.mxu0 0.0
      %526 = vmatpush1.msra.mxu0 0.0
      %527 = vmatprep.subr.mxu0 0.0
      %528 = vmatpush1.msra.mxu0 0.0
      %529 = vmatprep.subr.mxu0 0.0
      %530 = vmatpush1.msra.mxu0 0.0
      %531 = vmatprep.subr.mxu0 0.0
      %532 = vmatpush1.msra.mxu0 0.0
      %533 = vmatprep.subr.mxu0 0.0
      %534 = vmatpush1.msra.mxu0 0.0
      %535 = vmatprep.subr.mxu0 0.0
      %536 = vmatpush1.msra.mxu0 0.0
      %537 = vmatprep.subr.mxu0 0.0
      %538 = vmatpush1.msra.mxu0 0.0
      %539 = vmatprep.subr.mxu0 0.0
      %540 = vmatpush1.msra.mxu0 0.0
      %v541 = vand.u32 %v272, 4294901760
      %542 = vmatprep.subr.mxu0 %v541
      %v543 = vand.u32 %v269, 4294901760
      %544 = vmatpush1.msra.mxu0 %v543
      %545 = vmatprep.subr.mxu0 0.0
      %546 = vmatpush2.msra.mxu0 0.0
      %547 = vmatprep.subr.mxu0 0.0
      %548 = vmatpush2.msra.mxu0 0.0
      %549 = vmatprep.subr.mxu0 0.0
      %550 = vmatpush2.msra.mxu0 0.0
      %551 = vmatprep.subr.mxu0 0.0
      %552 = vmatpush2.msra.mxu0 0.0
      %553 = vmatprep.subr.mxu0 0.0
      %554 = vmatpush2.msra.mxu0 0.0
      %555 = vmatprep.subr.mxu0 0.0
      %556 = vmatpush2.msra.mxu0 0.0
      %557 = vmatprep.subr.mxu0 0.0
      %558 = vmatpush2.msra.mxu0 0.0
      %559 = vmatprep.subr.mxu0 0.0
      %560 = vmatpush2.msra.mxu0 0.0
      %561 = vmatprep.subr.mxu0 0.0
      %562 = vmatpush2.msra.mxu0 0.0
      %563 = vmatprep.subr.mxu0 0.0
      %564 = vmatpush2.msra.mxu0 0.0
      %565 = vmatprep.subr.mxu0 0.0
      %566 = vmatpush2.msra.mxu0 0.0
      %567 = vmatprep.subr.mxu0 0.0
      %568 = vmatpush2.msra.mxu0 0.0
      %569 = vmatprep.subr.mxu0 0.0
      %570 = vmatpush2.msra.mxu0 0.0
      %571 = vmatprep.subr.mxu0 0.0
      %572 = vmatpush2.msra.mxu0 0.0
      %573 = vmatprep.subr.mxu0 0.0
      %574 = vmatpush2.msra.mxu0 0.0
      %575 = vmatprep.subr.mxu0 0.0
      %576 = vmatpush2.msra.mxu0 0.0
      %577 = vmatprep.mubr.f32.mxu0 0.0
      %v578 = vand.u32 %v265, 4294901760
      %v579 = vsub.f32 %v265, %v578
      %v580 = vand.u32 %v579, 4294901760
      %581 = vmatmul.mubr.f32.gmra.mxu0 %v580
      %v582 = vpop.f32.mrf.mxu0
      %v583 = vadd.f32 %v507, %v582
      %v584 = vpop.f32.mrf.mxu0
      %v585 = vadd.f32 %v509, %v584
      %586 = vdwg.mxu0
      %587 = vmatprep.subr.mxu0 0.0
      %588 = vmatpush1.msra.mxu0 0.0
      %589 = vmatprep.subr.mxu0 0.0
      %590 = vmatpush1.msra.mxu0 0.0
      %591 = vmatprep.subr.mxu0 0.0
      %592 = vmatpush1.msra.mxu0 0.0
      %593 = vmatprep.subr.mxu0 0.0
      %594 = vmatpush1.msra.mxu0 0.0
      %595 = vmatprep.subr.mxu0 0.0
      %596 = vmatpush1.msra.mxu0 0.0
      %597 = vmatprep.subr.mxu0 0.0
      %598 = vmatpush1.msra.mxu0 0.0
      %599 = vmatprep.subr.mxu0 0.0
      %600 = vmatpush1.msra.mxu0 0.0
      %601 = vmatprep.subr.mxu0 0.0
      %602 = vmatpush1.msra.mxu0 0.0
      %603 = vmatprep.subr.mxu0 0.0
      %604 = vmatpush1.msra.mxu0 0.0
      %605 = vmatprep.subr.mxu0 0.0
      %606 = vmatpush1.msra.mxu0 0.0
      %607 = vmatprep.subr.mxu0 0.0
      %608 = vmatpush1.msra.mxu0 0.0
      %609 = vmatprep.subr.mxu0 0.0
      %610 = vmatpush1.msra.mxu0 0.0
      %611 = vmatprep.subr.mxu0 0.0
      %612 = vmatpush1.msra.mxu0 0.0
      %613 = vmatprep.subr.mxu0 0.0
      %614 = vmatpush1.msra.mxu0 0.0
      %615 = vmatprep.subr.mxu0 0.0
      %616 = vmatpush1.msra.mxu0 0.0
      %v617 = vand.u32 %v272, 4294901760
      %v618 = vsub.f32 %v272, %v617
      %v619 = vand.u32 %v618, 4294901760
      %620 = vmatprep.subr.mxu0 %v619
      %v621 = vand.u32 %v269, 4294901760
      %v622 = vsub.f32 %v269, %v621
      %v623 = vand.u32 %v622, 4294901760
      %624 = vmatpush1.msra.mxu0 %v623
      %625 = vmatprep.subr.mxu0 0.0
      %626 = vmatpush2.msra.mxu0 0.0
      %627 = vmatprep.subr.mxu0 0.0
      %628 = vmatpush2.msra.mxu0 0.0
      %629 = vmatprep.subr.mxu0 0.0
      %630 = vmatpush2.msra.mxu0 0.0
      %631 = vmatprep.subr.mxu0 0.0
      %632 = vmatpush2.msra.mxu0 0.0
      %633 = vmatprep.subr.mxu0 0.0
      %634 = vmatpush2.msra.mxu0 0.0
      %635 = vmatprep.subr.mxu0 0.0
      %636 = vmatpush2.msra.mxu0 0.0
      %637 = vmatprep.subr.mxu0 0.0
      %638 = vmatpush2.msra.mxu0 0.0
      %639 = vmatprep.subr.mxu0 0.0
      %640 = vmatpush2.msra.mxu0 0.0
      %641 = vmatprep.subr.mxu0 0.0
      %642 = vmatpush2.msra.mxu0 0.0
      %643 = vmatprep.subr.mxu0 0.0
      %644 = vmatpush2.msra.mxu0 0.0
      %645 = vmatprep.subr.mxu0 0.0
      %646 = vmatpush2.msra.mxu0 0.0
      %647 = vmatprep.subr.mxu0 0.0
      %648 = vmatpush2.msra.mxu0 0.0
      %649 = vmatprep.subr.mxu0 0.0
      %650 = vmatpush2.msra.mxu0 0.0
      %651 = vmatprep.subr.mxu0 0.0
      %652 = vmatpush2.msra.mxu0 0.0
      %653 = vmatprep.subr.mxu0 0.0
      %654 = vmatpush2.msra.mxu0 0.0
      %655 = vmatprep.subr.mxu0 0.0
      %656 = vmatpush2.msra.mxu0 0.0
      %657 = vmatprep.mubr.f32.mxu0 0.0
      %v658 = vand.u32 %v265, 4294901760
      %659 = vmatmul.mubr.f32.gmra.mxu0 %v658
      %v660 = vpop.f32.mrf.mxu0
      %v661 = vadd.f32 %v583, %v660
      %v662 = vpop.f32.mrf.mxu0
      %v663 = vadd.f32 %v585, %v662
      %664 = vdwg.mxu0
      %665 = vmatprep.subr.mxu0 0.0
      %666 = vmatpush1.msra.mxu0 0.0
      %667 = vmatprep.subr.mxu0 0.0
      %668 = vmatpush1.msra.mxu0 0.0
      %669 = vmatprep.subr.mxu0 0.0
      %670 = vmatpush1.msra.mxu0 0.0
      %671 = vmatprep.subr.mxu0 0.0
      %672 = vmatpush1.msra.mxu0 0.0
      %673 = vmatprep.subr.mxu0 0.0
      %674 = vmatpush1.msra.mxu0 0.0
      %675 = vmatprep.subr.mxu0 0.0
      %676 = vmatpush1.msra.mxu0 0.0
      %677 = vmatprep.subr.mxu0 0.0
      %678 = vmatpush1.msra.mxu0 0.0
      %679 = vmatprep.subr.mxu0 0.0
      %680 = vmatpush1.msra.mxu0 0.0
      %681 = vmatprep.subr.mxu0 0.0
      %682 = vmatpush1.msra.mxu0 0.0
      %683 = vmatprep.subr.mxu0 0.0
      %684 = vmatpush1.msra.mxu0 0.0
      %685 = vmatprep.subr.mxu0 0.0
      %686 = vmatpush1.msra.mxu0 0.0
      %687 = vmatprep.subr.mxu0 0.0
      %688 = vmatpush1.msra.mxu0 0.0
      %689 = vmatprep.subr.mxu0 0.0
      %690 = vmatpush1.msra.mxu0 0.0
      %691 = vmatprep.subr.mxu0 0.0
      %692 = vmatpush1.msra.mxu0 0.0
      %693 = vmatprep.subr.mxu0 0.0
      %694 = vmatpush1.msra.mxu0 0.0
      %v695 = vand.u32 %v272, 4294901760
      %696 = vmatprep.subr.mxu0 %v695
      %v697 = vand.u32 %v269, 4294901760
      %698 = vmatpush1.msra.mxu0 %v697
      %699 = vmatprep.subr.mxu0 0.0
      %700 = vmatpush2.msra.mxu0 0.0
      %701 = vmatprep.subr.mxu0 0.0
      %702 = vmatpush2.msra.mxu0 0.0
      %703 = vmatprep.subr.mxu0 0.0
      %704 = vmatpush2.msra.mxu0 0.0
      %705 = vmatprep.subr.mxu0 0.0
      %706 = vmatpush2.msra.mxu0 0.0
      %707 = vmatprep.subr.mxu0 0.0
      %708 = vmatpush2.msra.mxu0 0.0
      %709 = vmatprep.subr.mxu0 0.0
      %710 = vmatpush2.msra.mxu0 0.0
      %711 = vmatprep.subr.mxu0 0.0
      %712 = vmatpush2.msra.mxu0 0.0
      %713 = vmatprep.subr.mxu0 0.0
      %714 = vmatpush2.msra.mxu0 0.0
      %715 = vmatprep.subr.mxu0 0.0
      %716 = vmatpush2.msra.mxu0 0.0
      %717 = vmatprep.subr.mxu0 0.0
      %718 = vmatpush2.msra.mxu0 0.0
      %719 = vmatprep.subr.mxu0 0.0
      %720 = vmatpush2.msra.mxu0 0.0
      %721 = vmatprep.subr.mxu0 0.0
      %722 = vmatpush2.msra.mxu0 0.0
      %723 = vmatprep.subr.mxu0 0.0
      %724 = vmatpush2.msra.mxu0 0.0
      %725 = vmatprep.subr.mxu0 0.0
      %726 = vmatpush2.msra.mxu0 0.0
      %727 = vmatprep.subr.mxu0 0.0
      %728 = vmatpush2.msra.mxu0 0.0
      %729 = vmatprep.subr.mxu0 0.0
      %730 = vmatpush2.msra.mxu0 0.0
      %731 = vmatprep.mubr.f32.mxu0 0.0
      %v732 = vand.u32 %v265, 4294901760
      %733 = vmatmul.mubr.f32.gmra.mxu0 %v732
      %v734 = vpop.f32.mrf.mxu0
      %v735 = vadd.f32 %v661, %v734
      %v736 = vpop.f32.mrf.mxu0
      %v737 = vadd.f32 %v663, %v736
      %738 = vdwg.mxu0
      %v739 = vsel %vm247, 1, 0
      %v740 = vlaneseq
      %v741 = vshrl.u32 %v740, 7
      %v742 = vsub.s32 0, %v741
      %v743 = vrot.slane %v739, %v742
      %v744 = vlaneseq
      %v745 = vshrl.u32 %v744, 7
      %v746 = vsub.s32 1, %v745
      %v747 = vrot.slane %v739, %v746
      %vm748 = vcmp.ne.s32.totalorder %v743, 0
      %vm749 = vcmp.ne.s32.totalorder %v747, 0
      %vm750 = vmand %vm243, %vm748
      %vm751 = vmand %vm244, %vm749
      %v752 = vsel %vm750, 1, 0
      %v753 = vsel %vm751, 1, 0
      %v754 = vcvt.s32.f32 %v752
      %v755 = vcvt.s32.f32 %v753
      %v756 = vlaneseq
      %v757 = vshrl.u32 %v756, 7
      %v758 = vsub.s32 0, %v757
      %v759 = vrot.slane %v754, %v758
      %v760 = vlaneseq
      %v761 = vshrl.u32 %v760, 7
      %v762 = vsub.s32 0, %v761
      %v763 = vrot.slane %v755, %v762
      %v764 = vmul.f32 %v735, %v759
      %v765 = vmul.f32 %v737, %v763
      %v766 = vadd.f32 %v764, 0.0
      %v767 = vadd.f32 %v765, 0.0
      %768 = vrot.lane.b32.xlu0 %v234, 16
      %v769 = vpop.permute.xlu0 %768
      %770 = vrot.lane.b32.xlu0 %v251, 16
      %v771 = vpop.permute.xlu0 %770
      %772 = vrot.lane.b32.xlu0 %v235, 16
      %v773 = vpop.permute.xlu0 %772
      %vm774 = vcmp.lt.s32.totalorder %v237, 16
      %v775 = vsel %vm774, %v771, %v773
      %v776 = vsel %vm774, %v769, %v771
      %v777 = vld [vmem:[%s1] sm:$0x3]
      %779 = vrot.lane.b32.xlu0 %v777, 124
      %v780 = vpop.permute.xlu0 %779
      %v781 = vsel %vm263, %v780, 0
      %v784 = vsel %vm267, %v776, 0
      %v787 = vsel %vm267, %v775, 0
      %789 = vmatprep.subr.mxu0 0.0
      %790 = vmatpush1.msra.mxu0 0.0
      %791 = vmatprep.subr.mxu0 0.0
      %792 = vmatpush1.msra.mxu0 0.0
      %793 = vmatprep.subr.mxu0 0.0
      %794 = vmatpush1.msra.mxu0 0.0
      %795 = vmatprep.subr.mxu0 0.0
      %796 = vmatpush1.msra.mxu0 0.0
      %797 = vmatprep.subr.mxu0 0.0
      %798 = vmatpush1.msra.mxu0 0.0
      %799 = vmatprep.subr.mxu0 0.0
      %800 = vmatpush1.msra.mxu0 0.0
      %801 = vmatprep.subr.mxu0 0.0
      %802 = vmatpush1.msra.mxu0 0.0
      %803 = vmatprep.subr.mxu0 0.0
      %804 = vmatpush1.msra.mxu0 0.0
      %805 = vmatprep.subr.mxu0 0.0
      %806 = vmatpush1.msra.mxu0 0.0
      %807 = vmatprep.subr.mxu0 0.0
      %808 = vmatpush1.msra.mxu0 0.0
      %809 = vmatprep.subr.mxu0 0.0
      %810 = vmatpush1.msra.mxu0 0.0
      %811 = vmatprep.subr.mxu0 0.0
      %812 = vmatpush1.msra.mxu0 0.0
      %813 = vmatprep.subr.mxu0 0.0
      %814 = vmatpush1.msra.mxu0 0.0
      %815 = vmatprep.subr.mxu0 0.0
      %816 = vmatpush1.msra.mxu0 0.0
      %817 = vmatprep.subr.mxu0 0.0
      %818 = vmatpush1.msra.mxu0 0.0
      %v819 = vand.u32 %v787, 4294901760
      %820 = vmatprep.subr.mxu0 %v819
      %v821 = vand.u32 %v784, 4294901760
      %822 = vmatpush1.msra.mxu0 %v821
      %823 = vmatprep.subr.mxu0 0.0
      %824 = vmatpush2.msra.mxu0 0.0
      %825 = vmatprep.subr.mxu0 0.0
      %826 = vmatpush2.msra.mxu0 0.0
      %827 = vmatprep.subr.mxu0 0.0
      %828 = vmatpush2.msra.mxu0 0.0
      %829 = vmatprep.subr.mxu0 0.0
      %830 = vmatpush2.msra.mxu0 0.0
      %831 = vmatprep.subr.mxu0 0.0
      %832 = vmatpush2.msra.mxu0 0.0
      %833 = vmatprep.subr.mxu0 0.0
      %834 = vmatpush2.msra.mxu0 0.0
      %835 = vmatprep.subr.mxu0 0.0
      %836 = vmatpush2.msra.mxu0 0.0
      %837 = vmatprep.subr.mxu0 0.0
      %838 = vmatpush2.msra.mxu0 0.0
      %839 = vmatprep.subr.mxu0 0.0
      %840 = vmatpush2.msra.mxu0 0.0
      %841 = vmatprep.subr.mxu0 0.0
      %842 = vmatpush2.msra.mxu0 0.0
      %843 = vmatprep.subr.mxu0 0.0
      %844 = vmatpush2.msra.mxu0 0.0
      %845 = vmatprep.subr.mxu0 0.0
      %846 = vmatpush2.msra.mxu0 0.0
      %847 = vmatprep.subr.mxu0 0.0
      %848 = vmatpush2.msra.mxu0 0.0
      %849 = vmatprep.subr.mxu0 0.0
      %850 = vmatpush2.msra.mxu0 0.0
      %851 = vmatprep.subr.mxu0 0.0
      %852 = vmatpush2.msra.mxu0 0.0
      %853 = vmatprep.subr.mxu0 0.0
      %854 = vmatpush2.msra.mxu0 0.0
      %855 = vmatprep.mubr.f32.mxu0 0.0
      %v856 = vand.u32 %v781, 4294901760
      %v857 = vsub.f32 %v781, %v856
      %v858 = vand.u32 %v857, 4294901760
      %v859 = vsub.f32 %v857, %v858
      %v860 = vand.u32 %v859, 4294901760
      %861 = vmatmul.mubr.f32.gmra.mxu0 %v860
      %v862 = vpop.f32.mrf.mxu0
      %v863 = vadd.f32 0.0, %v862
      %v864 = vpop.f32.mrf.mxu0
      %v865 = vadd.f32 0.0, %v864
      %866 = vdwg.mxu0
      %867 = vmatprep.subr.mxu0 0.0
      %868 = vmatpush1.msra.mxu0 0.0
      %869 = vmatprep.subr.mxu0 0.0
      %870 = vmatpush1.msra.mxu0 0.0
      %871 = vmatprep.subr.mxu0 0.0
      %872 = vmatpush1.msra.mxu0 0.0
      %873 = vmatprep.subr.mxu0 0.0
      %874 = vmatpush1.msra.mxu0 0.0
      %875 = vmatprep.subr.mxu0 0.0
      %876 = vmatpush1.msra.mxu0 0.0
      %877 = vmatprep.subr.mxu0 0.0
      %878 = vmatpush1.msra.mxu0 0.0
      %879 = vmatprep.subr.mxu0 0.0
      %880 = vmatpush1.msra.mxu0 0.0
      %881 = vmatprep.subr.mxu0 0.0
      %882 = vmatpush1.msra.mxu0 0.0
      %883 = vmatprep.subr.mxu0 0.0
      %884 = vmatpush1.msra.mxu0 0.0
      %885 = vmatprep.subr.mxu0 0.0
      %886 = vmatpush1.msra.mxu0 0.0
      %887 = vmatprep.subr.mxu0 0.0
      %888 = vmatpush1.msra.mxu0 0.0
      %889 = vmatprep.subr.mxu0 0.0
      %890 = vmatpush1.msra.mxu0 0.0
      %891 = vmatprep.subr.mxu0 0.0
      %892 = vmatpush1.msra.mxu0 0.0
      %893 = vmatprep.subr.mxu0 0.0
      %894 = vmatpush1.msra.mxu0 0.0
      %895 = vmatprep.subr.mxu0 0.0
      %896 = vmatpush1.msra.mxu0 0.0
      %v897 = vand.u32 %v787, 4294901760
      %v898 = vsub.f32 %v787, %v897
      %v899 = vand.u32 %v898, 4294901760
      %v900 = vsub.f32 %v898, %v899
      %v901 = vand.u32 %v900, 4294901760
      %902 = vmatprep.subr.mxu0 %v901
      %v903 = vand.u32 %v784, 4294901760
      %v904 = vsub.f32 %v784, %v903
      %v905 = vand.u32 %v904, 4294901760
      %v906 = vsub.f32 %v904, %v905
      %v907 = vand.u32 %v906, 4294901760
      %908 = vmatpush1.msra.mxu0 %v907
      %909 = vmatprep.subr.mxu0 0.0
      %910 = vmatpush2.msra.mxu0 0.0
      %911 = vmatprep.subr.mxu0 0.0
      %912 = vmatpush2.msra.mxu0 0.0
      %913 = vmatprep.subr.mxu0 0.0
      %914 = vmatpush2.msra.mxu0 0.0
      %915 = vmatprep.subr.mxu0 0.0
      %916 = vmatpush2.msra.mxu0 0.0
      %917 = vmatprep.subr.mxu0 0.0
      %918 = vmatpush2.msra.mxu0 0.0
      %919 = vmatprep.subr.mxu0 0.0
      %920 = vmatpush2.msra.mxu0 0.0
      %921 = vmatprep.subr.mxu0 0.0
      %922 = vmatpush2.msra.mxu0 0.0
      %923 = vmatprep.subr.mxu0 0.0
      %924 = vmatpush2.msra.mxu0 0.0
      %925 = vmatprep.subr.mxu0 0.0
      %926 = vmatpush2.msra.mxu0 0.0
      %927 = vmatprep.subr.mxu0 0.0
      %928 = vmatpush2.msra.mxu0 0.0
      %929 = vmatprep.subr.mxu0 0.0
      %930 = vmatpush2.msra.mxu0 0.0
      %931 = vmatprep.subr.mxu0 0.0
      %932 = vmatpush2.msra.mxu0 0.0
      %933 = vmatprep.subr.mxu0 0.0
      %934 = vmatpush2.msra.mxu0 0.0
      %935 = vmatprep.subr.mxu0 0.0
      %936 = vmatpush2.msra.mxu0 0.0
      %937 = vmatprep.subr.mxu0 0.0
      %938 = vmatpush2.msra.mxu0 0.0
      %939 = vmatprep.subr.mxu0 0.0
      %940 = vmatpush2.msra.mxu0 0.0
      %941 = vmatprep.mubr.f32.mxu0 0.0
      %v942 = vand.u32 %v781, 4294901760
      %943 = vmatmul.mubr.f32.gmra.mxu0 %v942
      %v944 = vpop.f32.mrf.mxu0
      %v945 = vadd.f32 %v863, %v944
      %v946 = vpop.f32.mrf.mxu0
      %v947 = vadd.f32 %v865, %v946
      %948 = vdwg.mxu0
      %949 = vmatprep.subr.mxu0 0.0
      %950 = vmatpush1.msra.mxu0 0.0
      %951 = vmatprep.subr.mxu0 0.0
      %952 = vmatpush1.msra.mxu0 0.0
      %953 = vmatprep.subr.mxu0 0.0
      %954 = vmatpush1.msra.mxu0 0.0
      %955 = vmatprep.subr.mxu0 0.0
      %956 = vmatpush1.msra.mxu0 0.0
      %957 = vmatprep.subr.mxu0 0.0
      %958 = vmatpush1.msra.mxu0 0.0
      %959 = vmatprep.subr.mxu0 0.0
      %960 = vmatpush1.msra.mxu0 0.0
      %961 = vmatprep.subr.mxu0 0.0
      %962 = vmatpush1.msra.mxu0 0.0
      %963 = vmatprep.subr.mxu0 0.0
      %964 = vmatpush1.msra.mxu0 0.0
      %965 = vmatprep.subr.mxu0 0.0
      %966 = vmatpush1.msra.mxu0 0.0
      %967 = vmatprep.subr.mxu0 0.0
      %968 = vmatpush1.msra.mxu0 0.0
      %969 = vmatprep.subr.mxu0 0.0
      %970 = vmatpush1.msra.mxu0 0.0
      %971 = vmatprep.subr.mxu0 0.0
      %972 = vmatpush1.msra.mxu0 0.0
      %973 = vmatprep.subr.mxu0 0.0
      %974 = vmatpush1.msra.mxu0 0.0
      %975 = vmatprep.subr.mxu0 0.0
      %976 = vmatpush1.msra.mxu0 0.0
      %977 = vmatprep.subr.mxu0 0.0
      %978 = vmatpush1.msra.mxu0 0.0
      %v979 = vand.u32 %v787, 4294901760
      %v980 = vsub.f32 %v787, %v979
      %981 = vmatprep.subr.mxu0 %v980
      %v982 = vand.u32 %v784, 4294901760
      %v983 = vsub.f32 %v784, %v982
      %984 = vmatpush1.msra.mxu0 %v983
      %985 = vmatprep.subr.mxu0 0.0
      %986 = vmatpush2.msra.mxu0 0.0
      %987 = vmatprep.subr.mxu0 0.0
      %988 = vmatpush2.msra.mxu0 0.0
      %989 = vmatprep.subr.mxu0 0.0
      %990 = vmatpush2.msra.mxu0 0.0
      %991 = vmatprep.subr.mxu0 0.0
      %992 = vmatpush2.msra.mxu0 0.0
      %993 = vmatprep.subr.mxu0 0.0
      %994 = vmatpush2.msra.mxu0 0.0
      %995 = vmatprep.subr.mxu0 0.0
      %996 = vmatpush2.msra.mxu0 0.0
      %997 = vmatprep.subr.mxu0 0.0
      %998 = vmatpush2.msra.mxu0 0.0
      %999 = vmatprep.subr.mxu0 0.0
      %1000 = vmatpush2.msra.mxu0 0.0
      %1001 = vmatprep.subr.mxu0 0.0
      %1002 = vmatpush2.msra.mxu0 0.0
      %1003 = vmatprep.subr.mxu0 0.0
      %1004 = vmatpush2.msra.mxu0 0.0
      %1005 = vmatprep.subr.mxu0 0.0
      %1006 = vmatpush2.msra.mxu0 0.0
      %1007 = vmatprep.subr.mxu0 0.0
      %1008 = vmatpush2.msra.mxu0 0.0
      %1009 = vmatprep.subr.mxu0 0.0
      %1010 = vmatpush2.msra.mxu0 0.0
      %1011 = vmatprep.subr.mxu0 0.0
      %1012 = vmatpush2.msra.mxu0 0.0
      %1013 = vmatprep.subr.mxu0 0.0
      %1014 = vmatpush2.msra.mxu0 0.0
      %1015 = vmatprep.subr.mxu0 0.0
      %1016 = vmatpush2.msra.mxu0 0.0
      %1017 = vmatprep.mubr.f32.mxu0 0.0
      %v1018 = vand.u32 %v781, 4294901760
      %v1019 = vsub.f32 %v781, %v1018
      %1020 = vmatmul.mubr.f32.gmra.mxu0 %v1019
      %v1021 = vpop.f32.mrf.mxu0
      %v1022 = vadd.f32 %v945, %v1021
      %v1023 = vpop.f32.mrf.mxu0
      %v1024 = vadd.f32 %v947, %v1023
      %1025 = vdwg.mxu0
      %1026 = vmatprep.subr.mxu0 0.0
      %1027 = vmatpush1.msra.mxu0 0.0
      %1028 = vmatprep.subr.mxu0 0.0
      %1029 = vmatpush1.msra.mxu0 0.0
      %1030 = vmatprep.subr.mxu0 0.0
      %1031 = vmatpush1.msra.mxu0 0.0
      %1032 = vmatprep.subr.mxu0 0.0
      %1033 = vmatpush1.msra.mxu0 0.0
      %1034 = vmatprep.subr.mxu0 0.0
      %1035 = vmatpush1.msra.mxu0 0.0
      %1036 = vmatprep.subr.mxu0 0.0
      %1037 = vmatpush1.msra.mxu0 0.0
      %1038 = vmatprep.subr.mxu0 0.0
      %1039 = vmatpush1.msra.mxu0 0.0
      %1040 = vmatprep.subr.mxu0 0.0
      %1041 = vmatpush1.msra.mxu0 0.0
      %1042 = vmatprep.subr.mxu0 0.0
      %1043 = vmatpush1.msra.mxu0 0.0
      %1044 = vmatprep.subr.mxu0 0.0
      %1045 = vmatpush1.msra.mxu0 0.0
      %1046 = vmatprep.subr.mxu0 0.0
      %1047 = vmatpush1.msra.mxu0 0.0
      %1048 = vmatprep.subr.mxu0 0.0
      %1049 = vmatpush1.msra.mxu0 0.0
      %1050 = vmatprep.subr.mxu0 0.0
      %1051 = vmatpush1.msra.mxu0 0.0
      %1052 = vmatprep.subr.mxu0 0.0
      %1053 = vmatpush1.msra.mxu0 0.0
      %1054 = vmatprep.subr.mxu0 0.0
      %1055 = vmatpush1.msra.mxu0 0.0
      %v1056 = vand.u32 %v787, 4294901760
      %1057 = vmatprep.subr.mxu0 %v1056
      %v1058 = vand.u32 %v784, 4294901760
      %1059 = vmatpush1.msra.mxu0 %v1058
      %1060 = vmatprep.subr.mxu0 0.0
      %1061 = vmatpush2.msra.mxu0 0.0
      %1062 = vmatprep.subr.mxu0 0.0
      %1063 = vmatpush2.msra.mxu0 0.0
      %1064 = vmatprep.subr.mxu0 0.0
      %1065 = vmatpush2.msra.mxu0 0.0
      %1066 = vmatprep.subr.mxu0 0.0
      %1067 = vmatpush2.msra.mxu0 0.0
      %1068 = vmatprep.subr.mxu0 0.0
      %1069 = vmatpush2.msra.mxu0 0.0
      %1070 = vmatprep.subr.mxu0 0.0
      %1071 = vmatpush2.msra.mxu0 0.0
      %1072 = vmatprep.subr.mxu0 0.0
      %1073 = vmatpush2.msra.mxu0 0.0
      %1074 = vmatprep.subr.mxu0 0.0
      %1075 = vmatpush2.msra.mxu0 0.0
      %1076 = vmatprep.subr.mxu0 0.0
      %1077 = vmatpush2.msra.mxu0 0.0
      %1078 = vmatprep.subr.mxu0 0.0
      %1079 = vmatpush2.msra.mxu0 0.0
      %1080 = vmatprep.subr.mxu0 0.0
      %1081 = vmatpush2.msra.mxu0 0.0
      %1082 = vmatprep.subr.mxu0 0.0
      %1083 = vmatpush2.msra.mxu0 0.0
      %1084 = vmatprep.subr.mxu0 0.0
      %1085 = vmatpush2.msra.mxu0 0.0
      %1086 = vmatprep.subr.mxu0 0.0
      %1087 = vmatpush2.msra.mxu0 0.0
      %1088 = vmatprep.subr.mxu0 0.0
      %1089 = vmatpush2.msra.mxu0 0.0
      %1090 = vmatprep.subr.mxu0 0.0
      %1091 = vmatpush2.msra.mxu0 0.0
      %1092 = vmatprep.mubr.f32.mxu0 0.0
      %v1093 = vand.u32 %v781, 4294901760
      %v1094 = vsub.f32 %v781, %v1093
      %v1095 = vand.u32 %v1094, 4294901760
      %1096 = vmatmul.mubr.f32.gmra.mxu0 %v1095
      %v1097 = vpop.f32.mrf.mxu0
      %v1098 = vadd.f32 %v1022, %v1097
      %v1099 = vpop.f32.mrf.mxu0
      %v1100 = vadd.f32 %v1024, %v1099
      %1101 = vdwg.mxu0
      %1102 = vmatprep.subr.mxu0 0.0
      %1103 = vmatpush1.msra.mxu0 0.0
      %1104 = vmatprep.subr.mxu0 0.0
      %1105 = vmatpush1.msra.mxu0 0.0
      %1106 = vmatprep.subr.mxu0 0.0
      %1107 = vmatpush1.msra.mxu0 0.0
      %1108 = vmatprep.subr.mxu0 0.0
      %1109 = vmatpush1.msra.mxu0 0.0
      %1110 = vmatprep.subr.mxu0 0.0
      %1111 = vmatpush1.msra.mxu0 0.0
      %1112 = vmatprep.subr.mxu0 0.0
      %1113 = vmatpush1.msra.mxu0 0.0
      %1114 = vmatprep.subr.mxu0 0.0
      %1115 = vmatpush1.msra.mxu0 0.0
      %1116 = vmatprep.subr.mxu0 0.0
      %1117 = vmatpush1.msra.mxu0 0.0
      %1118 = vmatprep.subr.mxu0 0.0
      %1119 = vmatpush1.msra.mxu0 0.0
      %1120 = vmatprep.subr.mxu0 0.0
      %1121 = vmatpush1.msra.mxu0 0.0
      %1122 = vmatprep.subr.mxu0 0.0
      %1123 = vmatpush1.msra.mxu0 0.0
      %1124 = vmatprep.subr.mxu0 0.0
      %1125 = vmatpush1.msra.mxu0 0.0
      %1126 = vmatprep.subr.mxu0 0.0
      %1127 = vmatpush1.msra.mxu0 0.0
      %1128 = vmatprep.subr.mxu0 0.0
      %1129 = vmatpush1.msra.mxu0 0.0
      %1130 = vmatprep.subr.mxu0 0.0
      %1131 = vmatpush1.msra.mxu0 0.0
      %v1132 = vand.u32 %v787, 4294901760
      %v1133 = vsub.f32 %v787, %v1132
      %v1134 = vand.u32 %v1133, 4294901760
      %1135 = vmatprep.subr.mxu0 %v1134
      %v1136 = vand.u32 %v784, 4294901760
      %v1137 = vsub.f32 %v784, %v1136
      %v1138 = vand.u32 %v1137, 4294901760
      %1139 = vmatpush1.msra.mxu0 %v1138
      %1140 = vmatprep.subr.mxu0 0.0
      %1141 = vmatpush2.msra.mxu0 0.0
      %1142 = vmatprep.subr.mxu0 0.0
      %1143 = vmatpush2.msra.mxu0 0.0
      %1144 = vmatprep.subr.mxu0 0.0
      %1145 = vmatpush2.msra.mxu0 0.0
      %1146 = vmatprep.subr.mxu0 0.0
      %1147 = vmatpush2.msra.mxu0 0.0
      %1148 = vmatprep.subr.mxu0 0.0
      %1149 = vmatpush2.msra.mxu0 0.0
      %1150 = vmatprep.subr.mxu0 0.0
      %1151 = vmatpush2.msra.mxu0 0.0
      %1152 = vmatprep.subr.mxu0 0.0
      %1153 = vmatpush2.msra.mxu0 0.0
      %1154 = vmatprep.subr.mxu0 0.0
      %1155 = vmatpush2.msra.mxu0 0.0
      %1156 = vmatprep.subr.mxu0 0.0
      %1157 = vmatpush2.msra.mxu0 0.0
      %1158 = vmatprep.subr.mxu0 0.0
      %1159 = vmatpush2.msra.mxu0 0.0
      %1160 = vmatprep.subr.mxu0 0.0
      %1161 = vmatpush2.msra.mxu0 0.0
      %1162 = vmatprep.subr.mxu0 0.0
      %1163 = vmatpush2.msra.mxu0 0.0
      %1164 = vmatprep.subr.mxu0 0.0
      %1165 = vmatpush2.msra.mxu0 0.0
      %1166 = vmatprep.subr.mxu0 0.0
      %1167 = vmatpush2.msra.mxu0 0.0
      %1168 = vmatprep.subr.mxu0 0.0
      %1169 = vmatpush2.msra.mxu0 0.0
      %1170 = vmatprep.subr.mxu0 0.0
      %1171 = vmatpush2.msra.mxu0 0.0
      %1172 = vmatprep.mubr.f32.mxu0 0.0
      %v1173 = vand.u32 %v781, 4294901760
      %1174 = vmatmul.mubr.f32.gmra.mxu0 %v1173
      %v1175 = vpop.f32.mrf.mxu0
      %v1176 = vadd.f32 %v1098, %v1175
      %v1177 = vpop.f32.mrf.mxu0
      %v1178 = vadd.f32 %v1100, %v1177
      %1179 = vdwg.mxu0
      %1180 = vmatprep.subr.mxu0 0.0
      %1181 = vmatpush1.msra.mxu0 0.0
      %1182 = vmatprep.subr.mxu0 0.0
      %1183 = vmatpush1.msra.mxu0 0.0
      %1184 = vmatprep.subr.mxu0 0.0
      %1185 = vmatpush1.msra.mxu0 0.0
      %1186 = vmatprep.subr.mxu0 0.0
      %1187 = vmatpush1.msra.mxu0 0.0
      %1188 = vmatprep.subr.mxu0 0.0
      %1189 = vmatpush1.msra.mxu0 0.0
      %1190 = vmatprep.subr.mxu0 0.0
      %1191 = vmatpush1.msra.mxu0 0.0
      %1192 = vmatprep.subr.mxu0 0.0
      %1193 = vmatpush1.msra.mxu0 0.0
      %1194 = vmatprep.subr.mxu0 0.0
      %1195 = vmatpush1.msra.mxu0 0.0
      %1196 = vmatprep.subr.mxu0 0.0
      %1197 = vmatpush1.msra.mxu0 0.0
      %1198 = vmatprep.subr.mxu0 0.0
      %1199 = vmatpush1.msra.mxu0 0.0
      %1200 = vmatprep.subr.mxu0 0.0
      %1201 = vmatpush1.msra.mxu0 0.0
      %1202 = vmatprep.subr.mxu0 0.0
      %1203 = vmatpush1.msra.mxu0 0.0
      %1204 = vmatprep.subr.mxu0 0.0
      %1205 = vmatpush1.msra.mxu0 0.0
      %1206 = vmatprep.subr.mxu0 0.0
      %1207 = vmatpush1.msra.mxu0 0.0
      %1208 = vmatprep.subr.mxu0 0.0
      %1209 = vmatpush1.msra.mxu0 0.0
      %v1210 = vand.u32 %v787, 4294901760
      %1211 = vmatprep.subr.mxu0 %v1210
      %v1212 = vand.u32 %v784, 4294901760
      %1213 = vmatpush1.msra.mxu0 %v1212
      %1214 = vmatprep.subr.mxu0 0.0
      %1215 = vmatpush2.msra.mxu0 0.0
      %1216 = vmatprep.subr.mxu0 0.0
      %1217 = vmatpush2.msra.mxu0 0.0
      %1218 = vmatprep.subr.mxu0 0.0
      %1219 = vmatpush2.msra.mxu0 0.0
      %1220 = vmatprep.subr.mxu0 0.0
      %1221 = vmatpush2.msra.mxu0 0.0
      %1222 = vmatprep.subr.mxu0 0.0
      %1223 = vmatpush2.msra.mxu0 0.0
      %1224 = vmatprep.subr.mxu0 0.0
      %1225 = vmatpush2.msra.mxu0 0.0
      %1226 = vmatprep.subr.mxu0 0.0
      %1227 = vmatpush2.msra.mxu0 0.0
      %1228 = vmatprep.subr.mxu0 0.0
      %1229 = vmatpush2.msra.mxu0 0.0
      %1230 = vmatprep.subr.mxu0 0.0
      %1231 = vmatpush2.msra.mxu0 0.0
      %1232 = vmatprep.subr.mxu0 0.0
      %1233 = vmatpush2.msra.mxu0 0.0
      %1234 = vmatprep.subr.mxu0 0.0
      %1235 = vmatpush2.msra.mxu0 0.0
      %1236 = vmatprep.subr.mxu0 0.0
      %1237 = vmatpush2.msra.mxu0 0.0
      %1238 = vmatprep.subr.mxu0 0.0
      %1239 = vmatpush2.msra.mxu0 0.0
      %1240 = vmatprep.subr.mxu0 0.0
      %1241 = vmatpush2.msra.mxu0 0.0
      %1242 = vmatprep.subr.mxu0 0.0
      %1243 = vmatpush2.msra.mxu0 0.0
      %1244 = vmatprep.subr.mxu0 0.0
      %1245 = vmatpush2.msra.mxu0 0.0
      %1246 = vmatprep.mubr.f32.mxu0 0.0
      %v1247 = vand.u32 %v781, 4294901760
      %1248 = vmatmul.mubr.f32.gmra.mxu0 %v1247
      %v1249 = vpop.f32.mrf.mxu0
      %v1250 = vadd.f32 %v1176, %v1249
      %v1251 = vpop.f32.mrf.mxu0
      %v1252 = vadd.f32 %v1178, %v1251
      %1253 = vdwg.mxu0
      %v1254 = vsel %vm243, 1, 0
      %v1255 = vsel %vm244, 1, 0
      %v1256 = vcvt.s32.f32 %v1254
      %v1257 = vcvt.s32.f32 %v1255
      %v1258 = vmul.f32 %v1250, %v1256
      %v1259 = vmul.f32 %v1252, %v1257
      %v1260 = vadd.f32 %v766, %v1258
      %v1261 = vadd.f32 %v767, %v1259
      %1262 = vrot.lane.b32.xlu0 %v234, 15
      %v1263 = vpop.permute.xlu0 %1262
      %1264 = vrot.lane.b32.xlu0 %v251, 15
      %v1265 = vpop.permute.xlu0 %1264
      %1266 = vrot.lane.b32.xlu0 %v235, 15
      %v1267 = vpop.permute.xlu0 %1266
      %vm1268 = vcmp.lt.s32.totalorder %v237, 15
      %v1269 = vsel %vm1268, %v1265, %v1267
      %v1270 = vsel %vm1268, %v1263, %v1265
      %v1271 = vld [vmem:[%s1] sm:$0x3]
      %1273 = vrot.lane.b32.xlu0 %v1271, 120
      %v1274 = vpop.permute.xlu0 %1273
      %v1275 = vsel %vm263, %v1274, 0
      %v1278 = vsel %vm267, %v1270, 0
      %v1281 = vsel %vm267, %v1269, 0
      %1283 = vmatprep.subr.mxu0 0.0
      %1284 = vmatpush1.msra.mxu0 0.0
      %1285 = vmatprep.subr.mxu0 0.0
      %1286 = vmatpush1.msra.mxu0 0.0
      %1287 = vmatprep.subr.mxu0 0.0
      %1288 = vmatpush1.msra.mxu0 0.0
      %1289 = vmatprep.subr.mxu0 0.0
      %1290 = vmatpush1.msra.mxu0 0.0
      %1291 = vmatprep.subr.mxu0 0.0
      %1292 = vmatpush1.msra.mxu0 0.0
      %1293 = vmatprep.subr.mxu0 0.0
      %1294 = vmatpush1.msra.mxu0 0.0
      %1295 = vmatprep.subr.mxu0 0.0
      %1296 = vmatpush1.msra.mxu0 0.0
      %1297 = vmatprep.subr.mxu0 0.0
      %1298 = vmatpush1.msra.mxu0 0.0
      %1299 = vmatprep.subr.mxu0 0.0
      %1300 = vmatpush1.msra.mxu0 0.0
      %1301 = vmatprep.subr.mxu0 0.0
      %1302 = vmatpush1.msra.mxu0 0.0
      %1303 = vmatprep.subr.mxu0 0.0
      %1304 = vmatpush1.msra.mxu0 0.0
      %1305 = vmatprep.subr.mxu0 0.0
      %1306 = vmatpush1.msra.mxu0 0.0
      %1307 = vmatprep.subr.mxu0 0.0
      %1308 = vmatpush1.msra.mxu0 0.0
      %1309 = vmatprep.subr.mxu0 0.0
      %1310 = vmatpush1.msra.mxu0 0.0
      %1311 = vmatprep.subr.mxu0 0.0
      %1312 = vmatpush1.msra.mxu0 0.0
      %v1313 = vand.u32 %v1281, 4294901760
      %1314 = vmatprep.subr.mxu0 %v1313
      %v1315 = vand.u32 %v1278, 4294901760
      %1316 = vmatpush1.msra.mxu0 %v1315
      %1317 = vmatprep.subr.mxu0 0.0
      %1318 = vmatpush2.msra.mxu0 0.0
      %1319 = vmatprep.subr.mxu0 0.0
      %1320 = vmatpush2.msra.mxu0 0.0
      %1321 = vmatprep.subr.mxu0 0.0
      %1322 = vmatpush2.msra.mxu0 0.0
      %1323 = vmatprep.subr.mxu0 0.0
      %1324 = vmatpush2.msra.mxu0 0.0
      %1325 = vmatprep.subr.mxu0 0.0
      %1326 = vmatpush2.msra.mxu0 0.0
      %1327 = vmatprep.subr.mxu0 0.0
      %1328 = vmatpush2.msra.mxu0 0.0
      %1329 = vmatprep.subr.mxu0 0.0
      %1330 = vmatpush2.msra.mxu0 0.0
      %1331 = vmatprep.subr.mxu0 0.0
      %1332 = vmatpush2.msra.mxu0 0.0
      %1333 = vmatprep.subr.mxu0 0.0
      %1334 = vmatpush2.msra.mxu0 0.0
      %1335 = vmatprep.subr.mxu0 0.0
      %1336 = vmatpush2.msra.mxu0 0.0
      %1337 = vmatprep.subr.mxu0 0.0
      %1338 = vmatpush2.msra.mxu0 0.0
      %1339 = vmatprep.subr.mxu0 0.0
      %1340 = vmatpush2.msra.mxu0 0.0
      %1341 = vmatprep.subr.mxu0 0.0
      %1342 = vmatpush2.msra.mxu0 0.0
      %1343 = vmatprep.subr.mxu0 0.0
      %1344 = vmatpush2.msra.mxu0 0.0
      %1345 = vmatprep.subr.mxu0 0.0
      %1346 = vmatpush2.msra.mxu0 0.0
      %1347 = vmatprep.subr.mxu0 0.0
      %1348 = vmatpush2.msra.mxu0 0.0
      %1349 = vmatprep.mubr.f32.mxu0 0.0
      %v1350 = vand.u32 %v1275, 4294901760
      %v1351 = vsub.f32 %v1275, %v1350
      %v1352 = vand.u32 %v1351, 4294901760
      %v1353 = vsub.f32 %v1351, %v1352
      %v1354 = vand.u32 %v1353, 4294901760
      %1355 = vmatmul.mubr.f32.gmra.mxu0 %v1354
      %v1356 = vpop.f32.mrf.mxu0
      %v1357 = vadd.f32 0.0, %v1356
      %v1358 = vpop.f32.mrf.mxu0
      %v1359 = vadd.f32 0.0, %v1358
      %1360 = vdwg.mxu0
      %1361 = vmatprep.subr.mxu0 0.0
      %1362 = vmatpush1.msra.mxu0 0.0
      %1363 = vmatprep.subr.mxu0 0.0
      %1364 = vmatpush1.msra.mxu0 0.0
      %1365 = vmatprep.subr.mxu0 0.0
      %1366 = vmatpush1.msra.mxu0 0.0
      %1367 = vmatprep.subr.mxu0 0.0
      %1368 = vmatpush1.msra.mxu0 0.0
      %1369 = vmatprep.subr.mxu0 0.0
      %1370 = vmatpush1.msra.mxu0 0.0
      %1371 = vmatprep.subr.mxu0 0.0
      %1372 = vmatpush1.msra.mxu0 0.0
      %1373 = vmatprep.subr.mxu0 0.0
      %1374 = vmatpush1.msra.mxu0 0.0
      %1375 = vmatprep.subr.mxu0 0.0
      %1376 = vmatpush1.msra.mxu0 0.0
      %1377 = vmatprep.subr.mxu0 0.0
      %1378 = vmatpush1.msra.mxu0 0.0
      %1379 = vmatprep.subr.mxu0 0.0
      %1380 = vmatpush1.msra.mxu0 0.0
      %1381 = vmatprep.subr.mxu0 0.0
      %1382 = vmatpush1.msra.mxu0 0.0
      %1383 = vmatprep.subr.mxu0 0.0
      %1384 = vmatpush1.msra.mxu0 0.0
      %1385 = vmatprep.subr.mxu0 0.0
      %1386 = vmatpush1.msra.mxu0 0.0
      %1387 = vmatprep.subr.mxu0 0.0
      %1388 = vmatpush1.msra.mxu0 0.0
      %1389 = vmatprep.subr.mxu0 0.0
      %1390 = vmatpush1.msra.mxu0 0.0
      %v1391 = vand.u32 %v1281, 4294901760
      %v1392 = vsub.f32 %v1281, %v1391
      %v1393 = vand.u32 %v1392, 4294901760
      %v1394 = vsub.f32 %v1392, %v1393
      %v1395 = vand.u32 %v1394, 4294901760
      %1396 = vmatprep.subr.mxu0 %v1395
      %v1397 = vand.u32 %v1278, 4294901760
      %v1398 = vsub.f32 %v1278, %v1397
      %v1399 = vand.u32 %v1398, 4294901760
      %v1400 = vsub.f32 %v1398, %v1399
      %v1401 = vand.u32 %v1400, 4294901760
      %1402 = vmatpush1.msra.mxu0 %v1401
      %1403 = vmatprep.subr.mxu0 0.0
      %1404 = vmatpush2.msra.mxu0 0.0
      %1405 = vmatprep.subr.mxu0 0.0
      %1406 = vmatpush2.msra.mxu0 0.0
      %1407 = vmatprep.subr.mxu0 0.0
      %1408 = vmatpush2.msra.mxu0 0.0
      %1409 = vmatprep.subr.mxu0 0.0
      %1410 = vmatpush2.msra.mxu0 0.0
      %1411 = vmatprep.subr.mxu0 0.0
      %1412 = vmatpush2.msra.mxu0 0.0
      %1413 = vmatprep.subr.mxu0 0.0
      %1414 = vmatpush2.msra.mxu0 0.0
      %1415 = vmatprep.subr.mxu0 0.0
      %1416 = vmatpush2.msra.mxu0 0.0
      %1417 = vmatprep.subr.mxu0 0.0
      %1418 = vmatpush2.msra.mxu0 0.0
      %1419 = vmatprep.subr.mxu0 0.0
      %1420 = vmatpush2.msra.mxu0 0.0
      %1421 = vmatprep.subr.mxu0 0.0
      %1422 = vmatpush2.msra.mxu0 0.0
      %1423 = vmatprep.subr.mxu0 0.0
      %1424 = vmatpush2.msra.mxu0 0.0
      %1425 = vmatprep.subr.mxu0 0.0
      %1426 = vmatpush2.msra.mxu0 0.0
      %1427 = vmatprep.subr.mxu0 0.0
      %1428 = vmatpush2.msra.mxu0 0.0
      %1429 = vmatprep.subr.mxu0 0.0
      %1430 = vmatpush2.msra.mxu0 0.0
      %1431 = vmatprep.subr.mxu0 0.0
      %1432 = vmatpush2.msra.mxu0 0.0
      %1433 = vmatprep.subr.mxu0 0.0
      %1434 = vmatpush2.msra.mxu0 0.0
      %1435 = vmatprep.mubr.f32.mxu0 0.0
      %v1436 = vand.u32 %v1275, 4294901760
      %1437 = vmatmul.mubr.f32.gmra.mxu0 %v1436
      %v1438 = vpop.f32.mrf.mxu0
      %v1439 = vadd.f32 %v1357, %v1438
      %v1440 = vpop.f32.mrf.mxu0
      %v1441 = vadd.f32 %v1359, %v1440
      %1442 = vdwg.mxu0
      %1443 = vmatprep.subr.mxu0 0.0
      %1444 = vmatpush1.msra.mxu0 0.0
      %1445 = vmatprep.subr.mxu0 0.0
      %1446 = vmatpush1.msra.mxu0 0.0
      %1447 = vmatprep.subr.mxu0 0.0
      %1448 = vmatpush1.msra.mxu0 0.0
      %1449 = vmatprep.subr.mxu0 0.0
      %1450 = vmatpush1.msra.mxu0 0.0
      %1451 = vmatprep.subr.mxu0 0.0
      %1452 = vmatpush1.msra.mxu0 0.0
      %1453 = vmatprep.subr.mxu0 0.0
      %1454 = vmatpush1.msra.mxu0 0.0
      %1455 = vmatprep.subr.mxu0 0.0
      %1456 = vmatpush1.msra.mxu0 0.0
      %1457 = vmatprep.subr.mxu0 0.0
      %1458 = vmatpush1.msra.mxu0 0.0
      %1459 = vmatprep.subr.mxu0 0.0
      %1460 = vmatpush1.msra.mxu0 0.0
      %1461 = vmatprep.subr.mxu0 0.0
      %1462 = vmatpush1.msra.mxu0 0.0
      %1463 = vmatprep.subr.mxu0 0.0
      %1464 = vmatpush1.msra.mxu0 0.0
      %1465 = vmatprep.subr.mxu0 0.0
      %1466 = vmatpush1.msra.mxu0 0.0
      %1467 = vmatprep.subr.mxu0 0.0
      %1468 = vmatpush1.msra.mxu0 0.0
      %1469 = vmatprep.subr.mxu0 0.0
      %1470 = vmatpush1.msra.mxu0 0.0
      %1471 = vmatprep.subr.mxu0 0.0
      %1472 = vmatpush1.msra.mxu0 0.0
      %v1473 = vand.u32 %v1281, 4294901760
      %v1474 = vsub.f32 %v1281, %v1473
      %1475 = vmatprep.subr.mxu0 %v1474
      %v1476 = vand.u32 %v1278, 4294901760
      %v1477 = vsub.f32 %v1278, %v1476
      %1478 = vmatpush1.msra.mxu0 %v1477
      %1479 = vmatprep.subr.mxu0 0.0
      %1480 = vmatpush2.msra.mxu0 0.0
      %1481 = vmatprep.subr.mxu0 0.0
      %1482 = vmatpush2.msra.mxu0 0.0
      %1483 = vmatprep.subr.mxu0 0.0
      %1484 = vmatpush2.msra.mxu0 0.0
      %1485 = vmatprep.subr.mxu0 0.0
      %1486 = vmatpush2.msra.mxu0 0.0
      %1487 = vmatprep.subr.mxu0 0.0
      %1488 = vmatpush2.msra.mxu0 0.0
      %1489 = vmatprep.subr.mxu0 0.0
      %1490 = vmatpush2.msra.mxu0 0.0
      %1491 = vmatprep.subr.mxu0 0.0
      %1492 = vmatpush2.msra.mxu0 0.0
      %1493 = vmatprep.subr.mxu0 0.0
      %1494 = vmatpush2.msra.mxu0 0.0
      %1495 = vmatprep.subr.mxu0 0.0
      %1496 = vmatpush2.msra.mxu0 0.0
      %1497 = vmatprep.subr.mxu0 0.0
      %1498 = vmatpush2.msra.mxu0 0.0
      %1499 = vmatprep.subr.mxu0 0.0
      %1500 = vmatpush2.msra.mxu0 0.0
      %1501 = vmatprep.subr.mxu0 0.0
      %1502 = vmatpush2.msra.mxu0 0.0
      %1503 = vmatprep.subr.mxu0 0.0
      %1504 = vmatpush2.msra.mxu0 0.0
      %1505 = vmatprep.subr.mxu0 0.0
      %1506 = vmatpush2.msra.mxu0 0.0
      %1507 = vmatprep.subr.mxu0 0.0
      %1508 = vmatpush2.msra.mxu0 0.0
      %1509 = vmatprep.subr.mxu0 0.0
      %1510 = vmatpush2.msra.mxu0 0.0
      %1511 = vmatprep.mubr.f32.mxu0 0.0
      %v1512 = vand.u32 %v1275, 4294901760
      %v1513 = vsub.f32 %v1275, %v1512
      %1514 = vmatmul.mubr.f32.gmra.mxu0 %v1513
      %v1515 = vpop.f32.mrf.mxu0
      %v1516 = vadd.f32 %v1439, %v1515
      %v1517 = vpop.f32.mrf.mxu0
      %v1518 = vadd.f32 %v1441, %v1517
      %1519 = vdwg.mxu0
      %1520 = vmatprep.subr.mxu0 0.0
      %1521 = vmatpush1.msra.mxu0 0.0
      %1522 = vmatprep.subr.mxu0 0.0
      %1523 = vmatpush1.msra.mxu0 0.0
      %1524 = vmatprep.subr.mxu0 0.0
      %1525 = vmatpush1.msra.mxu0 0.0
      %1526 = vmatprep.subr.mxu0 0.0
      %1527 = vmatpush1.msra.mxu0 0.0
      %1528 = vmatprep.subr.mxu0 0.0
      %1529 = vmatpush1.msra.mxu0 0.0
      %1530 = vmatprep.subr.mxu0 0.0
      %1531 = vmatpush1.msra.mxu0 0.0
      %1532 = vmatprep.subr.mxu0 0.0
      %1533 = vmatpush1.msra.mxu0 0.0
      %1534 = vmatprep.subr.mxu0 0.0
      %1535 = vmatpush1.msra.mxu0 0.0
      %1536 = vmatprep.subr.mxu0 0.0
      %1537 = vmatpush1.msra.mxu0 0.0
      %1538 = vmatprep.subr.mxu0 0.0
      %1539 = vmatpush1.msra.mxu0 0.0
      %1540 = vmatprep.subr.mxu0 0.0
      %1541 = vmatpush1.msra.mxu0 0.0
      %1542 = vmatprep.subr.mxu0 0.0
      %1543 = vmatpush1.msra.mxu0 0.0
      %1544 = vmatprep.subr.mxu0 0.0
      %1545 = vmatpush1.msra.mxu0 0.0
      %1546 = vmatprep.subr.mxu0 0.0
      %1547 = vmatpush1.msra.mxu0 0.0
      %1548 = vmatprep.subr.mxu0 0.0
      %1549 = vmatpush1.msra.mxu0 0.0
      %v1550 = vand.u32 %v1281, 4294901760
      %1551 = vmatprep.subr.mxu0 %v1550
      %v1552 = vand.u32 %v1278, 4294901760
      %1553 = vmatpush1.msra.mxu0 %v1552
      %1554 = vmatprep.subr.mxu0 0.0
      %1555 = vmatpush2.msra.mxu0 0.0
      %1556 = vmatprep.subr.mxu0 0.0
      %1557 = vmatpush2.msra.mxu0 0.0
      %1558 = vmatprep.subr.mxu0 0.0
      %1559 = vmatpush2.msra.mxu0 0.0
      %1560 = vmatprep.subr.mxu0 0.0
      %1561 = vmatpush2.msra.mxu0 0.0
      %1562 = vmatprep.subr.mxu0 0.0
      %1563 = vmatpush2.msra.mxu0 0.0
      %1564 = vmatprep.subr.mxu0 0.0
      %1565 = vmatpush2.msra.mxu0 0.0
      %1566 = vmatprep.subr.mxu0 0.0
      %1567 = vmatpush2.msra.mxu0 0.0
      %1568 = vmatprep.subr.mxu0 0.0
      %1569 = vmatpush2.msra.mxu0 0.0
      %1570 = vmatprep.subr.mxu0 0.0
      %1571 = vmatpush2.msra.mxu0 0.0
      %1572 = vmatprep.subr.mxu0 0.0
      %1573 = vmatpush2.msra.mxu0 0.0
      %1574 = vmatprep.subr.mxu0 0.0
      %1575 = vmatpush2.msra.mxu0 0.0
      %1576 = vmatprep.subr.mxu0 0.0
      %1577 = vmatpush2.msra.mxu0 0.0
      %1578 = vmatprep.subr.mxu0 0.0
      %1579 = vmatpush2.msra.mxu0 0.0
      %1580 = vmatprep.subr.mxu0 0.0
      %1581 = vmatpush2.msra.mxu0 0.0
      %1582 = vmatprep.subr.mxu0 0.0
      %1583 = vmatpush2.msra.mxu0 0.0
      %1584 = vmatprep.subr.mxu0 0.0
      %1585 = vmatpush2.msra.mxu0 0.0
      %1586 = vmatprep.mubr.f32.mxu0 0.0
      %v1587 = vand.u32 %v1275, 4294901760
      %v1588 = vsub.f32 %v1275, %v1587
      %v1589 = vand.u32 %v1588, 4294901760
      %1590 = vmatmul.mubr.f32.gmra.mxu0 %v1589
      %v1591 = vpop.f32.mrf.mxu0
      %v1592 = vadd.f32 %v1516, %v1591
      %v1593 = vpop.f32.mrf.mxu0
      %v1594 = vadd.f32 %v1518, %v1593
      %1595 = vdwg.mxu0
      %1596 = vmatprep.subr.mxu0 0.0
      %1597 = vmatpush1.msra.mxu0 0.0
      %1598 = vmatprep.subr.mxu0 0.0
      %1599 = vmatpush1.msra.mxu0 0.0
      %1600 = vmatprep.subr.mxu0 0.0
      %1601 = vmatpush1.msra.mxu0 0.0
      %1602 = vmatprep.subr.mxu0 0.0
      %1603 = vmatpush1.msra.mxu0 0.0
      %1604 = vmatprep.subr.mxu0 0.0
      %1605 = vmatpush1.msra.mxu0 0.0
      %1606 = vmatprep.subr.mxu0 0.0
      %1607 = vmatpush1.msra.mxu0 0.0
      %1608 = vmatprep.subr.mxu0 0.0
      %1609 = vmatpush1.msra.mxu0 0.0
      %1610 = vmatprep.subr.mxu0 0.0
      %1611 = vmatpush1.msra.mxu0 0.0
      %1612 = vmatprep.subr.mxu0 0.0
      %1613 = vmatpush1.msra.mxu0 0.0
      %1614 = vmatprep.subr.mxu0 0.0
      %1615 = vmatpush1.msra.mxu0 0.0
      %1616 = vmatprep.subr.mxu0 0.0
      %1617 = vmatpush1.msra.mxu0 0.0
      %1618 = vmatprep.subr.mxu0 0.0
      %1619 = vmatpush1.msra.mxu0 0.0
      %1620 = vmatprep.subr.mxu0 0.0
      %1621 = vmatpush1.msra.mxu0 0.0
      %1622 = vmatprep.subr.mxu0 0.0
      %1623 = vmatpush1.msra.mxu0 0.0
      %1624 = vmatprep.subr.mxu0 0.0
      %1625 = vmatpush1.msra.mxu0 0.0
      %v1626 = vand.u32 %v1281, 4294901760
      %v1627 = vsub.f32 %v1281, %v1626
      %v1628 = vand.u32 %v1627, 4294901760
      %1629 = vmatprep.subr.mxu0 %v1628
      %v1630 = vand.u32 %v1278, 4294901760
      %v1631 = vsub.f32 %v1278, %v1630
      %v1632 = vand.u32 %v1631, 4294901760
      %1633 = vmatpush1.msra.mxu0 %v1632
      %1634 = vmatprep.subr.mxu0 0.0
      %1635 = vmatpush2.msra.mxu0 0.0
      %1636 = vmatprep.subr.mxu0 0.0
      %1637 = vmatpush2.msra.mxu0 0.0
      %1638 = vmatprep.subr.mxu0 0.0
      %1639 = vmatpush2.msra.mxu0 0.0
      %1640 = vmatprep.subr.mxu0 0.0
      %1641 = vmatpush2.msra.mxu0 0.0
      %1642 = vmatprep.subr.mxu0 0.0
      %1643 = vmatpush2.msra.mxu0 0.0
      %1644 = vmatprep.subr.mxu0 0.0
      %1645 = vmatpush2.msra.mxu0 0.0
      %1646 = vmatprep.subr.mxu0 0.0
      %1647 = vmatpush2.msra.mxu0 0.0
      %1648 = vmatprep.subr.mxu0 0.0
      %1649 = vmatpush2.msra.mxu0 0.0
      %1650 = vmatprep.subr.mxu0 0.0
      %1651 = vmatpush2.msra.mxu0 0.0
      %1652 = vmatprep.subr.mxu0 0.0
      %1653 = vmatpush2.msra.mxu0 0.0
      %1654 = vmatprep.subr.mxu0 0.0
      %1655 = vmatpush2.msra.mxu0 0.0
      %1656 = vmatprep.subr.mxu0 0.0
      %1657 = vmatpush2.msra.mxu0 0.0
      %1658 = vmatprep.subr.mxu0 0.0
      %1659 = vmatpush2.msra.mxu0 0.0
      %1660 = vmatprep.subr.mxu0 0.0
      %1661 = vmatpush2.msra.mxu0 0.0
      %1662 = vmatprep.subr.mxu0 0.0
      %1663 = vmatpush2.msra.mxu0 0.0
      %1664 = vmatprep.subr.mxu0 0.0
      %1665 = vmatpush2.msra.mxu0 0.0
      %1666 = vmatprep.mubr.f32.mxu0 0.0
      %v1667 = vand.u32 %v1275, 4294901760
      %1668 = vmatmul.mubr.f32.gmra.mxu0 %v1667
      %v1669 = vpop.f32.mrf.mxu0
      %v1670 = vadd.f32 %v1592, %v1669
      %v1671 = vpop.f32.mrf.mxu0
      %v1672 = vadd.f32 %v1594, %v1671
      %1673 = vdwg.mxu0
      %1674 = vmatprep.subr.mxu0 0.0
      %1675 = vmatpush1.msra.mxu0 0.0
      %1676 = vmatprep.subr.mxu0 0.0
      %1677 = vmatpush1.msra.mxu0 0.0
      %1678 = vmatprep.subr.mxu0 0.0
      %1679 = vmatpush1.msra.mxu0 0.0
      %1680 = vmatprep.subr.mxu0 0.0
      %1681 = vmatpush1.msra.mxu0 0.0
      %1682 = vmatprep.subr.mxu0 0.0
      %1683 = vmatpush1.msra.mxu0 0.0
      %1684 = vmatprep.subr.mxu0 0.0
      %1685 = vmatpush1.msra.mxu0 0.0
      %1686 = vmatprep.subr.mxu0 0.0
      %1687 = vmatpush1.msra.mxu0 0.0
      %1688 = vmatprep.subr.mxu0 0.0
      %1689 = vmatpush1.msra.mxu0 0.0
      %1690 = vmatprep.subr.mxu0 0.0
      %1691 = vmatpush1.msra.mxu0 0.0
      %1692 = vmatprep.subr.mxu0 0.0
      %1693 = vmatpush1.msra.mxu0 0.0
      %1694 = vmatprep.subr.mxu0 0.0
      %1695 = vmatpush1.msra.mxu0 0.0
      %1696 = vmatprep.subr.mxu0 0.0
      %1697 = vmatpush1.msra.mxu0 0.0
      %1698 = vmatprep.subr.mxu0 0.0
      %1699 = vmatpush1.msra.mxu0 0.0
      %1700 = vmatprep.subr.mxu0 0.0
      %1701 = vmatpush1.msra.mxu0 0.0
      %1702 = vmatprep.subr.mxu0 0.0
      %1703 = vmatpush1.msra.mxu0 0.0
      %v1704 = vand.u32 %v1281, 4294901760
      %1705 = vmatprep.subr.mxu0 %v1704
      %v1706 = vand.u32 %v1278, 4294901760
      %1707 = vmatpush1.msra.mxu0 %v1706
      %1708 = vmatprep.subr.mxu0 0.0
      %1709 = vmatpush2.msra.mxu0 0.0
      %1710 = vmatprep.subr.mxu0 0.0
      %1711 = vmatpush2.msra.mxu0 0.0
      %1712 = vmatprep.subr.mxu0 0.0
      %1713 = vmatpush2.msra.mxu0 0.0
      %1714 = vmatprep.subr.mxu0 0.0
      %1715 = vmatpush2.msra.mxu0 0.0
      %1716 = vmatprep.subr.mxu0 0.0
      %1717 = vmatpush2.msra.mxu0 0.0
      %1718 = vmatprep.subr.mxu0 0.0
      %1719 = vmatpush2.msra.mxu0 0.0
      %1720 = vmatprep.subr.mxu0 0.0
      %1721 = vmatpush2.msra.mxu0 0.0
      %1722 = vmatprep.subr.mxu0 0.0
      %1723 = vmatpush2.msra.mxu0 0.0
      %1724 = vmatprep.subr.mxu0 0.0
      %1725 = vmatpush2.msra.mxu0 0.0
      %1726 = vmatprep.subr.mxu0 0.0
      %1727 = vmatpush2.msra.mxu0 0.0
      %1728 = vmatprep.subr.mxu0 0.0
      %1729 = vmatpush2.msra.mxu0 0.0
      %1730 = vmatprep.subr.mxu0 0.0
      %1731 = vmatpush2.msra.mxu0 0.0
      %1732 = vmatprep.subr.mxu0 0.0
      %1733 = vmatpush2.msra.mxu0 0.0
      %1734 = vmatprep.subr.mxu0 0.0
      %1735 = vmatpush2.msra.mxu0 0.0
      %1736 = vmatprep.subr.mxu0 0.0
      %1737 = vmatpush2.msra.mxu0 0.0
      %1738 = vmatprep.subr.mxu0 0.0
      %1739 = vmatpush2.msra.mxu0 0.0
      %1740 = vmatprep.mubr.f32.mxu0 0.0
      %v1741 = vand.u32 %v1275, 4294901760
      %1742 = vmatmul.mubr.f32.gmra.mxu0 %v1741
      %v1743 = vpop.f32.mrf.mxu0
      %v1744 = vadd.f32 %v1670, %v1743
      %v1745 = vpop.f32.mrf.mxu0
      %v1746 = vadd.f32 %v1672, %v1745
      %1747 = vdwg.mxu0
      %v1748 = vsel %vm248, 1, 0
      %v1749 = vlaneseq
      %v1750 = vshrl.u32 %v1749, 7
      %v1751 = vsub.s32 0, %v1750
      %v1752 = vrot.slane %v1748, %v1751
      %v1753 = vlaneseq
      %v1754 = vshrl.u32 %v1753, 7
      %v1755 = vsub.s32 1, %v1754
      %v1756 = vrot.slane %v1748, %v1755
      %vm1757 = vcmp.ne.s32.totalorder %v1752, 0
      %vm1758 = vcmp.ne.s32.totalorder %v1756, 0
      %vm1759 = vmand %vm243, %vm1757
      %vm1760 = vmand %vm244, %vm1758
      %v1761 = vsel %vm1759, 1, 0
      %v1762 = vsel %vm1760, 1, 0
      %v1763 = vcvt.s32.f32 %v1761
      %v1764 = vcvt.s32.f32 %v1762
      %v1765 = vlaneseq
      %v1766 = vshrl.u32 %v1765, 7
      %v1767 = vsub.s32 0, %v1766
      %v1768 = vrot.slane %v1763, %v1767
      %v1769 = vlaneseq
      %v1770 = vshrl.u32 %v1769, 7
      %v1771 = vsub.s32 0, %v1770
      %v1772 = vrot.slane %v1764, %v1771
      %v1773 = vmul.f32 %v1744, %v1768
      %v1774 = vmul.f32 %v1746, %v1772
      %v1775 = vadd.f32 %v1260, %v1773
      %v1776 = vadd.f32 %v1261, %v1774
      %1777 = vrot.lane.b32.xlu0 %v234, 1
      %v1778 = vpop.permute.xlu0 %1777
      %1779 = vrot.lane.b32.xlu0 %v251, 1
      %v1780 = vpop.permute.xlu0 %1779
      %1781 = vrot.lane.b32.xlu0 %v235, 1
      %v1782 = vpop.permute.xlu0 %1781
      %vm1783 = vcmp.lt.s32.totalorder %v237, 1
      %v1784 = vsel %vm1783, %v1780, %v1782
      %v1785 = vsel %vm1783, %v1778, %v1780
      %v1786 = vld [vmem:[%s1] sm:$0x3]
      %1788 = vrot.lane.b32.xlu0 %v1786, 116
      %v1789 = vpop.permute.xlu0 %1788
      %v1790 = vsel %vm263, %v1789, 0
      %v1793 = vsel %vm267, %v1785, 0
      %v1796 = vsel %vm267, %v1784, 0
      %1798 = vmatprep.subr.mxu0 0.0
      %1799 = vmatpush1.msra.mxu0 0.0
      %1800 = vmatprep.subr.mxu0 0.0
      %1801 = vmatpush1.msra.mxu0 0.0
      %1802 = vmatprep.subr.mxu0 0.0
      %1803 = vmatpush1.msra.mxu0 0.0
      %1804 = vmatprep.subr.mxu0 0.0
      %1805 = vmatpush1.msra.mxu0 0.0
      %1806 = vmatprep.subr.mxu0 0.0
      %1807 = vmatpush1.msra.mxu0 0.0
      %1808 = vmatprep.subr.mxu0 0.0
      %1809 = vmatpush1.msra.mxu0 0.0
      %1810 = vmatprep.subr.mxu0 0.0
      %1811 = vmatpush1.msra.mxu0 0.0
      %1812 = vmatprep.subr.mxu0 0.0
      %1813 = vmatpush1.msra.mxu0 0.0
      %1814 = vmatprep.subr.mxu0 0.0
      %1815 = vmatpush1.msra.mxu0 0.0
      %1816 = vmatprep.subr.mxu0 0.0
      %1817 = vmatpush1.msra.mxu0 0.0
      %1818 = vmatprep.subr.mxu0 0.0
      %1819 = vmatpush1.msra.mxu0 0.0
      %1820 = vmatprep.subr.mxu0 0.0
      %1821 = vmatpush1.msra.mxu0 0.0
      %1822 = vmatprep.subr.mxu0 0.0
      %1823 = vmatpush1.msra.mxu0 0.0
      %1824 = vmatprep.subr.mxu0 0.0
      %1825 = vmatpush1.msra.mxu0 0.0
      %1826 = vmatprep.subr.mxu0 0.0
      %1827 = vmatpush1.msra.mxu0 0.0
      %v1828 = vand.u32 %v1796, 4294901760
      %1829 = vmatprep.subr.mxu0 %v1828
      %v1830 = vand.u32 %v1793, 4294901760
      %1831 = vmatpush1.msra.mxu0 %v1830
      %1832 = vmatprep.subr.mxu0 0.0
      %1833 = vmatpush2.msra.mxu0 0.0
      %1834 = vmatprep.subr.mxu0 0.0
      %1835 = vmatpush2.msra.mxu0 0.0
      %1836 = vmatprep.subr.mxu0 0.0
      %1837 = vmatpush2.msra.mxu0 0.0
      %1838 = vmatprep.subr.mxu0 0.0
      %1839 = vmatpush2.msra.mxu0 0.0
      %1840 = vmatprep.subr.mxu0 0.0
      %1841 = vmatpush2.msra.mxu0 0.0
      %1842 = vmatprep.subr.mxu0 0.0
      %1843 = vmatpush2.msra.mxu0 0.0
      %1844 = vmatprep.subr.mxu0 0.0
      %1845 = vmatpush2.msra.mxu0 0.0
      %1846 = vmatprep.subr.mxu0 0.0
      %1847 = vmatpush2.msra.mxu0 0.0
      %1848 = vmatprep.subr.mxu0 0.0
      %1849 = vmatpush2.msra.mxu0 0.0
      %1850 = vmatprep.subr.mxu0 0.0
      %1851 = vmatpush2.msra.mxu0 0.0
      %1852 = vmatprep.subr.mxu0 0.0
      %1853 = vmatpush2.msra.mxu0 0.0
      %1854 = vmatprep.subr.mxu0 0.0
      %1855 = vmatpush2.msra.mxu0 0.0
      %1856 = vmatprep.subr.mxu0 0.0
      %1857 = vmatpush2.msra.mxu0 0.0
      %1858 = vmatprep.subr.mxu0 0.0
      %1859 = vmatpush2.msra.mxu0 0.0
      %1860 = vmatprep.subr.mxu0 0.0
      %1861 = vmatpush2.msra.mxu0 0.0
      %1862 = vmatprep.subr.mxu0 0.0
      %1863 = vmatpush2.msra.mxu0 0.0
      %1864 = vmatprep.mubr.f32.mxu0 0.0
      %v1865 = vand.u32 %v1790, 4294901760
      %v1866 = vsub.f32 %v1790, %v1865
      %v1867 = vand.u32 %v1866, 4294901760
      %v1868 = vsub.f32 %v1866, %v1867
      %v1869 = vand.u32 %v1868, 4294901760
      %1870 = vmatmul.mubr.f32.gmra.mxu0 %v1869
      %v1871 = vpop.f32.mrf.mxu0
      %v1872 = vadd.f32 0.0, %v1871
      %v1873 = vpop.f32.mrf.mxu0
      %v1874 = vadd.f32 0.0, %v1873
      %1875 = vdwg.mxu0
      %1876 = vmatprep.subr.mxu0 0.0
      %1877 = vmatpush1.msra.mxu0 0.0
      %1878 = vmatprep.subr.mxu0 0.0
      %1879 = vmatpush1.msra.mxu0 0.0
      %1880 = vmatprep.subr.mxu0 0.0
      %1881 = vmatpush1.msra.mxu0 0.0
      %1882 = vmatprep.subr.mxu0 0.0
      %1883 = vmatpush1.msra.mxu0 0.0
      %1884 = vmatprep.subr.mxu0 0.0
      %1885 = vmatpush1.msra.mxu0 0.0
      %1886 = vmatprep.subr.mxu0 0.0
      %1887 = vmatpush1.msra.mxu0 0.0
      %1888 = vmatprep.subr.mxu0 0.0
      %1889 = vmatpush1.msra.mxu0 0.0
      %1890 = vmatprep.subr.mxu0 0.0
      %1891 = vmatpush1.msra.mxu0 0.0
      %1892 = vmatprep.subr.mxu0 0.0
      %1893 = vmatpush1.msra.mxu0 0.0
      %1894 = vmatprep.subr.mxu0 0.0
      %1895 = vmatpush1.msra.mxu0 0.0
      %1896 = vmatprep.subr.mxu0 0.0
      %1897 = vmatpush1.msra.mxu0 0.0
      %1898 = vmatprep.subr.mxu0 0.0
      %1899 = vmatpush1.msra.mxu0 0.0
      %1900 = vmatprep.subr.mxu0 0.0
      %1901 = vmatpush1.msra.mxu0 0.0
      %1902 = vmatprep.subr.mxu0 0.0
      %1903 = vmatpush1.msra.mxu0 0.0
      %1904 = vmatprep.subr.mxu0 0.0
      %1905 = vmatpush1.msra.mxu0 0.0
      %v1906 = vand.u32 %v1796, 4294901760
      %v1907 = vsub.f32 %v1796, %v1906
      %v1908 = vand.u32 %v1907, 4294901760
      %v1909 = vsub.f32 %v1907, %v1908
      %v1910 = vand.u32 %v1909, 4294901760
      %1911 = vmatprep.subr.mxu0 %v1910
      %v1912 = vand.u32 %v1793, 4294901760
      %v1913 = vsub.f32 %v1793, %v1912
      %v1914 = vand.u32 %v1913, 4294901760
      %v1915 = vsub.f32 %v1913, %v1914
      %v1916 = vand.u32 %v1915, 4294901760
      %1917 = vmatpush1.msra.mxu0 %v1916
      %1918 = vmatprep.subr.mxu0 0.0
      %1919 = vmatpush2.msra.mxu0 0.0
      %1920 = vmatprep.subr.mxu0 0.0
      %1921 = vmatpush2.msra.mxu0 0.0
      %1922 = vmatprep.subr.mxu0 0.0
      %1923 = vmatpush2.msra.mxu0 0.0
      %1924 = vmatprep.subr.mxu0 0.0
      %1925 = vmatpush2.msra.mxu0 0.0
      %1926 = vmatprep.subr.mxu0 0.0
      %1927 = vmatpush2.msra.mxu0 0.0
      %1928 = vmatprep.subr.mxu0 0.0
      %1929 = vmatpush2.msra.mxu0 0.0
      %1930 = vmatprep.subr.mxu0 0.0
      %1931 = vmatpush2.msra.mxu0 0.0
      %1932 = vmatprep.subr.mxu0 0.0
      %1933 = vmatpush2.msra.mxu0 0.0
      %1934 = vmatprep.subr.mxu0 0.0
      %1935 = vmatpush2.msra.mxu0 0.0
      %1936 = vmatprep.subr.mxu0 0.0
      %1937 = vmatpush2.msra.mxu0 0.0
      %1938 = vmatprep.subr.mxu0 0.0
      %1939 = vmatpush2.msra.mxu0 0.0
      %1940 = vmatprep.subr.mxu0 0.0
      %1941 = vmatpush2.msra.mxu0 0.0
      %1942 = vmatprep.subr.mxu0 0.0
      %1943 = vmatpush2.msra.mxu0 0.0
      %1944 = vmatprep.subr.mxu0 0.0
      %1945 = vmatpush2.msra.mxu0 0.0
      %1946 = vmatprep.subr.mxu0 0.0
      %1947 = vmatpush2.msra.mxu0 0.0
      %1948 = vmatprep.subr.mxu0 0.0
      %1949 = vmatpush2.msra.mxu0 0.0
      %1950 = vmatprep.mubr.f32.mxu0 0.0
      %v1951 = vand.u32 %v1790, 4294901760
      %1952 = vmatmul.mubr.f32.gmra.mxu0 %v1951
      %v1953 = vpop.f32.mrf.mxu0
      %v1954 = vadd.f32 %v1872, %v1953
      %v1955 = vpop.f32.mrf.mxu0
      %v1956 = vadd.f32 %v1874, %v1955
      %1957 = vdwg.mxu0
      %1958 = vmatprep.subr.mxu0 0.0
      %1959 = vmatpush1.msra.mxu0 0.0
      %1960 = vmatprep.subr.mxu0 0.0
      %1961 = vmatpush1.msra.mxu0 0.0
      %1962 = vmatprep.subr.mxu0 0.0
      %1963 = vmatpush1.msra.mxu0 0.0
      %1964 = vmatprep.subr.mxu0 0.0
      %1965 = vmatpush1.msra.mxu0 0.0
      %1966 = vmatprep.subr.mxu0 0.0
      %1967 = vmatpush1.msra.mxu0 0.0
      %1968 = vmatprep.subr.mxu0 0.0
      %1969 = vmatpush1.msra.mxu0 0.0
      %1970 = vmatprep.subr.mxu0 0.0
      %1971 = vmatpush1.msra.mxu0 0.0
      %1972 = vmatprep.subr.mxu0 0.0
      %1973 = vmatpush1.msra.mxu0 0.0
      %1974 = vmatprep.subr.mxu0 0.0
      %1975 = vmatpush1.msra.mxu0 0.0
      %1976 = vmatprep.subr.mxu0 0.0
      %1977 = vmatpush1.msra.mxu0 0.0
      %1978 = vmatprep.subr.mxu0 0.0
      %1979 = vmatpush1.msra.mxu0 0.0
      %1980 = vmatprep.subr.mxu0 0.0
      %1981 = vmatpush1.msra.mxu0 0.0
      %1982 = vmatprep.subr.mxu0 0.0
      %1983 = vmatpush1.msra.mxu0 0.0
      %1984 = vmatprep.subr.mxu0 0.0
      %1985 = vmatpush1.msra.mxu0 0.0
      %1986 = vmatprep.subr.mxu0 0.0
      %1987 = vmatpush1.msra.mxu0 0.0
      %v1988 = vand.u32 %v1796, 4294901760
      %v1989 = vsub.f32 %v1796, %v1988
      %1990 = vmatprep.subr.mxu0 %v1989
      %v1991 = vand.u32 %v1793, 4294901760
      %v1992 = vsub.f32 %v1793, %v1991
      %1993 = vmatpush1.msra.mxu0 %v1992
      %1994 = vmatprep.subr.mxu0 0.0
      %1995 = vmatpush2.msra.mxu0 0.0
      %1996 = vmatprep.subr.mxu0 0.0
      %1997 = vmatpush2.msra.mxu0 0.0
      %1998 = vmatprep.subr.mxu0 0.0
      %1999 = vmatpush2.msra.mxu0 0.0
      %2000 = vmatprep.subr.mxu0 0.0
      %2001 = vmatpush2.msra.mxu0 0.0
      %2002 = vmatprep.subr.mxu0 0.0
      %2003 = vmatpush2.msra.mxu0 0.0
      %2004 = vmatprep.subr.mxu0 0.0
      %2005 = vmatpush2.msra.mxu0 0.0
      %2006 = vmatprep.subr.mxu0 0.0
      %2007 = vmatpush2.msra.mxu0 0.0
      %2008 = vmatprep.subr.mxu0 0.0
      %2009 = vmatpush2.msra.mxu0 0.0
      %2010 = vmatprep.subr.mxu0 0.0
      %2011 = vmatpush2.msra.mxu0 0.0
      %2012 = vmatprep.subr.mxu0 0.0
      %2013 = vmatpush2.msra.mxu0 0.0
      %2014 = vmatprep.subr.mxu0 0.0
      %2015 = vmatpush2.msra.mxu0 0.0
      %2016 = vmatprep.subr.mxu0 0.0
      %2017 = vmatpush2.msra.mxu0 0.0
      %2018 = vmatprep.subr.mxu0 0.0
      %2019 = vmatpush2.msra.mxu0 0.0
      %2020 = vmatprep.subr.mxu0 0.0
      %2021 = vmatpush2.msra.mxu0 0.0
      %2022 = vmatprep.subr.mxu0 0.0
      %2023 = vmatpush2.msra.mxu0 0.0
      %2024 = vmatprep.subr.mxu0 0.0
      %2025 = vmatpush2.msra.mxu0 0.0
      %2026 = vmatprep.mubr.f32.mxu0 0.0
      %v2027 = vand.u32 %v1790, 4294901760
      %v2028 = vsub.f32 %v1790, %v2027
      %2029 = vmatmul.mubr.f32.gmra.mxu0 %v2028
      %v2030 = vpop.f32.mrf.mxu0
      %v2031 = vadd.f32 %v1954, %v2030
      %v2032 = vpop.f32.mrf.mxu0
      %v2033 = vadd.f32 %v1956, %v2032
      %2034 = vdwg.mxu0
      %2035 = vmatprep.subr.mxu0 0.0
      %2036 = vmatpush1.msra.mxu0 0.0
      %2037 = vmatprep.subr.mxu0 0.0
      %2038 = vmatpush1.msra.mxu0 0.0
      %2039 = vmatprep.subr.mxu0 0.0
      %2040 = vmatpush1.msra.mxu0 0.0
      %2041 = vmatprep.subr.mxu0 0.0
      %2042 = vmatpush1.msra.mxu0 0.0
      %2043 = vmatprep.subr.mxu0 0.0
      %2044 = vmatpush1.msra.mxu0 0.0
      %2045 = vmatprep.subr.mxu0 0.0
      %2046 = vmatpush1.msra.mxu0 0.0
      %2047 = vmatprep.subr.mxu0 0.0
      %2048 = vmatpush1.msra.mxu0 0.0
      %2049 = vmatprep.subr.mxu0 0.0
      %2050 = vmatpush1.msra.mxu0 0.0
      %2051 = vmatprep.subr.mxu0 0.0
      %2052 = vmatpush1.msra.mxu0 0.0
      %2053 = vmatprep.subr.mxu0 0.0
      %2054 = vmatpush1.msra.mxu0 0.0
      %2055 = vmatprep.subr.mxu0 0.0
      %2056 = vmatpush1.msra.mxu0 0.0
      %2057 = vmatprep.subr.mxu0 0.0
      %2058 = vmatpush1.msra.mxu0 0.0
      %2059 = vmatprep.subr.mxu0 0.0
      %2060 = vmatpush1.msra.mxu0 0.0
      %2061 = vmatprep.subr.mxu0 0.0
      %2062 = vmatpush1.msra.mxu0 0.0
      %2063 = vmatprep.subr.mxu0 0.0
      %2064 = vmatpush1.msra.mxu0 0.0
      %v2065 = vand.u32 %v1796, 4294901760
      %2066 = vmatprep.subr.mxu0 %v2065
      %v2067 = vand.u32 %v1793, 4294901760
      %2068 = vmatpush1.msra.mxu0 %v2067
      %2069 = vmatprep.subr.mxu0 0.0
      %2070 = vmatpush2.msra.mxu0 0.0
      %2071 = vmatprep.subr.mxu0 0.0
      %2072 = vmatpush2.msra.mxu0 0.0
      %2073 = vmatprep.subr.mxu0 0.0
      %2074 = vmatpush2.msra.mxu0 0.0
      %2075 = vmatprep.subr.mxu0 0.0
      %2076 = vmatpush2.msra.mxu0 0.0
      %2077 = vmatprep.subr.mxu0 0.0
      %2078 = vmatpush2.msra.mxu0 0.0
      %2079 = vmatprep.subr.mxu0 0.0
      %2080 = vmatpush2.msra.mxu0 0.0
      %2081 = vmatprep.subr.mxu0 0.0
      %2082 = vmatpush2.msra.mxu0 0.0
      %2083 = vmatprep.subr.mxu0 0.0
      %2084 = vmatpush2.msra.mxu0 0.0
      %2085 = vmatprep.subr.mxu0 0.0
      %2086 = vmatpush2.msra.mxu0 0.0
      %2087 = vmatprep.subr.mxu0 0.0
      %2088 = vmatpush2.msra.mxu0 0.0
      %2089 = vmatprep.subr.mxu0 0.0
      %2090 = vmatpush2.msra.mxu0 0.0
      %2091 = vmatprep.subr.mxu0 0.0
      %2092 = vmatpush2.msra.mxu0 0.0
      %2093 = vmatprep.subr.mxu0 0.0
      %2094 = vmatpush2.msra.mxu0 0.0
      %2095 = vmatprep.subr.mxu0 0.0
      %2096 = vmatpush2.msra.mxu0 0.0
      %2097 = vmatprep.subr.mxu0 0.0
      %2098 = vmatpush2.msra.mxu0 0.0
      %2099 = vmatprep.subr.mxu0 0.0
      %2100 = vmatpush2.msra.mxu0 0.0
      %2101 = vmatprep.mubr.f32.mxu0 0.0
      %v2102 = vand.u32 %v1790, 4294901760
      %v2103 = vsub.f32 %v1790, %v2102
      %v2104 = vand.u32 %v2103, 4294901760
      %2105 = vmatmul.mubr.f32.gmra.mxu0 %v2104
      %v2106 = vpop.f32.mrf.mxu0
      %v2107 = vadd.f32 %v2031, %v2106
      %v2108 = vpop.f32.mrf.mxu0
      %v2109 = vadd.f32 %v2033, %v2108
      %2110 = vdwg.mxu0
      %2111 = vmatprep.subr.mxu0 0.0
      %2112 = vmatpush1.msra.mxu0 0.0
      %2113 = vmatprep.subr.mxu0 0.0
      %2114 = vmatpush1.msra.mxu0 0.0
      %2115 = vmatprep.subr.mxu0 0.0
      %2116 = vmatpush1.msra.mxu0 0.0
      %2117 = vmatprep.subr.mxu0 0.0
      %2118 = vmatpush1.msra.mxu0 0.0
      %2119 = vmatprep.subr.mxu0 0.0
      %2120 = vmatpush1.msra.mxu0 0.0
      %2121 = vmatprep.subr.mxu0 0.0
      %2122 = vmatpush1.msra.mxu0 0.0
      %2123 = vmatprep.subr.mxu0 0.0
      %2124 = vmatpush1.msra.mxu0 0.0
      %2125 = vmatprep.subr.mxu0 0.0
      %2126 = vmatpush1.msra.mxu0 0.0
      %2127 = vmatprep.subr.mxu0 0.0
      %2128 = vmatpush1.msra.mxu0 0.0
      %2129 = vmatprep.subr.mxu0 0.0
      %2130 = vmatpush1.msra.mxu0 0.0
      %2131 = vmatprep.subr.mxu0 0.0
      %2132 = vmatpush1.msra.mxu0 0.0
      %2133 = vmatprep.subr.mxu0 0.0
      %2134 = vmatpush1.msra.mxu0 0.0
      %2135 = vmatprep.subr.mxu0 0.0
      %2136 = vmatpush1.msra.mxu0 0.0
      %2137 = vmatprep.subr.mxu0 0.0
      %2138 = vmatpush1.msra.mxu0 0.0
      %2139 = vmatprep.subr.mxu0 0.0
      %2140 = vmatpush1.msra.mxu0 0.0
      %v2141 = vand.u32 %v1796, 4294901760
      %v2142 = vsub.f32 %v1796, %v2141
      %v2143 = vand.u32 %v2142, 4294901760
      %2144 = vmatprep.subr.mxu0 %v2143
      %v2145 = vand.u32 %v1793, 4294901760
      %v2146 = vsub.f32 %v1793, %v2145
      %v2147 = vand.u32 %v2146, 4294901760
      %2148 = vmatpush1.msra.mxu0 %v2147
      %2149 = vmatprep.subr.mxu0 0.0
      %2150 = vmatpush2.msra.mxu0 0.0
      %2151 = vmatprep.subr.mxu0 0.0
      %2152 = vmatpush2.msra.mxu0 0.0
      %2153 = vmatprep.subr.mxu0 0.0
      %2154 = vmatpush2.msra.mxu0 0.0
      %2155 = vmatprep.subr.mxu0 0.0
      %2156 = vmatpush2.msra.mxu0 0.0
      %2157 = vmatprep.subr.mxu0 0.0
      %2158 = vmatpush2.msra.mxu0 0.0
      %2159 = vmatprep.subr.mxu0 0.0
      %2160 = vmatpush2.msra.mxu0 0.0
      %2161 = vmatprep.subr.mxu0 0.0
      %2162 = vmatpush2.msra.mxu0 0.0
      %2163 = vmatprep.subr.mxu0 0.0
      %2164 = vmatpush2.msra.mxu0 0.0
      %2165 = vmatprep.subr.mxu0 0.0
      %2166 = vmatpush2.msra.mxu0 0.0
      %2167 = vmatprep.subr.mxu0 0.0
      %2168 = vmatpush2.msra.mxu0 0.0
      %2169 = vmatprep.subr.mxu0 0.0
      %2170 = vmatpush2.msra.mxu0 0.0
      %2171 = vmatprep.subr.mxu0 0.0
      %2172 = vmatpush2.msra.mxu0 0.0
      %2173 = vmatprep.subr.mxu0 0.0
      %2174 = vmatpush2.msra.mxu0 0.0
      %2175 = vmatprep.subr.mxu0 0.0
      %2176 = vmatpush2.msra.mxu0 0.0
      %2177 = vmatprep.subr.mxu0 0.0
      %2178 = vmatpush2.msra.mxu0 0.0
      %2179 = vmatprep.subr.mxu0 0.0
      %2180 = vmatpush2.msra.mxu0 0.0
      %2181 = vmatprep.mubr.f32.mxu0 0.0
      %v2182 = vand.u32 %v1790, 4294901760
      %2183 = vmatmul.mubr.f32.gmra.mxu0 %v2182
      %v2184 = vpop.f32.mrf.mxu0
      %v2185 = vadd.f32 %v2107, %v2184
      %v2186 = vpop.f32.mrf.mxu0
      %v2187 = vadd.f32 %v2109, %v2186
      %2188 = vdwg.mxu0
      %2189 = vmatprep.subr.mxu0 0.0
      %2190 = vmatpush1.msra.mxu0 0.0
      %2191 = vmatprep.subr.mxu0 0.0
      %2192 = vmatpush1.msra.mxu0 0.0
      %2193 = vmatprep.subr.mxu0 0.0
      %2194 = vmatpush1.msra.mxu0 0.0
      %2195 = vmatprep.subr.mxu0 0.0
      %2196 = vmatpush1.msra.mxu0 0.0
      %2197 = vmatprep.subr.mxu0 0.0
      %2198 = vmatpush1.msra.mxu0 0.0
      %2199 = vmatprep.subr.mxu0 0.0
      %2200 = vmatpush1.msra.mxu0 0.0
      %2201 = vmatprep.subr.mxu0 0.0
      %2202 = vmatpush1.msra.mxu0 0.0
      %2203 = vmatprep.subr.mxu0 0.0
      %2204 = vmatpush1.msra.mxu0 0.0
      %2205 = vmatprep.subr.mxu0 0.0
      %2206 = vmatpush1.msra.mxu0 0.0
      %2207 = vmatprep.subr.mxu0 0.0
      %2208 = vmatpush1.msra.mxu0 0.0
      %2209 = vmatprep.subr.mxu0 0.0
      %2210 = vmatpush1.msra.mxu0 0.0
      %2211 = vmatprep.subr.mxu0 0.0
      %2212 = vmatpush1.msra.mxu0 0.0
      %2213 = vmatprep.subr.mxu0 0.0
      %2214 = vmatpush1.msra.mxu0 0.0
      %2215 = vmatprep.subr.mxu0 0.0
      %2216 = vmatpush1.msra.mxu0 0.0
      %2217 = vmatprep.subr.mxu0 0.0
      %2218 = vmatpush1.msra.mxu0 0.0
      %v2219 = vand.u32 %v1796, 4294901760
      %2220 = vmatprep.subr.mxu0 %v2219
      %v2221 = vand.u32 %v1793, 4294901760
      %2222 = vmatpush1.msra.mxu0 %v2221
      %2223 = vmatprep.subr.mxu0 0.0
      %2224 = vmatpush2.msra.mxu0 0.0
      %2225 = vmatprep.subr.mxu0 0.0
      %2226 = vmatpush2.msra.mxu0 0.0
      %2227 = vmatprep.subr.mxu0 0.0
      %2228 = vmatpush2.msra.mxu0 0.0
      %2229 = vmatprep.subr.mxu0 0.0
      %2230 = vmatpush2.msra.mxu0 0.0
      %2231 = vmatprep.subr.mxu0 0.0
      %2232 = vmatpush2.msra.mxu0 0.0
      %2233 = vmatprep.subr.mxu0 0.0
      %2234 = vmatpush2.msra.mxu0 0.0
      %2235 = vmatprep.subr.mxu0 0.0
      %2236 = vmatpush2.msra.mxu0 0.0
      %2237 = vmatprep.subr.mxu0 0.0
      %2238 = vmatpush2.msra.mxu0 0.0
      %2239 = vmatprep.subr.mxu0 0.0
      %2240 = vmatpush2.msra.mxu0 0.0
      %2241 = vmatprep.subr.mxu0 0.0
      %2242 = vmatpush2.msra.mxu0 0.0
      %2243 = vmatprep.subr.mxu0 0.0
      %2244 = vmatpush2.msra.mxu0 0.0
      %2245 = vmatprep.subr.mxu0 0.0
      %2246 = vmatpush2.msra.mxu0 0.0
      %2247 = vmatprep.subr.mxu0 0.0
      %2248 = vmatpush2.msra.mxu0 0.0
      %2249 = vmatprep.subr.mxu0 0.0
      %2250 = vmatpush2.msra.mxu0 0.0
      %2251 = vmatprep.subr.mxu0 0.0
      %2252 = vmatpush2.msra.mxu0 0.0
      %2253 = vmatprep.subr.mxu0 0.0
      %2254 = vmatpush2.msra.mxu0 0.0
      %2255 = vmatprep.mubr.f32.mxu0 0.0
      %v2256 = vand.u32 %v1790, 4294901760
      %2257 = vmatmul.mubr.f32.gmra.mxu0 %v2256
      %v2258 = vpop.f32.mrf.mxu0
      %v2259 = vadd.f32 %v2185, %v2258
      %v2260 = vpop.f32.mrf.mxu0
      %v2261 = vadd.f32 %v2187, %v2260
      %2262 = vdwg.mxu0
      %v2263 = vcvt.s32.f32 %v739
      %v2265 = vlaneseq
      %v2266 = vshrl.u32 %v2265, 7
      %v2267 = vsub.s32 0, %v2266
      %v2268 = vrot.slane %v2263, %v2267
      %v2269 = vlaneseq
      %v2270 = vshrl.u32 %v2269, 7
      %v2271 = vsub.s32 1, %v2270
      %v2272 = vrot.slane %v2263, %v2271
      %v2275 = vmul.f32 %v2259, %v2268
      %v2276 = vmul.f32 %v2261, %v2272
      %v2277 = vadd.f32 %v1775, %v2275
      %v2278 = vadd.f32 %v1776, %v2276
      %2279 = vrot.lane.b32.xlu0 %v1786, 112
      %v2280 = vpop.permute.xlu0 %2279
      %v2281 = vsel %vm263, %v2280, 0
      %v2283 = vsel %vm267, %v251, 0
      %v2285 = vsel %vm267, %v235, 0
      %2287 = vmatprep.subr.mxu0 0.0
      %2288 = vmatpush1.msra.mxu0 0.0
      %2289 = vmatprep.subr.mxu0 0.0
      %2290 = vmatpush1.msra.mxu0 0.0
      %2291 = vmatprep.subr.mxu0 0.0
      %2292 = vmatpush1.msra.mxu0 0.0
      %2293 = vmatprep.subr.mxu0 0.0
      %2294 = vmatpush1.msra.mxu0 0.0
      %2295 = vmatprep.subr.mxu0 0.0
      %2296 = vmatpush1.msra.mxu0 0.0
      %2297 = vmatprep.subr.mxu0 0.0
      %2298 = vmatpush1.msra.mxu0 0.0
      %2299 = vmatprep.subr.mxu0 0.0
      %2300 = vmatpush1.msra.mxu0 0.0
      %2301 = vmatprep.subr.mxu0 0.0
      %2302 = vmatpush1.msra.mxu0 0.0
      %2303 = vmatprep.subr.mxu0 0.0
      %2304 = vmatpush1.msra.mxu0 0.0
      %2305 = vmatprep.subr.mxu0 0.0
      %2306 = vmatpush1.msra.mxu0 0.0
      %2307 = vmatprep.subr.mxu0 0.0
      %2308 = vmatpush1.msra.mxu0 0.0
      %2309 = vmatprep.subr.mxu0 0.0
      %2310 = vmatpush1.msra.mxu0 0.0
      %2311 = vmatprep.subr.mxu0 0.0
      %2312 = vmatpush1.msra.mxu0 0.0
      %2313 = vmatprep.subr.mxu0 0.0
      %2314 = vmatpush1.msra.mxu0 0.0
      %2315 = vmatprep.subr.mxu0 0.0
      %2316 = vmatpush1.msra.mxu0 0.0
      %v2317 = vand.u32 %v2285, 4294901760
      %2318 = vmatprep.subr.mxu0 %v2317
      %v2319 = vand.u32 %v2283, 4294901760
      %2320 = vmatpush1.msra.mxu0 %v2319
      %2321 = vmatprep.subr.mxu0 0.0
      %2322 = vmatpush2.msra.mxu0 0.0
      %2323 = vmatprep.subr.mxu0 0.0
      %2324 = vmatpush2.msra.mxu0 0.0
      %2325 = vmatprep.subr.mxu0 0.0
      %2326 = vmatpush2.msra.mxu0 0.0
      %2327 = vmatprep.subr.mxu0 0.0
      %2328 = vmatpush2.msra.mxu0 0.0
      %2329 = vmatprep.subr.mxu0 0.0
      %2330 = vmatpush2.msra.mxu0 0.0
      %2331 = vmatprep.subr.mxu0 0.0
      %2332 = vmatpush2.msra.mxu0 0.0
      %2333 = vmatprep.subr.mxu0 0.0
      %2334 = vmatpush2.msra.mxu0 0.0
      %2335 = vmatprep.subr.mxu0 0.0
      %2336 = vmatpush2.msra.mxu0 0.0
      %2337 = vmatprep.subr.mxu0 0.0
      %2338 = vmatpush2.msra.mxu0 0.0
      %2339 = vmatprep.subr.mxu0 0.0
      %2340 = vmatpush2.msra.mxu0 0.0
      %2341 = vmatprep.subr.mxu0 0.0
      %2342 = vmatpush2.msra.mxu0 0.0
      %2343 = vmatprep.subr.mxu0 0.0
      %2344 = vmatpush2.msra.mxu0 0.0
      %2345 = vmatprep.subr.mxu0 0.0
      %2346 = vmatpush2.msra.mxu0 0.0
      %2347 = vmatprep.subr.mxu0 0.0
      %2348 = vmatpush2.msra.mxu0 0.0
      %2349 = vmatprep.subr.mxu0 0.0
      %2350 = vmatpush2.msra.mxu0 0.0
      %2351 = vmatprep.subr.mxu0 0.0
      %2352 = vmatpush2.msra.mxu0 0.0
      %2353 = vmatprep.mubr.f32.mxu0 0.0
      %v2354 = vand.u32 %v2281, 4294901760
      %v2355 = vsub.f32 %v2281, %v2354
      %v2356 = vand.u32 %v2355, 4294901760
      %v2357 = vsub.f32 %v2355, %v2356
      %v2358 = vand.u32 %v2357, 4294901760
      %2359 = vmatmul.mubr.f32.gmra.mxu0 %v2358
      %v2360 = vpop.f32.mrf.mxu0
      %v2361 = vadd.f32 0.0, %v2360
      %v2362 = vpop.f32.mrf.mxu0
      %v2363 = vadd.f32 0.0, %v2362
      %2364 = vdwg.mxu0
      %2365 = vmatprep.subr.mxu0 0.0
      %2366 = vmatpush1.msra.mxu0 0.0
      %2367 = vmatprep.subr.mxu0 0.0
      %2368 = vmatpush1.msra.mxu0 0.0
      %2369 = vmatprep.subr.mxu0 0.0
      %2370 = vmatpush1.msra.mxu0 0.0
      %2371 = vmatprep.subr.mxu0 0.0
      %2372 = vmatpush1.msra.mxu0 0.0
      %2373 = vmatprep.subr.mxu0 0.0
      %2374 = vmatpush1.msra.mxu0 0.0
      %2375 = vmatprep.subr.mxu0 0.0
      %2376 = vmatpush1.msra.mxu0 0.0
      %2377 = vmatprep.subr.mxu0 0.0
      %2378 = vmatpush1.msra.mxu0 0.0
      %2379 = vmatprep.subr.mxu0 0.0
      %2380 = vmatpush1.msra.mxu0 0.0
      %2381 = vmatprep.subr.mxu0 0.0
      %2382 = vmatpush1.msra.mxu0 0.0
      %2383 = vmatprep.subr.mxu0 0.0
      %2384 = vmatpush1.msra.mxu0 0.0
      %2385 = vmatprep.subr.mxu0 0.0
      %2386 = vmatpush1.msra.mxu0 0.0
      %2387 = vmatprep.subr.mxu0 0.0
      %2388 = vmatpush1.msra.mxu0 0.0
      %2389 = vmatprep.subr.mxu0 0.0
      %2390 = vmatpush1.msra.mxu0 0.0
      %2391 = vmatprep.subr.mxu0 0.0
      %2392 = vmatpush1.msra.mxu0 0.0
      %2393 = vmatprep.subr.mxu0 0.0
      %2394 = vmatpush1.msra.mxu0 0.0
      %v2395 = vand.u32 %v2285, 4294901760
      %v2396 = vsub.f32 %v2285, %v2395
      %v2397 = vand.u32 %v2396, 4294901760
      %v2398 = vsub.f32 %v2396, %v2397
      %v2399 = vand.u32 %v2398, 4294901760
      %2400 = vmatprep.subr.mxu0 %v2399
      %v2401 = vand.u32 %v2283, 4294901760
      %v2402 = vsub.f32 %v2283, %v2401
      %v2403 = vand.u32 %v2402, 4294901760
      %v2404 = vsub.f32 %v2402, %v2403
      %v2405 = vand.u32 %v2404, 4294901760
      %2406 = vmatpush1.msra.mxu0 %v2405
      %2407 = vmatprep.subr.mxu0 0.0
      %2408 = vmatpush2.msra.mxu0 0.0
      %2409 = vmatprep.subr.mxu0 0.0
      %2410 = vmatpush2.msra.mxu0 0.0
      %2411 = vmatprep.subr.mxu0 0.0
      %2412 = vmatpush2.msra.mxu0 0.0
      %2413 = vmatprep.subr.mxu0 0.0
      %2414 = vmatpush2.msra.mxu0 0.0
      %2415 = vmatprep.subr.mxu0 0.0
      %2416 = vmatpush2.msra.mxu0 0.0
      %2417 = vmatprep.subr.mxu0 0.0
      %2418 = vmatpush2.msra.mxu0 0.0
      %2419 = vmatprep.subr.mxu0 0.0
      %2420 = vmatpush2.msra.mxu0 0.0
      %2421 = vmatprep.subr.mxu0 0.0
      %2422 = vmatpush2.msra.mxu0 0.0
      %2423 = vmatprep.subr.mxu0 0.0
      %2424 = vmatpush2.msra.mxu0 0.0
      %2425 = vmatprep.subr.mxu0 0.0
      %2426 = vmatpush2.msra.mxu0 0.0
      %2427 = vmatprep.subr.mxu0 0.0
      %2428 = vmatpush2.msra.mxu0 0.0
      %2429 = vmatprep.subr.mxu0 0.0
      %2430 = vmatpush2.msra.mxu0 0.0
      %2431 = vmatprep.subr.mxu0 0.0
      %2432 = vmatpush2.msra.mxu0 0.0
      %2433 = vmatprep.subr.mxu0 0.0
      %2434 = vmatpush2.msra.mxu0 0.0
      %2435 = vmatprep.subr.mxu0 0.0
      %2436 = vmatpush2.msra.mxu0 0.0
      %2437 = vmatprep.subr.mxu0 0.0
      %2438 = vmatpush2.msra.mxu0 0.0
      %2439 = vmatprep.mubr.f32.mxu0 0.0
      %v2440 = vand.u32 %v2281, 4294901760
      %2441 = vmatmul.mubr.f32.gmra.mxu0 %v2440
      %v2442 = vpop.f32.mrf.mxu0
      %v2443 = vadd.f32 %v2361, %v2442
      %v2444 = vpop.f32.mrf.mxu0
      %v2445 = vadd.f32 %v2363, %v2444
      %2446 = vdwg.mxu0
      %2447 = vmatprep.subr.mxu0 0.0
      %2448 = vmatpush1.msra.mxu0 0.0
      %2449 = vmatprep.subr.mxu0 0.0
      %2450 = vmatpush1.msra.mxu0 0.0
      %2451 = vmatprep.subr.mxu0 0.0
      %2452 = vmatpush1.msra.mxu0 0.0
      %2453 = vmatprep.subr.mxu0 0.0
      %2454 = vmatpush1.msra.mxu0 0.0
      %2455 = vmatprep.subr.mxu0 0.0
      %2456 = vmatpush1.msra.mxu0 0.0
      %2457 = vmatprep.subr.mxu0 0.0
      %2458 = vmatpush1.msra.mxu0 0.0
      %2459 = vmatprep.subr.mxu0 0.0
      %2460 = vmatpush1.msra.mxu0 0.0
      %2461 = vmatprep.subr.mxu0 0.0
      %2462 = vmatpush1.msra.mxu0 0.0
      %2463 = vmatprep.subr.mxu0 0.0
      %2464 = vmatpush1.msra.mxu0 0.0
      %2465 = vmatprep.subr.mxu0 0.0
      %2466 = vmatpush1.msra.mxu0 0.0
      %2467 = vmatprep.subr.mxu0 0.0
      %2468 = vmatpush1.msra.mxu0 0.0
      %2469 = vmatprep.subr.mxu0 0.0
      %2470 = vmatpush1.msra.mxu0 0.0
      %2471 = vmatprep.subr.mxu0 0.0
      %2472 = vmatpush1.msra.mxu0 0.0
      %2473 = vmatprep.subr.mxu0 0.0
      %2474 = vmatpush1.msra.mxu0 0.0
      %2475 = vmatprep.subr.mxu0 0.0
      %2476 = vmatpush1.msra.mxu0 0.0
      %v2477 = vand.u32 %v2285, 4294901760
      %v2478 = vsub.f32 %v2285, %v2477
      %2479 = vmatprep.subr.mxu0 %v2478
      %v2480 = vand.u32 %v2283, 4294901760
      %v2481 = vsub.f32 %v2283, %v2480
      %2482 = vmatpush1.msra.mxu0 %v2481
      %2483 = vmatprep.subr.mxu0 0.0
      %2484 = vmatpush2.msra.mxu0 0.0
      %2485 = vmatprep.subr.mxu0 0.0
      %2486 = vmatpush2.msra.mxu0 0.0
      %2487 = vmatprep.subr.mxu0 0.0
      %2488 = vmatpush2.msra.mxu0 0.0
      %2489 = vmatprep.subr.mxu0 0.0
      %2490 = vmatpush2.msra.mxu0 0.0
      %2491 = vmatprep.subr.mxu0 0.0
      %2492 = vmatpush2.msra.mxu0 0.0
      %2493 = vmatprep.subr.mxu0 0.0
      %2494 = vmatpush2.msra.mxu0 0.0
      %2495 = vmatprep.subr.mxu0 0.0
      %2496 = vmatpush2.msra.mxu0 0.0
      %2497 = vmatprep.subr.mxu0 0.0
      %2498 = vmatpush2.msra.mxu0 0.0
      %2499 = vmatprep.subr.mxu0 0.0
      %2500 = vmatpush2.msra.mxu0 0.0
      %2501 = vmatprep.subr.mxu0 0.0
      %2502 = vmatpush2.msra.mxu0 0.0
      %2503 = vmatprep.subr.mxu0 0.0
      %2504 = vmatpush2.msra.mxu0 0.0
      %2505 = vmatprep.subr.mxu0 0.0
      %2506 = vmatpush2.msra.mxu0 0.0
      %2507 = vmatprep.subr.mxu0 0.0
      %2508 = vmatpush2.msra.mxu0 0.0
      %2509 = vmatprep.subr.mxu0 0.0
      %2510 = vmatpush2.msra.mxu0 0.0
      %2511 = vmatprep.subr.mxu0 0.0
      %2512 = vmatpush2.msra.mxu0 0.0
      %2513 = vmatprep.subr.mxu0 0.0
      %2514 = vmatpush2.msra.mxu0 0.0
      %2515 = vmatprep.mubr.f32.mxu0 0.0
      %v2516 = vand.u32 %v2281, 4294901760
      %v2517 = vsub.f32 %v2281, %v2516
      %2518 = vmatmul.mubr.f32.gmra.mxu0 %v2517
      %v2519 = vpop.f32.mrf.mxu0
      %v2520 = vadd.f32 %v2443, %v2519
      %v2521 = vpop.f32.mrf.mxu0
      %v2522 = vadd.f32 %v2445, %v2521
      %2523 = vdwg.mxu0
      %2524 = vmatprep.subr.mxu0 0.0
      %2525 = vmatpush1.msra.mxu0 0.0
      %2526 = vmatprep.subr.mxu0 0.0
      %2527 = vmatpush1.msra.mxu0 0.0
      %2528 = vmatprep.subr.mxu0 0.0
      %2529 = vmatpush1.msra.mxu0 0.0
      %2530 = vmatprep.subr.mxu0 0.0
      %2531 = vmatpush1.msra.mxu0 0.0
      %2532 = vmatprep.subr.mxu0 0.0
      %2533 = vmatpush1.msra.mxu0 0.0
      %2534 = vmatprep.subr.mxu0 0.0
      %2535 = vmatpush1.msra.mxu0 0.0
      %2536 = vmatprep.subr.mxu0 0.0
      %2537 = vmatpush1.msra.mxu0 0.0
      %2538 = vmatprep.subr.mxu0 0.0
      %2539 = vmatpush1.msra.mxu0 0.0
      %2540 = vmatprep.subr.mxu0 0.0
      %2541 = vmatpush1.msra.mxu0 0.0
      %2542 = vmatprep.subr.mxu0 0.0
      %2543 = vmatpush1.msra.mxu0 0.0
      %2544 = vmatprep.subr.mxu0 0.0
      %2545 = vmatpush1.msra.mxu0 0.0
      %2546 = vmatprep.subr.mxu0 0.0
      %2547 = vmatpush1.msra.mxu0 0.0
      %2548 = vmatprep.subr.mxu0 0.0
      %2549 = vmatpush1.msra.mxu0 0.0
      %2550 = vmatprep.subr.mxu0 0.0
      %2551 = vmatpush1.msra.mxu0 0.0
      %2552 = vmatprep.subr.mxu0 0.0
      %2553 = vmatpush1.msra.mxu0 0.0
      %v2554 = vand.u32 %v2285, 4294901760
      %2555 = vmatprep.subr.mxu0 %v2554
      %v2556 = vand.u32 %v2283, 4294901760
      %2557 = vmatpush1.msra.mxu0 %v2556
      %2558 = vmatprep.subr.mxu0 0.0
      %2559 = vmatpush2.msra.mxu0 0.0
      %2560 = vmatprep.subr.mxu0 0.0
      %2561 = vmatpush2.msra.mxu0 0.0
      %2562 = vmatprep.subr.mxu0 0.0
      %2563 = vmatpush2.msra.mxu0 0.0
      %2564 = vmatprep.subr.mxu0 0.0
      %2565 = vmatpush2.msra.mxu0 0.0
      %2566 = vmatprep.subr.mxu0 0.0
      %2567 = vmatpush2.msra.mxu0 0.0
      %2568 = vmatprep.subr.mxu0 0.0
      %2569 = vmatpush2.msra.mxu0 0.0
      %2570 = vmatprep.subr.mxu0 0.0
      %2571 = vmatpush2.msra.mxu0 0.0
      %2572 = vmatprep.subr.mxu0 0.0
      %2573 = vmatpush2.msra.mxu0 0.0
      %2574 = vmatprep.subr.mxu0 0.0
      %2575 = vmatpush2.msra.mxu0 0.0
      %2576 = vmatprep.subr.mxu0 0.0
      %2577 = vmatpush2.msra.mxu0 0.0
      %2578 = vmatprep.subr.mxu0 0.0
      %2579 = vmatpush2.msra.mxu0 0.0
      %2580 = vmatprep.subr.mxu0 0.0
      %2581 = vmatpush2.msra.mxu0 0.0
      %2582 = vmatprep.subr.mxu0 0.0
      %2583 = vmatpush2.msra.mxu0 0.0
      %2584 = vmatprep.subr.mxu0 0.0
      %2585 = vmatpush2.msra.mxu0 0.0
      %2586 = vmatprep.subr.mxu0 0.0
      %2587 = vmatpush2.msra.mxu0 0.0
      %2588 = vmatprep.subr.mxu0 0.0
      %2589 = vmatpush2.msra.mxu0 0.0
      %2590 = vmatprep.mubr.f32.mxu0 0.0
      %v2591 = vand.u32 %v2281, 4294901760
      %v2592 = vsub.f32 %v2281, %v2591
      %v2593 = vand.u32 %v2592, 4294901760
      %2594 = vmatmul.mubr.f32.gmra.mxu0 %v2593
      %v2595 = vpop.f32.mrf.mxu0
      %v2596 = vadd.f32 %v2520, %v2595
      %v2597 = vpop.f32.mrf.mxu0
      %v2598 = vadd.f32 %v2522, %v2597
      %2599 = vdwg.mxu0
      %2600 = vmatprep.subr.mxu0 0.0
      %2601 = vmatpush1.msra.mxu0 0.0
      %2602 = vmatprep.subr.mxu0 0.0
      %2603 = vmatpush1.msra.mxu0 0.0
      %2604 = vmatprep.subr.mxu0 0.0
      %2605 = vmatpush1.msra.mxu0 0.0
      %2606 = vmatprep.subr.mxu0 0.0
      %2607 = vmatpush1.msra.mxu0 0.0
      %2608 = vmatprep.subr.mxu0 0.0
      %2609 = vmatpush1.msra.mxu0 0.0
      %2610 = vmatprep.subr.mxu0 0.0
      %2611 = vmatpush1.msra.mxu0 0.0
      %2612 = vmatprep.subr.mxu0 0.0
      %2613 = vmatpush1.msra.mxu0 0.0
      %2614 = vmatprep.subr.mxu0 0.0
      %2615 = vmatpush1.msra.mxu0 0.0
      %2616 = vmatprep.subr.mxu0 0.0
      %2617 = vmatpush1.msra.mxu0 0.0
      %2618 = vmatprep.subr.mxu0 0.0
      %2619 = vmatpush1.msra.mxu0 0.0
      %2620 = vmatprep.subr.mxu0 0.0
      %2621 = vmatpush1.msra.mxu0 0.0
      %2622 = vmatprep.subr.mxu0 0.0
      %2623 = vmatpush1.msra.mxu0 0.0
      %2624 = vmatprep.subr.mxu0 0.0
      %2625 = vmatpush1.msra.mxu0 0.0
      %2626 = vmatprep.subr.mxu0 0.0
      %2627 = vmatpush1.msra.mxu0 0.0
      %2628 = vmatprep.subr.mxu0 0.0
      %2629 = vmatpush1.msra.mxu0 0.0
      %v2630 = vand.u32 %v2285, 4294901760
      %v2631 = vsub.f32 %v2285, %v2630
      %v2632 = vand.u32 %v2631, 4294901760
      %2633 = vmatprep.subr.mxu0 %v2632
      %v2634 = vand.u32 %v2283, 4294901760
      %v2635 = vsub.f32 %v2283, %v2634
      %v2636 = vand.u32 %v2635, 4294901760
      %2637 = vmatpush1.msra.mxu0 %v2636
      %2638 = vmatprep.subr.mxu0 0.0
      %2639 = vmatpush2.msra.mxu0 0.0
      %2640 = vmatprep.subr.mxu0 0.0
      %2641 = vmatpush2.msra.mxu0 0.0
      %2642 = vmatprep.subr.mxu0 0.0
      %2643 = vmatpush2.msra.mxu0 0.0
      %2644 = vmatprep.subr.mxu0 0.0
      %2645 = vmatpush2.msra.mxu0 0.0
      %2646 = vmatprep.subr.mxu0 0.0
      %2647 = vmatpush2.msra.mxu0 0.0
      %2648 = vmatprep.subr.mxu0 0.0
      %2649 = vmatpush2.msra.mxu0 0.0
      %2650 = vmatprep.subr.mxu0 0.0
      %2651 = vmatpush2.msra.mxu0 0.0
      %2652 = vmatprep.subr.mxu0 0.0
      %2653 = vmatpush2.msra.mxu0 0.0
      %2654 = vmatprep.subr.mxu0 0.0
      %2655 = vmatpush2.msra.mxu0 0.0
      %2656 = vmatprep.subr.mxu0 0.0
      %2657 = vmatpush2.msra.mxu0 0.0
      %2658 = vmatprep.subr.mxu0 0.0
      %2659 = vmatpush2.msra.mxu0 0.0
      %2660 = vmatprep.subr.mxu0 0.0
      %2661 = vmatpush2.msra.mxu0 0.0
      %2662 = vmatprep.subr.mxu0 0.0
      %2663 = vmatpush2.msra.mxu0 0.0
      %2664 = vmatprep.subr.mxu0 0.0
      %2665 = vmatpush2.msra.mxu0 0.0
      %2666 = vmatprep.subr.mxu0 0.0
      %2667 = vmatpush2.msra.mxu0 0.0
      %2668 = vmatprep.subr.mxu0 0.0
      %2669 = vmatpush2.msra.mxu0 0.0
      %2670 = vmatprep.mubr.f32.mxu0 0.0
      %v2671 = vand.u32 %v2281, 4294901760
      %2672 = vmatmul.mubr.f32.gmra.mxu0 %v2671
      %v2673 = vpop.f32.mrf.mxu0
      %v2674 = vadd.f32 %v2596, %v2673
      %v2675 = vpop.f32.mrf.mxu0
      %v2676 = vadd.f32 %v2598, %v2675
      %2677 = vdwg.mxu0
      %2678 = vmatprep.subr.mxu0 0.0
      %2679 = vmatpush1.msra.mxu0 0.0
      %2680 = vmatprep.subr.mxu0 0.0
      %2681 = vmatpush1.msra.mxu0 0.0
      %2682 = vmatprep.subr.mxu0 0.0
      %2683 = vmatpush1.msra.mxu0 0.0
      %2684 = vmatprep.subr.mxu0 0.0
      %2685 = vmatpush1.msra.mxu0 0.0
      %2686 = vmatprep.subr.mxu0 0.0
      %2687 = vmatpush1.msra.mxu0 0.0
      %2688 = vmatprep.subr.mxu0 0.0
      %2689 = vmatpush1.msra.mxu0 0.0
      %2690 = vmatprep.subr.mxu0 0.0
      %2691 = vmatpush1.msra.mxu0 0.0
      %2692 = vmatprep.subr.mxu0 0.0
      %2693 = vmatpush1.msra.mxu0 0.0
      %2694 = vmatprep.subr.mxu0 0.0
      %2695 = vmatpush1.msra.mxu0 0.0
      %2696 = vmatprep.subr.mxu0 0.0
      %2697 = vmatpush1.msra.mxu0 0.0
      %2698 = vmatprep.subr.mxu0 0.0
      %2699 = vmatpush1.msra.mxu0 0.0
      %2700 = vmatprep.subr.mxu0 0.0
      %2701 = vmatpush1.msra.mxu0 0.0
      %2702 = vmatprep.subr.mxu0 0.0
      %2703 = vmatpush1.msra.mxu0 0.0
      %2704 = vmatprep.subr.mxu0 0.0
      %2705 = vmatpush1.msra.mxu0 0.0
      %2706 = vmatprep.subr.mxu0 0.0
      %2707 = vmatpush1.msra.mxu0 0.0
      %v2708 = vand.u32 %v2285, 4294901760
      %2709 = vmatprep.subr.mxu0 %v2708
      %v2710 = vand.u32 %v2283, 4294901760
      %2711 = vmatpush1.msra.mxu0 %v2710
      %2712 = vmatprep.subr.mxu0 0.0
      %2713 = vmatpush2.msra.mxu0 0.0
      %2714 = vmatprep.subr.mxu0 0.0
      %2715 = vmatpush2.msra.mxu0 0.0
      %2716 = vmatprep.subr.mxu0 0.0
      %2717 = vmatpush2.msra.mxu0 0.0
      %2718 = vmatprep.subr.mxu0 0.0
      %2719 = vmatpush2.msra.mxu0 0.0
      %2720 = vmatprep.subr.mxu0 0.0
      %2721 = vmatpush2.msra.mxu0 0.0
      %2722 = vmatprep.subr.mxu0 0.0
      %2723 = vmatpush2.msra.mxu0 0.0
      %2724 = vmatprep.subr.mxu0 0.0
      %2725 = vmatpush2.msra.mxu0 0.0
      %2726 = vmatprep.subr.mxu0 0.0
      %2727 = vmatpush2.msra.mxu0 0.0
      %2728 = vmatprep.subr.mxu0 0.0
      %2729 = vmatpush2.msra.mxu0 0.0
      %2730 = vmatprep.subr.mxu0 0.0
      %2731 = vmatpush2.msra.mxu0 0.0
      %2732 = vmatprep.subr.mxu0 0.0
      %2733 = vmatpush2.msra.mxu0 0.0
      %2734 = vmatprep.subr.mxu0 0.0
      %2735 = vmatpush2.msra.mxu0 0.0
      %2736 = vmatprep.subr.mxu0 0.0
      %2737 = vmatpush2.msra.mxu0 0.0
      %2738 = vmatprep.subr.mxu0 0.0
      %2739 = vmatpush2.msra.mxu0 0.0
      %2740 = vmatprep.subr.mxu0 0.0
      %2741 = vmatpush2.msra.mxu0 0.0
      %2742 = vmatprep.subr.mxu0 0.0
      %2743 = vmatpush2.msra.mxu0 0.0
      %2744 = vmatprep.mubr.f32.mxu0 0.0
      %v2745 = vand.u32 %v2281, 4294901760
      %2746 = vmatmul.mubr.f32.gmra.mxu0 %v2745
      %v2747 = vpop.f32.mrf.mxu0
      %v2748 = vadd.f32 %v2674, %v2747
      %v2749 = vpop.f32.mrf.mxu0
      %v2750 = vadd.f32 %v2676, %v2749
      %2751 = vdwg.mxu0
      %v2752 = vadd.f32 %v2277, %v2748
      %v2753 = vadd.f32 %v2278, %v2750
      %v2754 = vcombine.high %v235, %v235
      %2756 = vrot.lane.b32.xlu0 %v251, 127
      %v2757 = vpop.permute.xlu0 %2756
      %2758 = vrot.lane.b32.xlu0 %v235, 127
      %v2759 = vpop.permute.xlu0 %2758
      %2760 = vrot.lane.b32.xlu0 %v2754, 127
      %v2761 = vpop.permute.xlu0 %2760
      %vm2762 = vcmp.lt.s32.totalorder %v237, 127
      %v2763 = vsel %vm2762, %v2759, %v2761
      %v2764 = vsel %vm2762, %v2757, %v2759
      %v2765 = vld [vmem:[%s1] sm:$0x3]
      %2767 = vrot.lane.b32.xlu0 %v2765, 108
      %v2768 = vpop.permute.xlu0 %2767
      %v2769 = vsel %vm263, %v2768, 0
      %v2772 = vsel %vm267, %v2764, 0
      %v2775 = vsel %vm267, %v2763, 0
      %2777 = vmatprep.subr.mxu0 0.0
      %2778 = vmatpush1.msra.mxu0 0.0
      %2779 = vmatprep.subr.mxu0 0.0
      %2780 = vmatpush1.msra.mxu0 0.0
      %2781 = vmatprep.subr.mxu0 0.0
      %2782 = vmatpush1.msra.mxu0 0.0
      %2783 = vmatprep.subr.mxu0 0.0
      %2784 = vmatpush1.msra.mxu0 0.0
      %2785 = vmatprep.subr.mxu0 0.0
      %2786 = vmatpush1.msra.mxu0 0.0
      %2787 = vmatprep.subr.mxu0 0.0
      %2788 = vmatpush1.msra.mxu0 0.0
      %2789 = vmatprep.subr.mxu0 0.0
      %2790 = vmatpush1.msra.mxu0 0.0
      %2791 = vmatprep.subr.mxu0 0.0
      %2792 = vmatpush1.msra.mxu0 0.0
      %2793 = vmatprep.subr.mxu0 0.0
      %2794 = vmatpush1.msra.mxu0 0.0
      %2795 = vmatprep.subr.mxu0 0.0
      %2796 = vmatpush1.msra.mxu0 0.0
      %2797 = vmatprep.subr.mxu0 0.0
      %2798 = vmatpush1.msra.mxu0 0.0
      %2799 = vmatprep.subr.mxu0 0.0
      %2800 = vmatpush1.msra.mxu0 0.0
      %2801 = vmatprep.subr.mxu0 0.0
      %2802 = vmatpush1.msra.mxu0 0.0
      %2803 = vmatprep.subr.mxu0 0.0
      %2804 = vmatpush1.msra.mxu0 0.0
      %2805 = vmatprep.subr.mxu0 0.0
      %2806 = vmatpush1.msra.mxu0 0.0
      %v2807 = vand.u32 %v2775, 4294901760
      %2808 = vmatprep.subr.mxu0 %v2807
      %v2809 = vand.u32 %v2772, 4294901760
      %2810 = vmatpush1.msra.mxu0 %v2809
      %2811 = vmatprep.subr.mxu0 0.0
      %2812 = vmatpush2.msra.mxu0 0.0
      %2813 = vmatprep.subr.mxu0 0.0
      %2814 = vmatpush2.msra.mxu0 0.0
      %2815 = vmatprep.subr.mxu0 0.0
      %2816 = vmatpush2.msra.mxu0 0.0
      %2817 = vmatprep.subr.mxu0 0.0
      %2818 = vmatpush2.msra.mxu0 0.0
      %2819 = vmatprep.subr.mxu0 0.0
      %2820 = vmatpush2.msra.mxu0 0.0
      %2821 = vmatprep.subr.mxu0 0.0
      %2822 = vmatpush2.msra.mxu0 0.0
      %2823 = vmatprep.subr.mxu0 0.0
      %2824 = vmatpush2.msra.mxu0 0.0
      %2825 = vmatprep.subr.mxu0 0.0
      %2826 = vmatpush2.msra.mxu0 0.0
      %2827 = vmatprep.subr.mxu0 0.0
      %2828 = vmatpush2.msra.mxu0 0.0
      %2829 = vmatprep.subr.mxu0 0.0
      %2830 = vmatpush2.msra.mxu0 0.0
      %2831 = vmatprep.subr.mxu0 0.0
      %2832 = vmatpush2.msra.mxu0 0.0
      %2833 = vmatprep.subr.mxu0 0.0
      %2834 = vmatpush2.msra.mxu0 0.0
      %2835 = vmatprep.subr.mxu0 0.0
      %2836 = vmatpush2.msra.mxu0 0.0
      %2837 = vmatprep.subr.mxu0 0.0
      %2838 = vmatpush2.msra.mxu0 0.0
      %2839 = vmatprep.subr.mxu0 0.0
      %2840 = vmatpush2.msra.mxu0 0.0
      %2841 = vmatprep.subr.mxu0 0.0
      %2842 = vmatpush2.msra.mxu0 0.0
      %2843 = vmatprep.mubr.f32.mxu0 0.0
      %v2844 = vand.u32 %v2769, 4294901760
      %v2845 = vsub.f32 %v2769, %v2844
      %v2846 = vand.u32 %v2845, 4294901760
      %v2847 = vsub.f32 %v2845, %v2846
      %v2848 = vand.u32 %v2847, 4294901760
      %2849 = vmatmul.mubr.f32.gmra.mxu0 %v2848
      %v2850 = vpop.f32.mrf.mxu0
      %v2851 = vadd.f32 0.0, %v2850
      %v2852 = vpop.f32.mrf.mxu0
      %v2853 = vadd.f32 0.0, %v2852
      %2854 = vdwg.mxu0
      %2855 = vmatprep.subr.mxu0 0.0
      %2856 = vmatpush1.msra.mxu0 0.0
      %2857 = vmatprep.subr.mxu0 0.0
      %2858 = vmatpush1.msra.mxu0 0.0
      %2859 = vmatprep.subr.mxu0 0.0
      %2860 = vmatpush1.msra.mxu0 0.0
      %2861 = vmatprep.subr.mxu0 0.0
      %2862 = vmatpush1.msra.mxu0 0.0
      %2863 = vmatprep.subr.mxu0 0.0
      %2864 = vmatpush1.msra.mxu0 0.0
      %2865 = vmatprep.subr.mxu0 0.0
      %2866 = vmatpush1.msra.mxu0 0.0
      %2867 = vmatprep.subr.mxu0 0.0
      %2868 = vmatpush1.msra.mxu0 0.0
      %2869 = vmatprep.subr.mxu0 0.0
      %2870 = vmatpush1.msra.mxu0 0.0
      %2871 = vmatprep.subr.mxu0 0.0
      %2872 = vmatpush1.msra.mxu0 0.0
      %2873 = vmatprep.subr.mxu0 0.0
      %2874 = vmatpush1.msra.mxu0 0.0
      %2875 = vmatprep.subr.mxu0 0.0
      %2876 = vmatpush1.msra.mxu0 0.0
      %2877 = vmatprep.subr.mxu0 0.0
      %2878 = vmatpush1.msra.mxu0 0.0
      %2879 = vmatprep.subr.mxu0 0.0
      %2880 = vmatpush1.msra.mxu0 0.0
      %2881 = vmatprep.subr.mxu0 0.0
      %2882 = vmatpush1.msra.mxu0 0.0
      %2883 = vmatprep.subr.mxu0 0.0
      %2884 = vmatpush1.msra.mxu0 0.0
      %v2885 = vand.u32 %v2775, 4294901760
      %v2886 = vsub.f32 %v2775, %v2885
      %v2887 = vand.u32 %v2886, 4294901760
      %v2888 = vsub.f32 %v2886, %v2887
      %v2889 = vand.u32 %v2888, 4294901760
      %2890 = vmatprep.subr.mxu0 %v2889
      %v2891 = vand.u32 %v2772, 4294901760
      %v2892 = vsub.f32 %v2772, %v2891
      %v2893 = vand.u32 %v2892, 4294901760
      %v2894 = vsub.f32 %v2892, %v2893
      %v2895 = vand.u32 %v2894, 4294901760
      %2896 = vmatpush1.msra.mxu0 %v2895
      %2897 = vmatprep.subr.mxu0 0.0
      %2898 = vmatpush2.msra.mxu0 0.0
      %2899 = vmatprep.subr.mxu0 0.0
      %2900 = vmatpush2.msra.mxu0 0.0
      %2901 = vmatprep.subr.mxu0 0.0
      %2902 = vmatpush2.msra.mxu0 0.0
      %2903 = vmatprep.subr.mxu0 0.0
      %2904 = vmatpush2.msra.mxu0 0.0
      %2905 = vmatprep.subr.mxu0 0.0
      %2906 = vmatpush2.msra.mxu0 0.0
      %2907 = vmatprep.subr.mxu0 0.0
      %2908 = vmatpush2.msra.mxu0 0.0
      %2909 = vmatprep.subr.mxu0 0.0
      %2910 = vmatpush2.msra.mxu0 0.0
      %2911 = vmatprep.subr.mxu0 0.0
      %2912 = vmatpush2.msra.mxu0 0.0
      %2913 = vmatprep.subr.mxu0 0.0
      %2914 = vmatpush2.msra.mxu0 0.0
      %2915 = vmatprep.subr.mxu0 0.0
      %2916 = vmatpush2.msra.mxu0 0.0
      %2917 = vmatprep.subr.mxu0 0.0
      %2918 = vmatpush2.msra.mxu0 0.0
      %2919 = vmatprep.subr.mxu0 0.0
      %2920 = vmatpush2.msra.mxu0 0.0
      %2921 = vmatprep.subr.mxu0 0.0
      %2922 = vmatpush2.msra.mxu0 0.0
      %2923 = vmatprep.subr.mxu0 0.0
      %2924 = vmatpush2.msra.mxu0 0.0
      %2925 = vmatprep.subr.mxu0 0.0
      %2926 = vmatpush2.msra.mxu0 0.0
      %2927 = vmatprep.subr.mxu0 0.0
      %2928 = vmatpush2.msra.mxu0 0.0
      %2929 = vmatprep.mubr.f32.mxu0 0.0
      %v2930 = vand.u32 %v2769, 4294901760
      %2931 = vmatmul.mubr.f32.gmra.mxu0 %v2930
      %v2932 = vpop.f32.mrf.mxu0
      %v2933 = vadd.f32 %v2851, %v2932
      %v2934 = vpop.f32.mrf.mxu0
      %v2935 = vadd.f32 %v2853, %v2934
      %2936 = vdwg.mxu0
      %2937 = vmatprep.subr.mxu0 0.0
      %2938 = vmatpush1.msra.mxu0 0.0
      %2939 = vmatprep.subr.mxu0 0.0
      %2940 = vmatpush1.msra.mxu0 0.0
      %2941 = vmatprep.subr.mxu0 0.0
      %2942 = vmatpush1.msra.mxu0 0.0
      %2943 = vmatprep.subr.mxu0 0.0
      %2944 = vmatpush1.msra.mxu0 0.0
      %2945 = vmatprep.subr.mxu0 0.0
      %2946 = vmatpush1.msra.mxu0 0.0
      %2947 = vmatprep.subr.mxu0 0.0
      %2948 = vmatpush1.msra.mxu0 0.0
      %2949 = vmatprep.subr.mxu0 0.0
      %2950 = vmatpush1.msra.mxu0 0.0
      %2951 = vmatprep.subr.mxu0 0.0
      %2952 = vmatpush1.msra.mxu0 0.0
      %2953 = vmatprep.subr.mxu0 0.0
      %2954 = vmatpush1.msra.mxu0 0.0
      %2955 = vmatprep.subr.mxu0 0.0
      %2956 = vmatpush1.msra.mxu0 0.0
      %2957 = vmatprep.subr.mxu0 0.0
      %2958 = vmatpush1.msra.mxu0 0.0
      %2959 = vmatprep.subr.mxu0 0.0
      %2960 = vmatpush1.msra.mxu0 0.0
      %2961 = vmatprep.subr.mxu0 0.0
      %2962 = vmatpush1.msra.mxu0 0.0
      %2963 = vmatprep.subr.mxu0 0.0
      %2964 = vmatpush1.msra.mxu0 0.0
      %2965 = vmatprep.subr.mxu0 0.0
      %2966 = vmatpush1.msra.mxu0 0.0
      %v2967 = vand.u32 %v2775, 4294901760
      %v2968 = vsub.f32 %v2775, %v2967
      %2969 = vmatprep.subr.mxu0 %v2968
      %v2970 = vand.u32 %v2772, 4294901760
      %v2971 = vsub.f32 %v2772, %v2970
      %2972 = vmatpush1.msra.mxu0 %v2971
      %2973 = vmatprep.subr.mxu0 0.0
      %2974 = vmatpush2.msra.mxu0 0.0
      %2975 = vmatprep.subr.mxu0 0.0
      %2976 = vmatpush2.msra.mxu0 0.0
      %2977 = vmatprep.subr.mxu0 0.0
      %2978 = vmatpush2.msra.mxu0 0.0
      %2979 = vmatprep.subr.mxu0 0.0
      %2980 = vmatpush2.msra.mxu0 0.0
      %2981 = vmatprep.subr.mxu0 0.0
      %2982 = vmatpush2.msra.mxu0 0.0
      %2983 = vmatprep.subr.mxu0 0.0
      %2984 = vmatpush2.msra.mxu0 0.0
      %2985 = vmatprep.subr.mxu0 0.0
      %2986 = vmatpush2.msra.mxu0 0.0
      %2987 = vmatprep.subr.mxu0 0.0
      %2988 = vmatpush2.msra.mxu0 0.0
      %2989 = vmatprep.subr.mxu0 0.0
      %2990 = vmatpush2.msra.mxu0 0.0
      %2991 = vmatprep.subr.mxu0 0.0
      %2992 = vmatpush2.msra.mxu0 0.0
      %2993 = vmatprep.subr.mxu0 0.0
      %2994 = vmatpush2.msra.mxu0 0.0
      %2995 = vmatprep.subr.mxu0 0.0
      %2996 = vmatpush2.msra.mxu0 0.0
      %2997 = vmatprep.subr.mxu0 0.0
      %2998 = vmatpush2.msra.mxu0 0.0
      %2999 = vmatprep.subr.mxu0 0.0
      %3000 = vmatpush2.msra.mxu0 0.0
      %3001 = vmatprep.subr.mxu0 0.0
      %3002 = vmatpush2.msra.mxu0 0.0
      %3003 = vmatprep.subr.mxu0 0.0
      %3004 = vmatpush2.msra.mxu0 0.0
      %3005 = vmatprep.mubr.f32.mxu0 0.0
      %v3006 = vand.u32 %v2769, 4294901760
      %v3007 = vsub.f32 %v2769, %v3006
      %3008 = vmatmul.mubr.f32.gmra.mxu0 %v3007
      %v3009 = vpop.f32.mrf.mxu0
      %v3010 = vadd.f32 %v2933, %v3009
      %v3011 = vpop.f32.mrf.mxu0
      %v3012 = vadd.f32 %v2935, %v3011
      %3013 = vdwg.mxu0
      %3014 = vmatprep.subr.mxu0 0.0
      %3015 = vmatpush1.msra.mxu0 0.0
      %3016 = vmatprep.subr.mxu0 0.0
      %3017 = vmatpush1.msra.mxu0 0.0
      %3018 = vmatprep.subr.mxu0 0.0
      %3019 = vmatpush1.msra.mxu0 0.0
      %3020 = vmatprep.subr.mxu0 0.0
      %3021 = vmatpush1.msra.mxu0 0.0
      %3022 = vmatprep.subr.mxu0 0.0
      %3023 = vmatpush1.msra.mxu0 0.0
      %3024 = vmatprep.subr.mxu0 0.0
      %3025 = vmatpush1.msra.mxu0 0.0
      %3026 = vmatprep.subr.mxu0 0.0
      %3027 = vmatpush1.msra.mxu0 0.0
      %3028 = vmatprep.subr.mxu0 0.0
      %3029 = vmatpush1.msra.mxu0 0.0
      %3030 = vmatprep.subr.mxu0 0.0
      %3031 = vmatpush1.msra.mxu0 0.0
      %3032 = vmatprep.subr.mxu0 0.0
      %3033 = vmatpush1.msra.mxu0 0.0
      %3034 = vmatprep.subr.mxu0 0.0
      %3035 = vmatpush1.msra.mxu0 0.0
      %3036 = vmatprep.subr.mxu0 0.0
      %3037 = vmatpush1.msra.mxu0 0.0
      %3038 = vmatprep.subr.mxu0 0.0
      %3039 = vmatpush1.msra.mxu0 0.0
      %3040 = vmatprep.subr.mxu0 0.0
      %3041 = vmatpush1.msra.mxu0 0.0
      %3042 = vmatprep.subr.mxu0 0.0
      %3043 = vmatpush1.msra.mxu0 0.0
      %v3044 = vand.u32 %v2775, 4294901760
      %3045 = vmatprep.subr.mxu0 %v3044
      %v3046 = vand.u32 %v2772, 4294901760
      %3047 = vmatpush1.msra.mxu0 %v3046
      %3048 = vmatprep.subr.mxu0 0.0
      %3049 = vmatpush2.msra.mxu0 0.0
      %3050 = vmatprep.subr.mxu0 0.0
      %3051 = vmatpush2.msra.mxu0 0.0
      %3052 = vmatprep.subr.mxu0 0.0
      %3053 = vmatpush2.msra.mxu0 0.0
      %3054 = vmatprep.subr.mxu0 0.0
      %3055 = vmatpush2.msra.mxu0 0.0
      %3056 = vmatprep.subr.mxu0 0.0
      %3057 = vmatpush2.msra.mxu0 0.0
      %3058 = vmatprep.subr.mxu0 0.0
      %3059 = vmatpush2.msra.mxu0 0.0
      %3060 = vmatprep.subr.mxu0 0.0
      %3061 = vmatpush2.msra.mxu0 0.0
      %3062 = vmatprep.subr.mxu0 0.0
      %3063 = vmatpush2.msra.mxu0 0.0
      %3064 = vmatprep.subr.mxu0 0.0
      %3065 = vmatpush2.msra.mxu0 0.0
      %3066 = vmatprep.subr.mxu0 0.0
      %3067 = vmatpush2.msra.mxu0 0.0
      %3068 = vmatprep.subr.mxu0 0.0
      %3069 = vmatpush2.msra.mxu0 0.0
      %3070 = vmatprep.subr.mxu0 0.0
      %3071 = vmatpush2.msra.mxu0 0.0
      %3072 = vmatprep.subr.mxu0 0.0
      %3073 = vmatpush2.msra.mxu0 0.0
      %3074 = vmatprep.subr.mxu0 0.0
      %3075 = vmatpush2.msra.mxu0 0.0
      %3076 = vmatprep.subr.mxu0 0.0
      %3077 = vmatpush2.msra.mxu0 0.0
      %3078 = vmatprep.subr.mxu0 0.0
      %3079 = vmatpush2.msra.mxu0 0.0
      %3080 = vmatprep.mubr.f32.mxu0 0.0
      %v3081 = vand.u32 %v2769, 4294901760
      %v3082 = vsub.f32 %v2769, %v3081
      %v3083 = vand.u32 %v3082, 4294901760
      %3084 = vmatmul.mubr.f32.gmra.mxu0 %v3083
      %v3085 = vpop.f32.mrf.mxu0
      %v3086 = vadd.f32 %v3010, %v3085
      %v3087 = vpop.f32.mrf.mxu0
      %v3088 = vadd.f32 %v3012, %v3087
      %3089 = vdwg.mxu0
      %3090 = vmatprep.subr.mxu0 0.0
      %3091 = vmatpush1.msra.mxu0 0.0
      %3092 = vmatprep.subr.mxu0 0.0
      %3093 = vmatpush1.msra.mxu0 0.0
      %3094 = vmatprep.subr.mxu0 0.0
      %3095 = vmatpush1.msra.mxu0 0.0
      %3096 = vmatprep.subr.mxu0 0.0
      %3097 = vmatpush1.msra.mxu0 0.0
      %3098 = vmatprep.subr.mxu0 0.0
      %3099 = vmatpush1.msra.mxu0 0.0
      %3100 = vmatprep.subr.mxu0 0.0
      %3101 = vmatpush1.msra.mxu0 0.0
      %3102 = vmatprep.subr.mxu0 0.0
      %3103 = vmatpush1.msra.mxu0 0.0
      %3104 = vmatprep.subr.mxu0 0.0
      %3105 = vmatpush1.msra.mxu0 0.0
      %3106 = vmatprep.subr.mxu0 0.0
      %3107 = vmatpush1.msra.mxu0 0.0
      %3108 = vmatprep.subr.mxu0 0.0
      %3109 = vmatpush1.msra.mxu0 0.0
      %3110 = vmatprep.subr.mxu0 0.0
      %3111 = vmatpush1.msra.mxu0 0.0
      %3112 = vmatprep.subr.mxu0 0.0
      %3113 = vmatpush1.msra.mxu0 0.0
      %3114 = vmatprep.subr.mxu0 0.0
      %3115 = vmatpush1.msra.mxu0 0.0
      %3116 = vmatprep.subr.mxu0 0.0
      %3117 = vmatpush1.msra.mxu0 0.0
      %3118 = vmatprep.subr.mxu0 0.0
      %3119 = vmatpush1.msra.mxu0 0.0
      %v3120 = vand.u32 %v2775, 4294901760
      %v3121 = vsub.f32 %v2775, %v3120
      %v3122 = vand.u32 %v3121, 4294901760
      %3123 = vmatprep.subr.mxu0 %v3122
      %v3124 = vand.u32 %v2772, 4294901760
      %v3125 = vsub.f32 %v2772, %v3124
      %v3126 = vand.u32 %v3125, 4294901760
      %3127 = vmatpush1.msra.mxu0 %v3126
      %3128 = vmatprep.subr.mxu0 0.0
      %3129 = vmatpush2.msra.mxu0 0.0
      %3130 = vmatprep.subr.mxu0 0.0
      %3131 = vmatpush2.msra.mxu0 0.0
      %3132 = vmatprep.subr.mxu0 0.0
      %3133 = vmatpush2.msra.mxu0 0.0
      %3134 = vmatprep.subr.mxu0 0.0
      %3135 = vmatpush2.msra.mxu0 0.0
      %3136 = vmatprep.subr.mxu0 0.0
      %3137 = vmatpush2.msra.mxu0 0.0
      %3138 = vmatprep.subr.mxu0 0.0
      %3139 = vmatpush2.msra.mxu0 0.0
      %3140 = vmatprep.subr.mxu0 0.0
      %3141 = vmatpush2.msra.mxu0 0.0
      %3142 = vmatprep.subr.mxu0 0.0
      %3143 = vmatpush2.msra.mxu0 0.0
      %3144 = vmatprep.subr.mxu0 0.0
      %3145 = vmatpush2.msra.mxu0 0.0
      %3146 = vmatprep.subr.mxu0 0.0
      %3147 = vmatpush2.msra.mxu0 0.0
      %3148 = vmatprep.subr.mxu0 0.0
      %3149 = vmatpush2.msra.mxu0 0.0
      %3150 = vmatprep.subr.mxu0 0.0
      %3151 = vmatpush2.msra.mxu0 0.0
      %3152 = vmatprep.subr.mxu0 0.0
      %3153 = vmatpush2.msra.mxu0 0.0
      %3154 = vmatprep.subr.mxu0 0.0
      %3155 = vmatpush2.msra.mxu0 0.0
      %3156 = vmatprep.subr.mxu0 0.0
      %3157 = vmatpush2.msra.mxu0 0.0
      %3158 = vmatprep.subr.mxu0 0.0
      %3159 = vmatpush2.msra.mxu0 0.0
      %3160 = vmatprep.mubr.f32.mxu0 0.0
      %v3161 = vand.u32 %v2769, 4294901760
      %3162 = vmatmul.mubr.f32.gmra.mxu0 %v3161
      %v3163 = vpop.f32.mrf.mxu0
      %v3164 = vadd.f32 %v3086, %v3163
      %v3165 = vpop.f32.mrf.mxu0
      %v3166 = vadd.f32 %v3088, %v3165
      %3167 = vdwg.mxu0
      %3168 = vmatprep.subr.mxu0 0.0
      %3169 = vmatpush1.msra.mxu0 0.0
      %3170 = vmatprep.subr.mxu0 0.0
      %3171 = vmatpush1.msra.mxu0 0.0
      %3172 = vmatprep.subr.mxu0 0.0
      %3173 = vmatpush1.msra.mxu0 0.0
      %3174 = vmatprep.subr.mxu0 0.0
      %3175 = vmatpush1.msra.mxu0 0.0
      %3176 = vmatprep.subr.mxu0 0.0
      %3177 = vmatpush1.msra.mxu0 0.0
      %3178 = vmatprep.subr.mxu0 0.0
      %3179 = vmatpush1.msra.mxu0 0.0
      %3180 = vmatprep.subr.mxu0 0.0
      %3181 = vmatpush1.msra.mxu0 0.0
      %3182 = vmatprep.subr.mxu0 0.0
      %3183 = vmatpush1.msra.mxu0 0.0
      %3184 = vmatprep.subr.mxu0 0.0
      %3185 = vmatpush1.msra.mxu0 0.0
      %3186 = vmatprep.subr.mxu0 0.0
      %3187 = vmatpush1.msra.mxu0 0.0
      %3188 = vmatprep.subr.mxu0 0.0
      %3189 = vmatpush1.msra.mxu0 0.0
      %3190 = vmatprep.subr.mxu0 0.0
      %3191 = vmatpush1.msra.mxu0 0.0
      %3192 = vmatprep.subr.mxu0 0.0
      %3193 = vmatpush1.msra.mxu0 0.0
      %3194 = vmatprep.subr.mxu0 0.0
      %3195 = vmatpush1.msra.mxu0 0.0
      %3196 = vmatprep.subr.mxu0 0.0
      %3197 = vmatpush1.msra.mxu0 0.0
      %v3198 = vand.u32 %v2775, 4294901760
      %3199 = vmatprep.subr.mxu0 %v3198
      %v3200 = vand.u32 %v2772, 4294901760
      %3201 = vmatpush1.msra.mxu0 %v3200
      %3202 = vmatprep.subr.mxu0 0.0
      %3203 = vmatpush2.msra.mxu0 0.0
      %3204 = vmatprep.subr.mxu0 0.0
      %3205 = vmatpush2.msra.mxu0 0.0
      %3206 = vmatprep.subr.mxu0 0.0
      %3207 = vmatpush2.msra.mxu0 0.0
      %3208 = vmatprep.subr.mxu0 0.0
      %3209 = vmatpush2.msra.mxu0 0.0
      %3210 = vmatprep.subr.mxu0 0.0
      %3211 = vmatpush2.msra.mxu0 0.0
      %3212 = vmatprep.subr.mxu0 0.0
      %3213 = vmatpush2.msra.mxu0 0.0
      %3214 = vmatprep.subr.mxu0 0.0
      %3215 = vmatpush2.msra.mxu0 0.0
      %3216 = vmatprep.subr.mxu0 0.0
      %3217 = vmatpush2.msra.mxu0 0.0
      %3218 = vmatprep.subr.mxu0 0.0
      %3219 = vmatpush2.msra.mxu0 0.0
      %3220 = vmatprep.subr.mxu0 0.0
      %3221 = vmatpush2.msra.mxu0 0.0
      %3222 = vmatprep.subr.mxu0 0.0
      %3223 = vmatpush2.msra.mxu0 0.0
      %3224 = vmatprep.subr.mxu0 0.0
      %3225 = vmatpush2.msra.mxu0 0.0
      %3226 = vmatprep.subr.mxu0 0.0
      %3227 = vmatpush2.msra.mxu0 0.0
      %3228 = vmatprep.subr.mxu0 0.0
      %3229 = vmatpush2.msra.mxu0 0.0
      %3230 = vmatprep.subr.mxu0 0.0
      %3231 = vmatpush2.msra.mxu0 0.0
      %3232 = vmatprep.subr.mxu0 0.0
      %3233 = vmatpush2.msra.mxu0 0.0
      %3234 = vmatprep.mubr.f32.mxu0 0.0
      %v3235 = vand.u32 %v2769, 4294901760
      %3236 = vmatmul.mubr.f32.gmra.mxu0 %v3235
      %v3237 = vpop.f32.mrf.mxu0
      %v3238 = vadd.f32 %v3164, %v3237
      %v3239 = vpop.f32.mrf.mxu0
      %v3240 = vadd.f32 %v3166, %v3239
      %3241 = vdwg.mxu0
      %v3242 = vcvt.s32.f32 %v1748
      %v3244 = vlaneseq
      %v3245 = vshrl.u32 %v3244, 7
      %v3246 = vsub.s32 0, %v3245
      %v3247 = vrot.slane %v3242, %v3246
      %v3248 = vlaneseq
      %v3249 = vshrl.u32 %v3248, 7
      %v3250 = vsub.s32 1, %v3249
      %v3251 = vrot.slane %v3242, %v3250
      %v3254 = vmul.f32 %v3238, %v3247
      %v3255 = vmul.f32 %v3240, %v3251
      %v3256 = vadd.f32 %v2752, %v3254
      %v3257 = vadd.f32 %v2753, %v3255
      %3258 = vrot.lane.b32.xlu0 %v251, 113
      %v3259 = vpop.permute.xlu0 %3258
      %3260 = vrot.lane.b32.xlu0 %v235, 113
      %v3261 = vpop.permute.xlu0 %3260
      %3262 = vrot.lane.b32.xlu0 %v2754, 113
      %v3263 = vpop.permute.xlu0 %3262
      %vm3264 = vcmp.lt.s32.totalorder %v237, 113
      %v3265 = vsel %vm3264, %v3261, %v3263
      %v3266 = vsel %vm3264, %v3259, %v3261
      %v3267 = vld [vmem:[%s1] sm:$0x3]
      %3269 = vrot.lane.b32.xlu0 %v3267, 104
      %v3270 = vpop.permute.xlu0 %3269
      %v3271 = vsel %vm263, %v3270, 0
      %v3274 = vsel %vm267, %v3266, 0
      %v3277 = vsel %vm267, %v3265, 0
      %3279 = vmatprep.subr.mxu0 0.0
      %3280 = vmatpush1.msra.mxu0 0.0
      %3281 = vmatprep.subr.mxu0 0.0
      %3282 = vmatpush1.msra.mxu0 0.0
      %3283 = vmatprep.subr.mxu0 0.0
      %3284 = vmatpush1.msra.mxu0 0.0
      %3285 = vmatprep.subr.mxu0 0.0
      %3286 = vmatpush1.msra.mxu0 0.0
      %3287 = vmatprep.subr.mxu0 0.0
      %3288 = vmatpush1.msra.mxu0 0.0
      %3289 = vmatprep.subr.mxu0 0.0
      %3290 = vmatpush1.msra.mxu0 0.0
      %3291 = vmatprep.subr.mxu0 0.0
      %3292 = vmatpush1.msra.mxu0 0.0
      %3293 = vmatprep.subr.mxu0 0.0
      %3294 = vmatpush1.msra.mxu0 0.0
      %3295 = vmatprep.subr.mxu0 0.0
      %3296 = vmatpush1.msra.mxu0 0.0
      %3297 = vmatprep.subr.mxu0 0.0
      %3298 = vmatpush1.msra.mxu0 0.0
      %3299 = vmatprep.subr.mxu0 0.0
      %3300 = vmatpush1.msra.mxu0 0.0
      %3301 = vmatprep.subr.mxu0 0.0
      %3302 = vmatpush1.msra.mxu0 0.0
      %3303 = vmatprep.subr.mxu0 0.0
      %3304 = vmatpush1.msra.mxu0 0.0
      %3305 = vmatprep.subr.mxu0 0.0
      %3306 = vmatpush1.msra.mxu0 0.0
      %3307 = vmatprep.subr.mxu0 0.0
      %3308 = vmatpush1.msra.mxu0 0.0
      %v3309 = vand.u32 %v3277, 4294901760
      %3310 = vmatprep.subr.mxu0 %v3309
      %v3311 = vand.u32 %v3274, 4294901760
      %3312 = vmatpush1.msra.mxu0 %v3311
      %3313 = vmatprep.subr.mxu0 0.0
      %3314 = vmatpush2.msra.mxu0 0.0
      %3315 = vmatprep.subr.mxu0 0.0
      %3316 = vmatpush2.msra.mxu0 0.0
      %3317 = vmatprep.subr.mxu0 0.0
      %3318 = vmatpush2.msra.mxu0 0.0
      %3319 = vmatprep.subr.mxu0 0.0
      %3320 = vmatpush2.msra.mxu0 0.0
      %3321 = vmatprep.subr.mxu0 0.0
      %3322 = vmatpush2.msra.mxu0 0.0
      %3323 = vmatprep.subr.mxu0 0.0
      %3324 = vmatpush2.msra.mxu0 0.0
      %3325 = vmatprep.subr.mxu0 0.0
      %3326 = vmatpush2.msra.mxu0 0.0
      %3327 = vmatprep.subr.mxu0 0.0
      %3328 = vmatpush2.msra.mxu0 0.0
      %3329 = vmatprep.subr.mxu0 0.0
      %3330 = vmatpush2.msra.mxu0 0.0
      %3331 = vmatprep.subr.mxu0 0.0
      %3332 = vmatpush2.msra.mxu0 0.0
      %3333 = vmatprep.subr.mxu0 0.0
      %3334 = vmatpush2.msra.mxu0 0.0
      %3335 = vmatprep.subr.mxu0 0.0
      %3336 = vmatpush2.msra.mxu0 0.0
      %3337 = vmatprep.subr.mxu0 0.0
      %3338 = vmatpush2.msra.mxu0 0.0
      %3339 = vmatprep.subr.mxu0 0.0
      %3340 = vmatpush2.msra.mxu0 0.0
      %3341 = vmatprep.subr.mxu0 0.0
      %3342 = vmatpush2.msra.mxu0 0.0
      %3343 = vmatprep.subr.mxu0 0.0
      %3344 = vmatpush2.msra.mxu0 0.0
      %3345 = vmatprep.mubr.f32.mxu0 0.0
      %v3346 = vand.u32 %v3271, 4294901760
      %v3347 = vsub.f32 %v3271, %v3346
      %v3348 = vand.u32 %v3347, 4294901760
      %v3349 = vsub.f32 %v3347, %v3348
      %v3350 = vand.u32 %v3349, 4294901760
      %3351 = vmatmul.mubr.f32.gmra.mxu0 %v3350
      %v3352 = vpop.f32.mrf.mxu0
      %v3353 = vadd.f32 0.0, %v3352
      %v3354 = vpop.f32.mrf.mxu0
      %v3355 = vadd.f32 0.0, %v3354
      %3356 = vdwg.mxu0
      %3357 = vmatprep.subr.mxu0 0.0
      %3358 = vmatpush1.msra.mxu0 0.0
      %3359 = vmatprep.subr.mxu0 0.0
      %3360 = vmatpush1.msra.mxu0 0.0
      %3361 = vmatprep.subr.mxu0 0.0
      %3362 = vmatpush1.msra.mxu0 0.0
      %3363 = vmatprep.subr.mxu0 0.0
      %3364 = vmatpush1.msra.mxu0 0.0
      %3365 = vmatprep.subr.mxu0 0.0
      %3366 = vmatpush1.msra.mxu0 0.0
      %3367 = vmatprep.subr.mxu0 0.0
      %3368 = vmatpush1.msra.mxu0 0.0
      %3369 = vmatprep.subr.mxu0 0.0
      %3370 = vmatpush1.msra.mxu0 0.0
      %3371 = vmatprep.subr.mxu0 0.0
      %3372 = vmatpush1.msra.mxu0 0.0
      %3373 = vmatprep.subr.mxu0 0.0
      %3374 = vmatpush1.msra.mxu0 0.0
      %3375 = vmatprep.subr.mxu0 0.0
      %3376 = vmatpush1.msra.mxu0 0.0
      %3377 = vmatprep.subr.mxu0 0.0
      %3378 = vmatpush1.msra.mxu0 0.0
      %3379 = vmatprep.subr.mxu0 0.0
      %3380 = vmatpush1.msra.mxu0 0.0
      %3381 = vmatprep.subr.mxu0 0.0
      %3382 = vmatpush1.msra.mxu0 0.0
      %3383 = vmatprep.subr.mxu0 0.0
      %3384 = vmatpush1.msra.mxu0 0.0
      %3385 = vmatprep.subr.mxu0 0.0
      %3386 = vmatpush1.msra.mxu0 0.0
      %v3387 = vand.u32 %v3277, 4294901760
      %v3388 = vsub.f32 %v3277, %v3387
      %v3389 = vand.u32 %v3388, 4294901760
      %v3390 = vsub.f32 %v3388, %v3389
      %v3391 = vand.u32 %v3390, 4294901760
      %3392 = vmatprep.subr.mxu0 %v3391
      %v3393 = vand.u32 %v3274, 4294901760
      %v3394 = vsub.f32 %v3274, %v3393
      %v3395 = vand.u32 %v3394, 4294901760
      %v3396 = vsub.f32 %v3394, %v3395
      %v3397 = vand.u32 %v3396, 4294901760
      %3398 = vmatpush1.msra.mxu0 %v3397
      %3399 = vmatprep.subr.mxu0 0.0
      %3400 = vmatpush2.msra.mxu0 0.0
      %3401 = vmatprep.subr.mxu0 0.0
      %3402 = vmatpush2.msra.mxu0 0.0
      %3403 = vmatprep.subr.mxu0 0.0
      %3404 = vmatpush2.msra.mxu0 0.0
      %3405 = vmatprep.subr.mxu0 0.0
      %3406 = vmatpush2.msra.mxu0 0.0
      %3407 = vmatprep.subr.mxu0 0.0
      %3408 = vmatpush2.msra.mxu0 0.0
      %3409 = vmatprep.subr.mxu0 0.0
      %3410 = vmatpush2.msra.mxu0 0.0
      %3411 = vmatprep.subr.mxu0 0.0
      %3412 = vmatpush2.msra.mxu0 0.0
      %3413 = vmatprep.subr.mxu0 0.0
      %3414 = vmatpush2.msra.mxu0 0.0
      %3415 = vmatprep.subr.mxu0 0.0
      %3416 = vmatpush2.msra.mxu0 0.0
      %3417 = vmatprep.subr.mxu0 0.0
      %3418 = vmatpush2.msra.mxu0 0.0
      %3419 = vmatprep.subr.mxu0 0.0
      %3420 = vmatpush2.msra.mxu0 0.0
      %3421 = vmatprep.subr.mxu0 0.0
      %3422 = vmatpush2.msra.mxu0 0.0
      %3423 = vmatprep.subr.mxu0 0.0
      %3424 = vmatpush2.msra.mxu0 0.0
      %3425 = vmatprep.subr.mxu0 0.0
      %3426 = vmatpush2.msra.mxu0 0.0
      %3427 = vmatprep.subr.mxu0 0.0
      %3428 = vmatpush2.msra.mxu0 0.0
      %3429 = vmatprep.subr.mxu0 0.0
      %3430 = vmatpush2.msra.mxu0 0.0
      %3431 = vmatprep.mubr.f32.mxu0 0.0
      %v3432 = vand.u32 %v3271, 4294901760
      %3433 = vmatmul.mubr.f32.gmra.mxu0 %v3432
      %v3434 = vpop.f32.mrf.mxu0
      %v3435 = vadd.f32 %v3353, %v3434
      %v3436 = vpop.f32.mrf.mxu0
      %v3437 = vadd.f32 %v3355, %v3436
      %3438 = vdwg.mxu0
      %3439 = vmatprep.subr.mxu0 0.0
      %3440 = vmatpush1.msra.mxu0 0.0
      %3441 = vmatprep.subr.mxu0 0.0
      %3442 = vmatpush1.msra.mxu0 0.0
      %3443 = vmatprep.subr.mxu0 0.0
      %3444 = vmatpush1.msra.mxu0 0.0
      %3445 = vmatprep.subr.mxu0 0.0
      %3446 = vmatpush1.msra.mxu0 0.0
      %3447 = vmatprep.subr.mxu0 0.0
      %3448 = vmatpush1.msra.mxu0 0.0
      %3449 = vmatprep.subr.mxu0 0.0
      %3450 = vmatpush1.msra.mxu0 0.0
      %3451 = vmatprep.subr.mxu0 0.0
      %3452 = vmatpush1.msra.mxu0 0.0
      %3453 = vmatprep.subr.mxu0 0.0
      %3454 = vmatpush1.msra.mxu0 0.0
      %3455 = vmatprep.subr.mxu0 0.0
      %3456 = vmatpush1.msra.mxu0 0.0
      %3457 = vmatprep.subr.mxu0 0.0
      %3458 = vmatpush1.msra.mxu0 0.0
      %3459 = vmatprep.subr.mxu0 0.0
      %3460 = vmatpush1.msra.mxu0 0.0
      %3461 = vmatprep.subr.mxu0 0.0
      %3462 = vmatpush1.msra.mxu0 0.0
      %3463 = vmatprep.subr.mxu0 0.0
      %3464 = vmatpush1.msra.mxu0 0.0
      %3465 = vmatprep.subr.mxu0 0.0
      %3466 = vmatpush1.msra.mxu0 0.0
      %3467 = vmatprep.subr.mxu0 0.0
      %3468 = vmatpush1.msra.mxu0 0.0
      %v3469 = vand.u32 %v3277, 4294901760
      %v3470 = vsub.f32 %v3277, %v3469
      %3471 = vmatprep.subr.mxu0 %v3470
      %v3472 = vand.u32 %v3274, 4294901760
      %v3473 = vsub.f32 %v3274, %v3472
      %3474 = vmatpush1.msra.mxu0 %v3473
      %3475 = vmatprep.subr.mxu0 0.0
      %3476 = vmatpush2.msra.mxu0 0.0
      %3477 = vmatprep.subr.mxu0 0.0
      %3478 = vmatpush2.msra.mxu0 0.0
      %3479 = vmatprep.subr.mxu0 0.0
      %3480 = vmatpush2.msra.mxu0 0.0
      %3481 = vmatprep.subr.mxu0 0.0
      %3482 = vmatpush2.msra.mxu0 0.0
      %3483 = vmatprep.subr.mxu0 0.0
      %3484 = vmatpush2.msra.mxu0 0.0
      %3485 = vmatprep.subr.mxu0 0.0
      %3486 = vmatpush2.msra.mxu0 0.0
      %3487 = vmatprep.subr.mxu0 0.0
      %3488 = vmatpush2.msra.mxu0 0.0
      %3489 = vmatprep.subr.mxu0 0.0
      %3490 = vmatpush2.msra.mxu0 0.0
      %3491 = vmatprep.subr.mxu0 0.0
      %3492 = vmatpush2.msra.mxu0 0.0
      %3493 = vmatprep.subr.mxu0 0.0
      %3494 = vmatpush2.msra.mxu0 0.0
      %3495 = vmatprep.subr.mxu0 0.0
      %3496 = vmatpush2.msra.mxu0 0.0
      %3497 = vmatprep.subr.mxu0 0.0
      %3498 = vmatpush2.msra.mxu0 0.0
      %3499 = vmatprep.subr.mxu0 0.0
      %3500 = vmatpush2.msra.mxu0 0.0
      %3501 = vmatprep.subr.mxu0 0.0
      %3502 = vmatpush2.msra.mxu0 0.0
      %3503 = vmatprep.subr.mxu0 0.0
      %3504 = vmatpush2.msra.mxu0 0.0
      %3505 = vmatprep.subr.mxu0 0.0
      %3506 = vmatpush2.msra.mxu0 0.0
      %3507 = vmatprep.mubr.f32.mxu0 0.0
      %v3508 = vand.u32 %v3271, 4294901760
      %v3509 = vsub.f32 %v3271, %v3508
      %3510 = vmatmul.mubr.f32.gmra.mxu0 %v3509
      %v3511 = vpop.f32.mrf.mxu0
      %v3512 = vadd.f32 %v3435, %v3511
      %v3513 = vpop.f32.mrf.mxu0
      %v3514 = vadd.f32 %v3437, %v3513
      %3515 = vdwg.mxu0
      %3516 = vmatprep.subr.mxu0 0.0
      %3517 = vmatpush1.msra.mxu0 0.0
      %3518 = vmatprep.subr.mxu0 0.0
      %3519 = vmatpush1.msra.mxu0 0.0
      %3520 = vmatprep.subr.mxu0 0.0
      %3521 = vmatpush1.msra.mxu0 0.0
      %3522 = vmatprep.subr.mxu0 0.0
      %3523 = vmatpush1.msra.mxu0 0.0
      %3524 = vmatprep.subr.mxu0 0.0
      %3525 = vmatpush1.msra.mxu0 0.0
      %3526 = vmatprep.subr.mxu0 0.0
      %3527 = vmatpush1.msra.mxu0 0.0
      %3528 = vmatprep.subr.mxu0 0.0
      %3529 = vmatpush1.msra.mxu0 0.0
      %3530 = vmatprep.subr.mxu0 0.0
      %3531 = vmatpush1.msra.mxu0 0.0
      %3532 = vmatprep.subr.mxu0 0.0
      %3533 = vmatpush1.msra.mxu0 0.0
      %3534 = vmatprep.subr.mxu0 0.0
      %3535 = vmatpush1.msra.mxu0 0.0
      %3536 = vmatprep.subr.mxu0 0.0
      %3537 = vmatpush1.msra.mxu0 0.0
      %3538 = vmatprep.subr.mxu0 0.0
      %3539 = vmatpush1.msra.mxu0 0.0
      %3540 = vmatprep.subr.mxu0 0.0
      %3541 = vmatpush1.msra.mxu0 0.0
      %3542 = vmatprep.subr.mxu0 0.0
      %3543 = vmatpush1.msra.mxu0 0.0
      %3544 = vmatprep.subr.mxu0 0.0
      %3545 = vmatpush1.msra.mxu0 0.0
      %v3546 = vand.u32 %v3277, 4294901760
      %3547 = vmatprep.subr.mxu0 %v3546
      %v3548 = vand.u32 %v3274, 4294901760
      %3549 = vmatpush1.msra.mxu0 %v3548
      %3550 = vmatprep.subr.mxu0 0.0
      %3551 = vmatpush2.msra.mxu0 0.0
      %3552 = vmatprep.subr.mxu0 0.0
      %3553 = vmatpush2.msra.mxu0 0.0
      %3554 = vmatprep.subr.mxu0 0.0
      %3555 = vmatpush2.msra.mxu0 0.0
      %3556 = vmatprep.subr.mxu0 0.0
      %3557 = vmatpush2.msra.mxu0 0.0
      %3558 = vmatprep.subr.mxu0 0.0
      %3559 = vmatpush2.msra.mxu0 0.0
      %3560 = vmatprep.subr.mxu0 0.0
      %3561 = vmatpush2.msra.mxu0 0.0
      %3562 = vmatprep.subr.mxu0 0.0
      %3563 = vmatpush2.msra.mxu0 0.0
      %3564 = vmatprep.subr.mxu0 0.0
      %3565 = vmatpush2.msra.mxu0 0.0
      %3566 = vmatprep.subr.mxu0 0.0
      %3567 = vmatpush2.msra.mxu0 0.0
      %3568 = vmatprep.subr.mxu0 0.0
      %3569 = vmatpush2.msra.mxu0 0.0
      %3570 = vmatprep.subr.mxu0 0.0
      %3571 = vmatpush2.msra.mxu0 0.0
      %3572 = vmatprep.subr.mxu0 0.0
      %3573 = vmatpush2.msra.mxu0 0.0
      %3574 = vmatprep.subr.mxu0 0.0
      %3575 = vmatpush2.msra.mxu0 0.0
      %3576 = vmatprep.subr.mxu0 0.0
      %3577 = vmatpush2.msra.mxu0 0.0
      %3578 = vmatprep.subr.mxu0 0.0
      %3579 = vmatpush2.msra.mxu0 0.0
      %3580 = vmatprep.subr.mxu0 0.0
      %3581 = vmatpush2.msra.mxu0 0.0
      %3582 = vmatprep.mubr.f32.mxu0 0.0
      %v3583 = vand.u32 %v3271, 4294901760
      %v3584 = vsub.f32 %v3271, %v3583
      %v3585 = vand.u32 %v3584, 4294901760
      %3586 = vmatmul.mubr.f32.gmra.mxu0 %v3585
      %v3587 = vpop.f32.mrf.mxu0
      %v3588 = vadd.f32 %v3512, %v3587
      %v3589 = vpop.f32.mrf.mxu0
      %v3590 = vadd.f32 %v3514, %v3589
      %3591 = vdwg.mxu0
      %3592 = vmatprep.subr.mxu0 0.0
      %3593 = vmatpush1.msra.mxu0 0.0
      %3594 = vmatprep.subr.mxu0 0.0
      %3595 = vmatpush1.msra.mxu0 0.0
      %3596 = vmatprep.subr.mxu0 0.0
      %3597 = vmatpush1.msra.mxu0 0.0
      %3598 = vmatprep.subr.mxu0 0.0
      %3599 = vmatpush1.msra.mxu0 0.0
      %3600 = vmatprep.subr.mxu0 0.0
      %3601 = vmatpush1.msra.mxu0 0.0
      %3602 = vmatprep.subr.mxu0 0.0
      %3603 = vmatpush1.msra.mxu0 0.0
      %3604 = vmatprep.subr.mxu0 0.0
      %3605 = vmatpush1.msra.mxu0 0.0
      %3606 = vmatprep.subr.mxu0 0.0
      %3607 = vmatpush1.msra.mxu0 0.0
      %3608 = vmatprep.subr.mxu0 0.0
      %3609 = vmatpush1.msra.mxu0 0.0
      %3610 = vmatprep.subr.mxu0 0.0
      %3611 = vmatpush1.msra.mxu0 0.0
      %3612 = vmatprep.subr.mxu0 0.0
      %3613 = vmatpush1.msra.mxu0 0.0
      %3614 = vmatprep.subr.mxu0 0.0
      %3615 = vmatpush1.msra.mxu0 0.0
      %3616 = vmatprep.subr.mxu0 0.0
      %3617 = vmatpush1.msra.mxu0 0.0
      %3618 = vmatprep.subr.mxu0 0.0
      %3619 = vmatpush1.msra.mxu0 0.0
      %3620 = vmatprep.subr.mxu0 0.0
      %3621 = vmatpush1.msra.mxu0 0.0
      %v3622 = vand.u32 %v3277, 4294901760
      %v3623 = vsub.f32 %v3277, %v3622
      %v3624 = vand.u32 %v3623, 4294901760
      %3625 = vmatprep.subr.mxu0 %v3624
      %v3626 = vand.u32 %v3274, 4294901760
      %v3627 = vsub.f32 %v3274, %v3626
      %v3628 = vand.u32 %v3627, 4294901760
      %3629 = vmatpush1.msra.mxu0 %v3628
      %3630 = vmatprep.subr.mxu0 0.0
      %3631 = vmatpush2.msra.mxu0 0.0
      %3632 = vmatprep.subr.mxu0 0.0
      %3633 = vmatpush2.msra.mxu0 0.0
      %3634 = vmatprep.subr.mxu0 0.0
      %3635 = vmatpush2.msra.mxu0 0.0
      %3636 = vmatprep.subr.mxu0 0.0
      %3637 = vmatpush2.msra.mxu0 0.0
      %3638 = vmatprep.subr.mxu0 0.0
      %3639 = vmatpush2.msra.mxu0 0.0
      %3640 = vmatprep.subr.mxu0 0.0
      %3641 = vmatpush2.msra.mxu0 0.0
      %3642 = vmatprep.subr.mxu0 0.0
      %3643 = vmatpush2.msra.mxu0 0.0
      %3644 = vmatprep.subr.mxu0 0.0
      %3645 = vmatpush2.msra.mxu0 0.0
      %3646 = vmatprep.subr.mxu0 0.0
      %3647 = vmatpush2.msra.mxu0 0.0
      %3648 = vmatprep.subr.mxu0 0.0
      %3649 = vmatpush2.msra.mxu0 0.0
      %3650 = vmatprep.subr.mxu0 0.0
      %3651 = vmatpush2.msra.mxu0 0.0
      %3652 = vmatprep.subr.mxu0 0.0
      %3653 = vmatpush2.msra.mxu0 0.0
      %3654 = vmatprep.subr.mxu0 0.0
      %3655 = vmatpush2.msra.mxu0 0.0
      %3656 = vmatprep.subr.mxu0 0.0
      %3657 = vmatpush2.msra.mxu0 0.0
      %3658 = vmatprep.subr.mxu0 0.0
      %3659 = vmatpush2.msra.mxu0 0.0
      %3660 = vmatprep.subr.mxu0 0.0
      %3661 = vmatpush2.msra.mxu0 0.0
      %3662 = vmatprep.mubr.f32.mxu0 0.0
      %v3663 = vand.u32 %v3271, 4294901760
      %3664 = vmatmul.mubr.f32.gmra.mxu0 %v3663
      %v3665 = vpop.f32.mrf.mxu0
      %v3666 = vadd.f32 %v3588, %v3665
      %v3667 = vpop.f32.mrf.mxu0
      %v3668 = vadd.f32 %v3590, %v3667
      %3669 = vdwg.mxu0
      %3670 = vmatprep.subr.mxu0 0.0
      %3671 = vmatpush1.msra.mxu0 0.0
      %3672 = vmatprep.subr.mxu0 0.0
      %3673 = vmatpush1.msra.mxu0 0.0
      %3674 = vmatprep.subr.mxu0 0.0
      %3675 = vmatpush1.msra.mxu0 0.0
      %3676 = vmatprep.subr.mxu0 0.0
      %3677 = vmatpush1.msra.mxu0 0.0
      %3678 = vmatprep.subr.mxu0 0.0
      %3679 = vmatpush1.msra.mxu0 0.0
      %3680 = vmatprep.subr.mxu0 0.0
      %3681 = vmatpush1.msra.mxu0 0.0
      %3682 = vmatprep.subr.mxu0 0.0
      %3683 = vmatpush1.msra.mxu0 0.0
      %3684 = vmatprep.subr.mxu0 0.0
      %3685 = vmatpush1.msra.mxu0 0.0
      %3686 = vmatprep.subr.mxu0 0.0
      %3687 = vmatpush1.msra.mxu0 0.0
      %3688 = vmatprep.subr.mxu0 0.0
      %3689 = vmatpush1.msra.mxu0 0.0
      %3690 = vmatprep.subr.mxu0 0.0
      %3691 = vmatpush1.msra.mxu0 0.0
      %3692 = vmatprep.subr.mxu0 0.0
      %3693 = vmatpush1.msra.mxu0 0.0
      %3694 = vmatprep.subr.mxu0 0.0
      %3695 = vmatpush1.msra.mxu0 0.0
      %3696 = vmatprep.subr.mxu0 0.0
      %3697 = vmatpush1.msra.mxu0 0.0
      %3698 = vmatprep.subr.mxu0 0.0
      %3699 = vmatpush1.msra.mxu0 0.0
      %v3700 = vand.u32 %v3277, 4294901760
      %3701 = vmatprep.subr.mxu0 %v3700
      %v3702 = vand.u32 %v3274, 4294901760
      %3703 = vmatpush1.msra.mxu0 %v3702
      %3704 = vmatprep.subr.mxu0 0.0
      %3705 = vmatpush2.msra.mxu0 0.0
      %3706 = vmatprep.subr.mxu0 0.0
      %3707 = vmatpush2.msra.mxu0 0.0
      %3708 = vmatprep.subr.mxu0 0.0
      %3709 = vmatpush2.msra.mxu0 0.0
      %3710 = vmatprep.subr.mxu0 0.0
      %3711 = vmatpush2.msra.mxu0 0.0
      %3712 = vmatprep.subr.mxu0 0.0
      %3713 = vmatpush2.msra.mxu0 0.0
      %3714 = vmatprep.subr.mxu0 0.0
      %3715 = vmatpush2.msra.mxu0 0.0
      %3716 = vmatprep.subr.mxu0 0.0
      %3717 = vmatpush2.msra.mxu0 0.0
      %3718 = vmatprep.subr.mxu0 0.0
      %3719 = vmatpush2.msra.mxu0 0.0
      %3720 = vmatprep.subr.mxu0 0.0
      %3721 = vmatpush2.msra.mxu0 0.0
      %3722 = vmatprep.subr.mxu0 0.0
      %3723 = vmatpush2.msra.mxu0 0.0
      %3724 = vmatprep.subr.mxu0 0.0
      %3725 = vmatpush2.msra.mxu0 0.0
      %3726 = vmatprep.subr.mxu0 0.0
      %3727 = vmatpush2.msra.mxu0 0.0
      %3728 = vmatprep.subr.mxu0 0.0
      %3729 = vmatpush2.msra.mxu0 0.0
      %3730 = vmatprep.subr.mxu0 0.0
      %3731 = vmatpush2.msra.mxu0 0.0
      %3732 = vmatprep.subr.mxu0 0.0
      %3733 = vmatpush2.msra.mxu0 0.0
      %3734 = vmatprep.subr.mxu0 0.0
      %3735 = vmatpush2.msra.mxu0 0.0
      %3736 = vmatprep.mubr.f32.mxu0 0.0
      %v3737 = vand.u32 %v3271, 4294901760
      %3738 = vmatmul.mubr.f32.gmra.mxu0 %v3737
      %v3739 = vpop.f32.mrf.mxu0
      %v3740 = vadd.f32 %v3666, %v3739
      %v3741 = vpop.f32.mrf.mxu0
      %v3742 = vadd.f32 %v3668, %v3741
      %3743 = vdwg.mxu0
      %vm3744 = vmand %vm245, %vm748
      %vm3745 = vmand %vm246, %vm749
      %v3746 = vsel %vm3744, 1, 0
      %v3747 = vsel %vm3745, 1, 0
      %v3748 = vcvt.s32.f32 %v3746
      %v3749 = vcvt.s32.f32 %v3747
      %v3750 = vlaneseq
      %v3751 = vshrl.u32 %v3750, 7
      %v3752 = vsub.s32 0, %v3751
      %v3753 = vrot.slane %v3748, %v3752
      %v3754 = vlaneseq
      %v3755 = vshrl.u32 %v3754, 7
      %v3756 = vsub.s32 0, %v3755
      %v3757 = vrot.slane %v3749, %v3756
      %v3758 = vmul.f32 %v3740, %v3753
      %v3759 = vmul.f32 %v3742, %v3757
      %v3760 = vadd.f32 %v3256, %v3758
      %v3761 = vadd.f32 %v3257, %v3759
      %3762 = vrot.lane.b32.xlu0 %v251, 112
      %v3763 = vpop.permute.xlu0 %3762
      %3764 = vrot.lane.b32.xlu0 %v235, 112
      %v3765 = vpop.permute.xlu0 %3764
      %3766 = vrot.lane.b32.xlu0 %v2754, 112
      %v3767 = vpop.permute.xlu0 %3766
      %vm3768 = vcmp.lt.s32.totalorder %v237, 112
      %v3769 = vsel %vm3768, %v3765, %v3767
      %v3770 = vsel %vm3768, %v3763, %v3765
      %v3771 = vld [vmem:[%s1] sm:$0x3]
      %3773 = vrot.lane.b32.xlu0 %v3771, 100
      %v3774 = vpop.permute.xlu0 %3773
      %v3775 = vsel %vm263, %v3774, 0
      %v3778 = vsel %vm267, %v3770, 0
      %v3781 = vsel %vm267, %v3769, 0
      %3783 = vmatprep.subr.mxu0 0.0
      %3784 = vmatpush1.msra.mxu0 0.0
      %3785 = vmatprep.subr.mxu0 0.0
      %3786 = vmatpush1.msra.mxu0 0.0
      %3787 = vmatprep.subr.mxu0 0.0
      %3788 = vmatpush1.msra.mxu0 0.0
      %3789 = vmatprep.subr.mxu0 0.0
      %3790 = vmatpush1.msra.mxu0 0.0
      %3791 = vmatprep.subr.mxu0 0.0
      %3792 = vmatpush1.msra.mxu0 0.0
      %3793 = vmatprep.subr.mxu0 0.0
      %3794 = vmatpush1.msra.mxu0 0.0
      %3795 = vmatprep.subr.mxu0 0.0
      %3796 = vmatpush1.msra.mxu0 0.0
      %3797 = vmatprep.subr.mxu0 0.0
      %3798 = vmatpush1.msra.mxu0 0.0
      %3799 = vmatprep.subr.mxu0 0.0
      %3800 = vmatpush1.msra.mxu0 0.0
      %3801 = vmatprep.subr.mxu0 0.0
      %3802 = vmatpush1.msra.mxu0 0.0
      %3803 = vmatprep.subr.mxu0 0.0
      %3804 = vmatpush1.msra.mxu0 0.0
      %3805 = vmatprep.subr.mxu0 0.0
      %3806 = vmatpush1.msra.mxu0 0.0
      %3807 = vmatprep.subr.mxu0 0.0
      %3808 = vmatpush1.msra.mxu0 0.0
      %3809 = vmatprep.subr.mxu0 0.0
      %3810 = vmatpush1.msra.mxu0 0.0
      %3811 = vmatprep.subr.mxu0 0.0
      %3812 = vmatpush1.msra.mxu0 0.0
      %v3813 = vand.u32 %v3781, 4294901760
      %3814 = vmatprep.subr.mxu0 %v3813
      %v3815 = vand.u32 %v3778, 4294901760
      %3816 = vmatpush1.msra.mxu0 %v3815
      %3817 = vmatprep.subr.mxu0 0.0
      %3818 = vmatpush2.msra.mxu0 0.0
      %3819 = vmatprep.subr.mxu0 0.0
      %3820 = vmatpush2.msra.mxu0 0.0
      %3821 = vmatprep.subr.mxu0 0.0
      %3822 = vmatpush2.msra.mxu0 0.0
      %3823 = vmatprep.subr.mxu0 0.0
      %3824 = vmatpush2.msra.mxu0 0.0
      %3825 = vmatprep.subr.mxu0 0.0
      %3826 = vmatpush2.msra.mxu0 0.0
      %3827 = vmatprep.subr.mxu0 0.0
      %3828 = vmatpush2.msra.mxu0 0.0
      %3829 = vmatprep.subr.mxu0 0.0
      %3830 = vmatpush2.msra.mxu0 0.0
      %3831 = vmatprep.subr.mxu0 0.0
      %3832 = vmatpush2.msra.mxu0 0.0
      %3833 = vmatprep.subr.mxu0 0.0
      %3834 = vmatpush2.msra.mxu0 0.0
      %3835 = vmatprep.subr.mxu0 0.0
      %3836 = vmatpush2.msra.mxu0 0.0
      %3837 = vmatprep.subr.mxu0 0.0
      %3838 = vmatpush2.msra.mxu0 0.0
      %3839 = vmatprep.subr.mxu0 0.0
      %3840 = vmatpush2.msra.mxu0 0.0
      %3841 = vmatprep.subr.mxu0 0.0
      %3842 = vmatpush2.msra.mxu0 0.0
      %3843 = vmatprep.subr.mxu0 0.0
      %3844 = vmatpush2.msra.mxu0 0.0
      %3845 = vmatprep.subr.mxu0 0.0
      %3846 = vmatpush2.msra.mxu0 0.0
      %3847 = vmatprep.subr.mxu0 0.0
      %3848 = vmatpush2.msra.mxu0 0.0
      %3849 = vmatprep.mubr.f32.mxu0 0.0
      %v3850 = vand.u32 %v3775, 4294901760
      %v3851 = vsub.f32 %v3775, %v3850
      %v3852 = vand.u32 %v3851, 4294901760
      %v3853 = vsub.f32 %v3851, %v3852
      %v3854 = vand.u32 %v3853, 4294901760
      %3855 = vmatmul.mubr.f32.gmra.mxu0 %v3854
      %v3856 = vpop.f32.mrf.mxu0
      %v3857 = vadd.f32 0.0, %v3856
      %v3858 = vpop.f32.mrf.mxu0
      %v3859 = vadd.f32 0.0, %v3858
      %3860 = vdwg.mxu0
      %3861 = vmatprep.subr.mxu0 0.0
      %3862 = vmatpush1.msra.mxu0 0.0
      %3863 = vmatprep.subr.mxu0 0.0
      %3864 = vmatpush1.msra.mxu0 0.0
      %3865 = vmatprep.subr.mxu0 0.0
      %3866 = vmatpush1.msra.mxu0 0.0
      %3867 = vmatprep.subr.mxu0 0.0
      %3868 = vmatpush1.msra.mxu0 0.0
      %3869 = vmatprep.subr.mxu0 0.0
      %3870 = vmatpush1.msra.mxu0 0.0
      %3871 = vmatprep.subr.mxu0 0.0
      %3872 = vmatpush1.msra.mxu0 0.0
      %3873 = vmatprep.subr.mxu0 0.0
      %3874 = vmatpush1.msra.mxu0 0.0
      %3875 = vmatprep.subr.mxu0 0.0
      %3876 = vmatpush1.msra.mxu0 0.0
      %3877 = vmatprep.subr.mxu0 0.0
      %3878 = vmatpush1.msra.mxu0 0.0
      %3879 = vmatprep.subr.mxu0 0.0
      %3880 = vmatpush1.msra.mxu0 0.0
      %3881 = vmatprep.subr.mxu0 0.0
      %3882 = vmatpush1.msra.mxu0 0.0
      %3883 = vmatprep.subr.mxu0 0.0
      %3884 = vmatpush1.msra.mxu0 0.0
      %3885 = vmatprep.subr.mxu0 0.0
      %3886 = vmatpush1.msra.mxu0 0.0
      %3887 = vmatprep.subr.mxu0 0.0
      %3888 = vmatpush1.msra.mxu0 0.0
      %3889 = vmatprep.subr.mxu0 0.0
      %3890 = vmatpush1.msra.mxu0 0.0
      %v3891 = vand.u32 %v3781, 4294901760
      %v3892 = vsub.f32 %v3781, %v3891
      %v3893 = vand.u32 %v3892, 4294901760
      %v3894 = vsub.f32 %v3892, %v3893
      %v3895 = vand.u32 %v3894, 4294901760
      %3896 = vmatprep.subr.mxu0 %v3895
      %v3897 = vand.u32 %v3778, 4294901760
      %v3898 = vsub.f32 %v3778, %v3897
      %v3899 = vand.u32 %v3898, 4294901760
      %v3900 = vsub.f32 %v3898, %v3899
      %v3901 = vand.u32 %v3900, 4294901760
      %3902 = vmatpush1.msra.mxu0 %v3901
      %3903 = vmatprep.subr.mxu0 0.0
      %3904 = vmatpush2.msra.mxu0 0.0
      %3905 = vmatprep.subr.mxu0 0.0
      %3906 = vmatpush2.msra.mxu0 0.0
      %3907 = vmatprep.subr.mxu0 0.0
      %3908 = vmatpush2.msra.mxu0 0.0
      %3909 = vmatprep.subr.mxu0 0.0
      %3910 = vmatpush2.msra.mxu0 0.0
      %3911 = vmatprep.subr.mxu0 0.0
      %3912 = vmatpush2.msra.mxu0 0.0
      %3913 = vmatprep.subr.mxu0 0.0
      %3914 = vmatpush2.msra.mxu0 0.0
      %3915 = vmatprep.subr.mxu0 0.0
      %3916 = vmatpush2.msra.mxu0 0.0
      %3917 = vmatprep.subr.mxu0 0.0
      %3918 = vmatpush2.msra.mxu0 0.0
      %3919 = vmatprep.subr.mxu0 0.0
      %3920 = vmatpush2.msra.mxu0 0.0
      %3921 = vmatprep.subr.mxu0 0.0
      %3922 = vmatpush2.msra.mxu0 0.0
      %3923 = vmatprep.subr.mxu0 0.0
      %3924 = vmatpush2.msra.mxu0 0.0
      %3925 = vmatprep.subr.mxu0 0.0
      %3926 = vmatpush2.msra.mxu0 0.0
      %3927 = vmatprep.subr.mxu0 0.0
      %3928 = vmatpush2.msra.mxu0 0.0
      %3929 = vmatprep.subr.mxu0 0.0
      %3930 = vmatpush2.msra.mxu0 0.0
      %3931 = vmatprep.subr.mxu0 0.0
      %3932 = vmatpush2.msra.mxu0 0.0
      %3933 = vmatprep.subr.mxu0 0.0
      %3934 = vmatpush2.msra.mxu0 0.0
      %3935 = vmatprep.mubr.f32.mxu0 0.0
      %v3936 = vand.u32 %v3775, 4294901760
      %3937 = vmatmul.mubr.f32.gmra.mxu0 %v3936
      %v3938 = vpop.f32.mrf.mxu0
      %v3939 = vadd.f32 %v3857, %v3938
      %v3940 = vpop.f32.mrf.mxu0
      %v3941 = vadd.f32 %v3859, %v3940
      %3942 = vdwg.mxu0
      %3943 = vmatprep.subr.mxu0 0.0
      %3944 = vmatpush1.msra.mxu0 0.0
      %3945 = vmatprep.subr.mxu0 0.0
      %3946 = vmatpush1.msra.mxu0 0.0
      %3947 = vmatprep.subr.mxu0 0.0
      %3948 = vmatpush1.msra.mxu0 0.0
      %3949 = vmatprep.subr.mxu0 0.0
      %3950 = vmatpush1.msra.mxu0 0.0
      %3951 = vmatprep.subr.mxu0 0.0
      %3952 = vmatpush1.msra.mxu0 0.0
      %3953 = vmatprep.subr.mxu0 0.0
      %3954 = vmatpush1.msra.mxu0 0.0
      %3955 = vmatprep.subr.mxu0 0.0
      %3956 = vmatpush1.msra.mxu0 0.0
      %3957 = vmatprep.subr.mxu0 0.0
      %3958 = vmatpush1.msra.mxu0 0.0
      %3959 = vmatprep.subr.mxu0 0.0
      %3960 = vmatpush1.msra.mxu0 0.0
      %3961 = vmatprep.subr.mxu0 0.0
      %3962 = vmatpush1.msra.mxu0 0.0
      %3963 = vmatprep.subr.mxu0 0.0
      %3964 = vmatpush1.msra.mxu0 0.0
      %3965 = vmatprep.subr.mxu0 0.0
      %3966 = vmatpush1.msra.mxu0 0.0
      %3967 = vmatprep.subr.mxu0 0.0
      %3968 = vmatpush1.msra.mxu0 0.0
      %3969 = vmatprep.subr.mxu0 0.0
      %3970 = vmatpush1.msra.mxu0 0.0
      %3971 = vmatprep.subr.mxu0 0.0
      %3972 = vmatpush1.msra.mxu0 0.0
      %v3973 = vand.u32 %v3781, 4294901760
      %v3974 = vsub.f32 %v3781, %v3973
      %3975 = vmatprep.subr.mxu0 %v3974
      %v3976 = vand.u32 %v3778, 4294901760
      %v3977 = vsub.f32 %v3778, %v3976
      %3978 = vmatpush1.msra.mxu0 %v3977
      %3979 = vmatprep.subr.mxu0 0.0
      %3980 = vmatpush2.msra.mxu0 0.0
      %3981 = vmatprep.subr.mxu0 0.0
      %3982 = vmatpush2.msra.mxu0 0.0
      %3983 = vmatprep.subr.mxu0 0.0
      %3984 = vmatpush2.msra.mxu0 0.0
      %3985 = vmatprep.subr.mxu0 0.0
      %3986 = vmatpush2.msra.mxu0 0.0
      %3987 = vmatprep.subr.mxu0 0.0
      %3988 = vmatpush2.msra.mxu0 0.0
      %3989 = vmatprep.subr.mxu0 0.0
      %3990 = vmatpush2.msra.mxu0 0.0
      %3991 = vmatprep.subr.mxu0 0.0
      %3992 = vmatpush2.msra.mxu0 0.0
      %3993 = vmatprep.subr.mxu0 0.0
      %3994 = vmatpush2.msra.mxu0 0.0
      %3995 = vmatprep.subr.mxu0 0.0
      %3996 = vmatpush2.msra.mxu0 0.0
      %3997 = vmatprep.subr.mxu0 0.0
      %3998 = vmatpush2.msra.mxu0 0.0
      %3999 = vmatprep.subr.mxu0 0.0
      %4000 = vmatpush2.msra.mxu0 0.0
      %4001 = vmatprep.subr.mxu0 0.0
      %4002 = vmatpush2.msra.mxu0 0.0
      %4003 = vmatprep.subr.mxu0 0.0
      %4004 = vmatpush2.msra.mxu0 0.0
      %4005 = vmatprep.subr.mxu0 0.0
      %4006 = vmatpush2.msra.mxu0 0.0
      %4007 = vmatprep.subr.mxu0 0.0
      %4008 = vmatpush2.msra.mxu0 0.0
      %4009 = vmatprep.subr.mxu0 0.0
      %4010 = vmatpush2.msra.mxu0 0.0
      %4011 = vmatprep.mubr.f32.mxu0 0.0
      %v4012 = vand.u32 %v3775, 4294901760
      %v4013 = vsub.f32 %v3775, %v4012
      %4014 = vmatmul.mubr.f32.gmra.mxu0 %v4013
      %v4015 = vpop.f32.mrf.mxu0
      %v4016 = vadd.f32 %v3939, %v4015
      %v4017 = vpop.f32.mrf.mxu0
      %v4018 = vadd.f32 %v3941, %v4017
      %4019 = vdwg.mxu0
      %4020 = vmatprep.subr.mxu0 0.0
      %4021 = vmatpush1.msra.mxu0 0.0
      %4022 = vmatprep.subr.mxu0 0.0
      %4023 = vmatpush1.msra.mxu0 0.0
      %4024 = vmatprep.subr.mxu0 0.0
      %4025 = vmatpush1.msra.mxu0 0.0
      %4026 = vmatprep.subr.mxu0 0.0
      %4027 = vmatpush1.msra.mxu0 0.0
      %4028 = vmatprep.subr.mxu0 0.0
      %4029 = vmatpush1.msra.mxu0 0.0
      %4030 = vmatprep.subr.mxu0 0.0
      %4031 = vmatpush1.msra.mxu0 0.0
      %4032 = vmatprep.subr.mxu0 0.0
      %4033 = vmatpush1.msra.mxu0 0.0
      %4034 = vmatprep.subr.mxu0 0.0
      %4035 = vmatpush1.msra.mxu0 0.0
      %4036 = vmatprep.subr.mxu0 0.0
      %4037 = vmatpush1.msra.mxu0 0.0
      %4038 = vmatprep.subr.mxu0 0.0
      %4039 = vmatpush1.msra.mxu0 0.0
      %4040 = vmatprep.subr.mxu0 0.0
      %4041 = vmatpush1.msra.mxu0 0.0
      %4042 = vmatprep.subr.mxu0 0.0
      %4043 = vmatpush1.msra.mxu0 0.0
      %4044 = vmatprep.subr.mxu0 0.0
      %4045 = vmatpush1.msra.mxu0 0.0
      %4046 = vmatprep.subr.mxu0 0.0
      %4047 = vmatpush1.msra.mxu0 0.0
      %4048 = vmatprep.subr.mxu0 0.0
      %4049 = vmatpush1.msra.mxu0 0.0
      %v4050 = vand.u32 %v3781, 4294901760
      %4051 = vmatprep.subr.mxu0 %v4050
      %v4052 = vand.u32 %v3778, 4294901760
      %4053 = vmatpush1.msra.mxu0 %v4052
      %4054 = vmatprep.subr.mxu0 0.0
      %4055 = vmatpush2.msra.mxu0 0.0
      %4056 = vmatprep.subr.mxu0 0.0
      %4057 = vmatpush2.msra.mxu0 0.0
      %4058 = vmatprep.subr.mxu0 0.0
      %4059 = vmatpush2.msra.mxu0 0.0
      %4060 = vmatprep.subr.mxu0 0.0
      %4061 = vmatpush2.msra.mxu0 0.0
      %4062 = vmatprep.subr.mxu0 0.0
      %4063 = vmatpush2.msra.mxu0 0.0
      %4064 = vmatprep.subr.mxu0 0.0
      %4065 = vmatpush2.msra.mxu0 0.0
      %4066 = vmatprep.subr.mxu0 0.0
      %4067 = vmatpush2.msra.mxu0 0.0
      %4068 = vmatprep.subr.mxu0 0.0
      %4069 = vmatpush2.msra.mxu0 0.0
      %4070 = vmatprep.subr.mxu0 0.0
      %4071 = vmatpush2.msra.mxu0 0.0
      %4072 = vmatprep.subr.mxu0 0.0
      %4073 = vmatpush2.msra.mxu0 0.0
      %4074 = vmatprep.subr.mxu0 0.0
      %4075 = vmatpush2.msra.mxu0 0.0
      %4076 = vmatprep.subr.mxu0 0.0
      %4077 = vmatpush2.msra.mxu0 0.0
      %4078 = vmatprep.subr.mxu0 0.0
      %4079 = vmatpush2.msra.mxu0 0.0
      %4080 = vmatprep.subr.mxu0 0.0
      %4081 = vmatpush2.msra.mxu0 0.0
      %4082 = vmatprep.subr.mxu0 0.0
      %4083 = vmatpush2.msra.mxu0 0.0
      %4084 = vmatprep.subr.mxu0 0.0
      %4085 = vmatpush2.msra.mxu0 0.0
      %4086 = vmatprep.mubr.f32.mxu0 0.0
      %v4087 = vand.u32 %v3775, 4294901760
      %v4088 = vsub.f32 %v3775, %v4087
      %v4089 = vand.u32 %v4088, 4294901760
      %4090 = vmatmul.mubr.f32.gmra.mxu0 %v4089
      %v4091 = vpop.f32.mrf.mxu0
      %v4092 = vadd.f32 %v4016, %v4091
      %v4093 = vpop.f32.mrf.mxu0
      %v4094 = vadd.f32 %v4018, %v4093
      %4095 = vdwg.mxu0
      %4096 = vmatprep.subr.mxu0 0.0
      %4097 = vmatpush1.msra.mxu0 0.0
      %4098 = vmatprep.subr.mxu0 0.0
      %4099 = vmatpush1.msra.mxu0 0.0
      %4100 = vmatprep.subr.mxu0 0.0
      %4101 = vmatpush1.msra.mxu0 0.0
      %4102 = vmatprep.subr.mxu0 0.0
      %4103 = vmatpush1.msra.mxu0 0.0
      %4104 = vmatprep.subr.mxu0 0.0
      %4105 = vmatpush1.msra.mxu0 0.0
      %4106 = vmatprep.subr.mxu0 0.0
      %4107 = vmatpush1.msra.mxu0 0.0
      %4108 = vmatprep.subr.mxu0 0.0
      %4109 = vmatpush1.msra.mxu0 0.0
      %4110 = vmatprep.subr.mxu0 0.0
      %4111 = vmatpush1.msra.mxu0 0.0
      %4112 = vmatprep.subr.mxu0 0.0
      %4113 = vmatpush1.msra.mxu0 0.0
      %4114 = vmatprep.subr.mxu0 0.0
      %4115 = vmatpush1.msra.mxu0 0.0
      %4116 = vmatprep.subr.mxu0 0.0
      %4117 = vmatpush1.msra.mxu0 0.0
      %4118 = vmatprep.subr.mxu0 0.0
      %4119 = vmatpush1.msra.mxu0 0.0
      %4120 = vmatprep.subr.mxu0 0.0
      %4121 = vmatpush1.msra.mxu0 0.0
      %4122 = vmatprep.subr.mxu0 0.0
      %4123 = vmatpush1.msra.mxu0 0.0
      %4124 = vmatprep.subr.mxu0 0.0
      %4125 = vmatpush1.msra.mxu0 0.0
      %v4126 = vand.u32 %v3781, 4294901760
      %v4127 = vsub.f32 %v3781, %v4126
      %v4128 = vand.u32 %v4127, 4294901760
      %4129 = vmatprep.subr.mxu0 %v4128
      %v4130 = vand.u32 %v3778, 4294901760
      %v4131 = vsub.f32 %v3778, %v4130
      %v4132 = vand.u32 %v4131, 4294901760
      %4133 = vmatpush1.msra.mxu0 %v4132
      %4134 = vmatprep.subr.mxu0 0.0
      %4135 = vmatpush2.msra.mxu0 0.0
      %4136 = vmatprep.subr.mxu0 0.0
      %4137 = vmatpush2.msra.mxu0 0.0
      %4138 = vmatprep.subr.mxu0 0.0
      %4139 = vmatpush2.msra.mxu0 0.0
      %4140 = vmatprep.subr.mxu0 0.0
      %4141 = vmatpush2.msra.mxu0 0.0
      %4142 = vmatprep.subr.mxu0 0.0
      %4143 = vmatpush2.msra.mxu0 0.0
      %4144 = vmatprep.subr.mxu0 0.0
      %4145 = vmatpush2.msra.mxu0 0.0
      %4146 = vmatprep.subr.mxu0 0.0
      %4147 = vmatpush2.msra.mxu0 0.0
      %4148 = vmatprep.subr.mxu0 0.0
      %4149 = vmatpush2.msra.mxu0 0.0
      %4150 = vmatprep.subr.mxu0 0.0
      %4151 = vmatpush2.msra.mxu0 0.0
      %4152 = vmatprep.subr.mxu0 0.0
      %4153 = vmatpush2.msra.mxu0 0.0
      %4154 = vmatprep.subr.mxu0 0.0
      %4155 = vmatpush2.msra.mxu0 0.0
      %4156 = vmatprep.subr.mxu0 0.0
      %4157 = vmatpush2.msra.mxu0 0.0
      %4158 = vmatprep.subr.mxu0 0.0
      %4159 = vmatpush2.msra.mxu0 0.0
      %4160 = vmatprep.subr.mxu0 0.0
      %4161 = vmatpush2.msra.mxu0 0.0
      %4162 = vmatprep.subr.mxu0 0.0
      %4163 = vmatpush2.msra.mxu0 0.0
      %4164 = vmatprep.subr.mxu0 0.0
      %4165 = vmatpush2.msra.mxu0 0.0
      %4166 = vmatprep.mubr.f32.mxu0 0.0
      %v4167 = vand.u32 %v3775, 4294901760
      %4168 = vmatmul.mubr.f32.gmra.mxu0 %v4167
      %v4169 = vpop.f32.mrf.mxu0
      %v4170 = vadd.f32 %v4092, %v4169
      %v4171 = vpop.f32.mrf.mxu0
      %v4172 = vadd.f32 %v4094, %v4171
      %4173 = vdwg.mxu0
      %4174 = vmatprep.subr.mxu0 0.0
      %4175 = vmatpush1.msra.mxu0 0.0
      %4176 = vmatprep.subr.mxu0 0.0
      %4177 = vmatpush1.msra.mxu0 0.0
      %4178 = vmatprep.subr.mxu0 0.0
      %4179 = vmatpush1.msra.mxu0 0.0
      %4180 = vmatprep.subr.mxu0 0.0
      %4181 = vmatpush1.msra.mxu0 0.0
      %4182 = vmatprep.subr.mxu0 0.0
      %4183 = vmatpush1.msra.mxu0 0.0
      %4184 = vmatprep.subr.mxu0 0.0
      %4185 = vmatpush1.msra.mxu0 0.0
      %4186 = vmatprep.subr.mxu0 0.0
      %4187 = vmatpush1.msra.mxu0 0.0
      %4188 = vmatprep.subr.mxu0 0.0
      %4189 = vmatpush1.msra.mxu0 0.0
      %4190 = vmatprep.subr.mxu0 0.0
      %4191 = vmatpush1.msra.mxu0 0.0
      %4192 = vmatprep.subr.mxu0 0.0
      %4193 = vmatpush1.msra.mxu0 0.0
      %4194 = vmatprep.subr.mxu0 0.0
      %4195 = vmatpush1.msra.mxu0 0.0
      %4196 = vmatprep.subr.mxu0 0.0
      %4197 = vmatpush1.msra.mxu0 0.0
      %4198 = vmatprep.subr.mxu0 0.0
      %4199 = vmatpush1.msra.mxu0 0.0
      %4200 = vmatprep.subr.mxu0 0.0
      %4201 = vmatpush1.msra.mxu0 0.0
      %4202 = vmatprep.subr.mxu0 0.0
      %4203 = vmatpush1.msra.mxu0 0.0
      %v4204 = vand.u32 %v3781, 4294901760
      %4205 = vmatprep.subr.mxu0 %v4204
      %v4206 = vand.u32 %v3778, 4294901760
      %4207 = vmatpush1.msra.mxu0 %v4206
      %4208 = vmatprep.subr.mxu0 0.0
      %4209 = vmatpush2.msra.mxu0 0.0
      %4210 = vmatprep.subr.mxu0 0.0
      %4211 = vmatpush2.msra.mxu0 0.0
      %4212 = vmatprep.subr.mxu0 0.0
      %4213 = vmatpush2.msra.mxu0 0.0
      %4214 = vmatprep.subr.mxu0 0.0
      %4215 = vmatpush2.msra.mxu0 0.0
      %4216 = vmatprep.subr.mxu0 0.0
      %4217 = vmatpush2.msra.mxu0 0.0
      %4218 = vmatprep.subr.mxu0 0.0
      %4219 = vmatpush2.msra.mxu0 0.0
      %4220 = vmatprep.subr.mxu0 0.0
      %4221 = vmatpush2.msra.mxu0 0.0
      %4222 = vmatprep.subr.mxu0 0.0
      %4223 = vmatpush2.msra.mxu0 0.0
      %4224 = vmatprep.subr.mxu0 0.0
      %4225 = vmatpush2.msra.mxu0 0.0
      %4226 = vmatprep.subr.mxu0 0.0
      %4227 = vmatpush2.msra.mxu0 0.0
      %4228 = vmatprep.subr.mxu0 0.0
      %4229 = vmatpush2.msra.mxu0 0.0
      %4230 = vmatprep.subr.mxu0 0.0
      %4231 = vmatpush2.msra.mxu0 0.0
      %4232 = vmatprep.subr.mxu0 0.0
      %4233 = vmatpush2.msra.mxu0 0.0
      %4234 = vmatprep.subr.mxu0 0.0
      %4235 = vmatpush2.msra.mxu0 0.0
      %4236 = vmatprep.subr.mxu0 0.0
      %4237 = vmatpush2.msra.mxu0 0.0
      %4238 = vmatprep.subr.mxu0 0.0
      %4239 = vmatpush2.msra.mxu0 0.0
      %4240 = vmatprep.mubr.f32.mxu0 0.0
      %v4241 = vand.u32 %v3775, 4294901760
      %4242 = vmatmul.mubr.f32.gmra.mxu0 %v4241
      %v4243 = vpop.f32.mrf.mxu0
      %v4244 = vadd.f32 %v4170, %v4243
      %v4245 = vpop.f32.mrf.mxu0
      %v4246 = vadd.f32 %v4172, %v4245
      %4247 = vdwg.mxu0
      %v4248 = vsel %vm245, 1, 0
      %v4249 = vsel %vm246, 1, 0
      %v4250 = vcvt.s32.f32 %v4248
      %v4251 = vcvt.s32.f32 %v4249
      %v4252 = vmul.f32 %v4244, %v4250
      %v4253 = vmul.f32 %v4246, %v4251
      %v4254 = vadd.f32 %v3760, %v4252
      %v4255 = vadd.f32 %v3761, %v4253
      %4256 = vrot.lane.b32.xlu0 %v251, 111
      %v4257 = vpop.permute.xlu0 %4256
      %4258 = vrot.lane.b32.xlu0 %v235, 111
      %v4259 = vpop.permute.xlu0 %4258
      %4260 = vrot.lane.b32.xlu0 %v2754, 111
      %v4261 = vpop.permute.xlu0 %4260
      %vm4262 = vcmp.lt.s32.totalorder %v237, 111
      %v4263 = vsel %vm4262, %v4259, %v4261
      %v4264 = vsel %vm4262, %v4257, %v4259
      %v4265 = vld [vmem:[%s1] sm:$0x3]
      %4267 = vrot.lane.b32.xlu0 %v4265, 96
      %v4268 = vpop.permute.xlu0 %4267
      %v4269 = vsel %vm263, %v4268, 0
      %v4272 = vsel %vm267, %v4264, 0
      %v4275 = vsel %vm267, %v4263, 0
      %4277 = vmatprep.subr.mxu0 0.0
      %4278 = vmatpush1.msra.mxu0 0.0
      %4279 = vmatprep.subr.mxu0 0.0
      %4280 = vmatpush1.msra.mxu0 0.0
      %4281 = vmatprep.subr.mxu0 0.0
      %4282 = vmatpush1.msra.mxu0 0.0
      %4283 = vmatprep.subr.mxu0 0.0
      %4284 = vmatpush1.msra.mxu0 0.0
      %4285 = vmatprep.subr.mxu0 0.0
      %4286 = vmatpush1.msra.mxu0 0.0
      %4287 = vmatprep.subr.mxu0 0.0
      %4288 = vmatpush1.msra.mxu0 0.0
      %4289 = vmatprep.subr.mxu0 0.0
      %4290 = vmatpush1.msra.mxu0 0.0
      %4291 = vmatprep.subr.mxu0 0.0
      %4292 = vmatpush1.msra.mxu0 0.0
      %4293 = vmatprep.subr.mxu0 0.0
      %4294 = vmatpush1.msra.mxu0 0.0
      %4295 = vmatprep.subr.mxu0 0.0
      %4296 = vmatpush1.msra.mxu0 0.0
      %4297 = vmatprep.subr.mxu0 0.0
      %4298 = vmatpush1.msra.mxu0 0.0
      %4299 = vmatprep.subr.mxu0 0.0
      %4300 = vmatpush1.msra.mxu0 0.0
      %4301 = vmatprep.subr.mxu0 0.0
      %4302 = vmatpush1.msra.mxu0 0.0
      %4303 = vmatprep.subr.mxu0 0.0
      %4304 = vmatpush1.msra.mxu0 0.0
      %4305 = vmatprep.subr.mxu0 0.0
      %4306 = vmatpush1.msra.mxu0 0.0
      %v4307 = vand.u32 %v4275, 4294901760
      %4308 = vmatprep.subr.mxu0 %v4307
      %v4309 = vand.u32 %v4272, 4294901760
      %4310 = vmatpush1.msra.mxu0 %v4309
      %4311 = vmatprep.subr.mxu0 0.0
      %4312 = vmatpush2.msra.mxu0 0.0
      %4313 = vmatprep.subr.mxu0 0.0
      %4314 = vmatpush2.msra.mxu0 0.0
      %4315 = vmatprep.subr.mxu0 0.0
      %4316 = vmatpush2.msra.mxu0 0.0
      %4317 = vmatprep.subr.mxu0 0.0
      %4318 = vmatpush2.msra.mxu0 0.0
      %4319 = vmatprep.subr.mxu0 0.0
      %4320 = vmatpush2.msra.mxu0 0.0
      %4321 = vmatprep.subr.mxu0 0.0
      %4322 = vmatpush2.msra.mxu0 0.0
      %4323 = vmatprep.subr.mxu0 0.0
      %4324 = vmatpush2.msra.mxu0 0.0
      %4325 = vmatprep.subr.mxu0 0.0
      %4326 = vmatpush2.msra.mxu0 0.0
      %4327 = vmatprep.subr.mxu0 0.0
      %4328 = vmatpush2.msra.mxu0 0.0
      %4329 = vmatprep.subr.mxu0 0.0
      %4330 = vmatpush2.msra.mxu0 0.0
      %4331 = vmatprep.subr.mxu0 0.0
      %4332 = vmatpush2.msra.mxu0 0.0
      %4333 = vmatprep.subr.mxu0 0.0
      %4334 = vmatpush2.msra.mxu0 0.0
      %4335 = vmatprep.subr.mxu0 0.0
      %4336 = vmatpush2.msra.mxu0 0.0
      %4337 = vmatprep.subr.mxu0 0.0
      %4338 = vmatpush2.msra.mxu0 0.0
      %4339 = vmatprep.subr.mxu0 0.0
      %4340 = vmatpush2.msra.mxu0 0.0
      %4341 = vmatprep.subr.mxu0 0.0
      %4342 = vmatpush2.msra.mxu0 0.0
      %4343 = vmatprep.mubr.f32.mxu0 0.0
      %v4344 = vand.u32 %v4269, 4294901760
      %v4345 = vsub.f32 %v4269, %v4344
      %v4346 = vand.u32 %v4345, 4294901760
      %v4347 = vsub.f32 %v4345, %v4346
      %v4348 = vand.u32 %v4347, 4294901760
      %4349 = vmatmul.mubr.f32.gmra.mxu0 %v4348
      %v4350 = vpop.f32.mrf.mxu0
      %v4351 = vadd.f32 0.0, %v4350
      %v4352 = vpop.f32.mrf.mxu0
      %v4353 = vadd.f32 0.0, %v4352
      %4354 = vdwg.mxu0
      %4355 = vmatprep.subr.mxu0 0.0
      %4356 = vmatpush1.msra.mxu0 0.0
      %4357 = vmatprep.subr.mxu0 0.0
      %4358 = vmatpush1.msra.mxu0 0.0
      %4359 = vmatprep.subr.mxu0 0.0
      %4360 = vmatpush1.msra.mxu0 0.0
      %4361 = vmatprep.subr.mxu0 0.0
      %4362 = vmatpush1.msra.mxu0 0.0
      %4363 = vmatprep.subr.mxu0 0.0
      %4364 = vmatpush1.msra.mxu0 0.0
      %4365 = vmatprep.subr.mxu0 0.0
      %4366 = vmatpush1.msra.mxu0 0.0
      %4367 = vmatprep.subr.mxu0 0.0
      %4368 = vmatpush1.msra.mxu0 0.0
      %4369 = vmatprep.subr.mxu0 0.0
      %4370 = vmatpush1.msra.mxu0 0.0
      %4371 = vmatprep.subr.mxu0 0.0
      %4372 = vmatpush1.msra.mxu0 0.0
      %4373 = vmatprep.subr.mxu0 0.0
      %4374 = vmatpush1.msra.mxu0 0.0
      %4375 = vmatprep.subr.mxu0 0.0
      %4376 = vmatpush1.msra.mxu0 0.0
      %4377 = vmatprep.subr.mxu0 0.0
      %4378 = vmatpush1.msra.mxu0 0.0
      %4379 = vmatprep.subr.mxu0 0.0
      %4380 = vmatpush1.msra.mxu0 0.0
      %4381 = vmatprep.subr.mxu0 0.0
      %4382 = vmatpush1.msra.mxu0 0.0
      %4383 = vmatprep.subr.mxu0 0.0
      %4384 = vmatpush1.msra.mxu0 0.0
      %v4385 = vand.u32 %v4275, 4294901760
      %v4386 = vsub.f32 %v4275, %v4385
      %v4387 = vand.u32 %v4386, 4294901760
      %v4388 = vsub.f32 %v4386, %v4387
      %v4389 = vand.u32 %v4388, 4294901760
      %4390 = vmatprep.subr.mxu0 %v4389
      %v4391 = vand.u32 %v4272, 4294901760
      %v4392 = vsub.f32 %v4272, %v4391
      %v4393 = vand.u32 %v4392, 4294901760
      %v4394 = vsub.f32 %v4392, %v4393
      %v4395 = vand.u32 %v4394, 4294901760
      %4396 = vmatpush1.msra.mxu0 %v4395
      %4397 = vmatprep.subr.mxu0 0.0
      %4398 = vmatpush2.msra.mxu0 0.0
      %4399 = vmatprep.subr.mxu0 0.0
      %4400 = vmatpush2.msra.mxu0 0.0
      %4401 = vmatprep.subr.mxu0 0.0
      %4402 = vmatpush2.msra.mxu0 0.0
      %4403 = vmatprep.subr.mxu0 0.0
      %4404 = vmatpush2.msra.mxu0 0.0
      %4405 = vmatprep.subr.mxu0 0.0
      %4406 = vmatpush2.msra.mxu0 0.0
      %4407 = vmatprep.subr.mxu0 0.0
      %4408 = vmatpush2.msra.mxu0 0.0
      %4409 = vmatprep.subr.mxu0 0.0
      %4410 = vmatpush2.msra.mxu0 0.0
      %4411 = vmatprep.subr.mxu0 0.0
      %4412 = vmatpush2.msra.mxu0 0.0
      %4413 = vmatprep.subr.mxu0 0.0
      %4414 = vmatpush2.msra.mxu0 0.0
      %4415 = vmatprep.subr.mxu0 0.0
      %4416 = vmatpush2.msra.mxu0 0.0
      %4417 = vmatprep.subr.mxu0 0.0
      %4418 = vmatpush2.msra.mxu0 0.0
      %4419 = vmatprep.subr.mxu0 0.0
      %4420 = vmatpush2.msra.mxu0 0.0
      %4421 = vmatprep.subr.mxu0 0.0
      %4422 = vmatpush2.msra.mxu0 0.0
      %4423 = vmatprep.subr.mxu0 0.0
      %4424 = vmatpush2.msra.mxu0 0.0
      %4425 = vmatprep.subr.mxu0 0.0
      %4426 = vmatpush2.msra.mxu0 0.0
      %4427 = vmatprep.subr.mxu0 0.0
      %4428 = vmatpush2.msra.mxu0 0.0
      %4429 = vmatprep.mubr.f32.mxu0 0.0
      %v4430 = vand.u32 %v4269, 4294901760
      %4431 = vmatmul.mubr.f32.gmra.mxu0 %v4430
      %v4432 = vpop.f32.mrf.mxu0
      %v4433 = vadd.f32 %v4351, %v4432
      %v4434 = vpop.f32.mrf.mxu0
      %v4435 = vadd.f32 %v4353, %v4434
      %4436 = vdwg.mxu0
      %4437 = vmatprep.subr.mxu0 0.0
      %4438 = vmatpush1.msra.mxu0 0.0
      %4439 = vmatprep.subr.mxu0 0.0
      %4440 = vmatpush1.msra.mxu0 0.0
      %4441 = vmatprep.subr.mxu0 0.0
      %4442 = vmatpush1.msra.mxu0 0.0
      %4443 = vmatprep.subr.mxu0 0.0
      %4444 = vmatpush1.msra.mxu0 0.0
      %4445 = vmatprep.subr.mxu0 0.0
      %4446 = vmatpush1.msra.mxu0 0.0
      %4447 = vmatprep.subr.mxu0 0.0
      %4448 = vmatpush1.msra.mxu0 0.0
      %4449 = vmatprep.subr.mxu0 0.0
      %4450 = vmatpush1.msra.mxu0 0.0
      %4451 = vmatprep.subr.mxu0 0.0
      %4452 = vmatpush1.msra.mxu0 0.0
      %4453 = vmatprep.subr.mxu0 0.0
      %4454 = vmatpush1.msra.mxu0 0.0
      %4455 = vmatprep.subr.mxu0 0.0
      %4456 = vmatpush1.msra.mxu0 0.0
      %4457 = vmatprep.subr.mxu0 0.0
      %4458 = vmatpush1.msra.mxu0 0.0
      %4459 = vmatprep.subr.mxu0 0.0
      %4460 = vmatpush1.msra.mxu0 0.0
      %4461 = vmatprep.subr.mxu0 0.0
      %4462 = vmatpush1.msra.mxu0 0.0
      %4463 = vmatprep.subr.mxu0 0.0
      %4464 = vmatpush1.msra.mxu0 0.0
      %4465 = vmatprep.subr.mxu0 0.0
      %4466 = vmatpush1.msra.mxu0 0.0
      %v4467 = vand.u32 %v4275, 4294901760
      %v4468 = vsub.f32 %v4275, %v4467
      %4469 = vmatprep.subr.mxu0 %v4468
      %v4470 = vand.u32 %v4272, 4294901760
      %v4471 = vsub.f32 %v4272, %v4470
      %4472 = vmatpush1.msra.mxu0 %v4471
      %4473 = vmatprep.subr.mxu0 0.0
      %4474 = vmatpush2.msra.mxu0 0.0
      %4475 = vmatprep.subr.mxu0 0.0
      %4476 = vmatpush2.msra.mxu0 0.0
      %4477 = vmatprep.subr.mxu0 0.0
      %4478 = vmatpush2.msra.mxu0 0.0
      %4479 = vmatprep.subr.mxu0 0.0
      %4480 = vmatpush2.msra.mxu0 0.0
      %4481 = vmatprep.subr.mxu0 0.0
      %4482 = vmatpush2.msra.mxu0 0.0
      %4483 = vmatprep.subr.mxu0 0.0
      %4484 = vmatpush2.msra.mxu0 0.0
      %4485 = vmatprep.subr.mxu0 0.0
      %4486 = vmatpush2.msra.mxu0 0.0
      %4487 = vmatprep.subr.mxu0 0.0
      %4488 = vmatpush2.msra.mxu0 0.0
      %4489 = vmatprep.subr.mxu0 0.0
      %4490 = vmatpush2.msra.mxu0 0.0
      %4491 = vmatprep.subr.mxu0 0.0
      %4492 = vmatpush2.msra.mxu0 0.0
      %4493 = vmatprep.subr.mxu0 0.0
      %4494 = vmatpush2.msra.mxu0 0.0
      %4495 = vmatprep.subr.mxu0 0.0
      %4496 = vmatpush2.msra.mxu0 0.0
      %4497 = vmatprep.subr.mxu0 0.0
      %4498 = vmatpush2.msra.mxu0 0.0
      %4499 = vmatprep.subr.mxu0 0.0
      %4500 = vmatpush2.msra.mxu0 0.0
      %4501 = vmatprep.subr.mxu0 0.0
      %4502 = vmatpush2.msra.mxu0 0.0
      %4503 = vmatprep.subr.mxu0 0.0
      %4504 = vmatpush2.msra.mxu0 0.0
      %4505 = vmatprep.mubr.f32.mxu0 0.0
      %v4506 = vand.u32 %v4269, 4294901760
      %v4507 = vsub.f32 %v4269, %v4506
      %4508 = vmatmul.mubr.f32.gmra.mxu0 %v4507
      %v4509 = vpop.f32.mrf.mxu0
      %v4510 = vadd.f32 %v4433, %v4509
      %v4511 = vpop.f32.mrf.mxu0
      %v4512 = vadd.f32 %v4435, %v4511
      %4513 = vdwg.mxu0
      %4514 = vmatprep.subr.mxu0 0.0
      %4515 = vmatpush1.msra.mxu0 0.0
      %4516 = vmatprep.subr.mxu0 0.0
      %4517 = vmatpush1.msra.mxu0 0.0
      %4518 = vmatprep.subr.mxu0 0.0
      %4519 = vmatpush1.msra.mxu0 0.0
      %4520 = vmatprep.subr.mxu0 0.0
      %4521 = vmatpush1.msra.mxu0 0.0
      %4522 = vmatprep.subr.mxu0 0.0
      %4523 = vmatpush1.msra.mxu0 0.0
      %4524 = vmatprep.subr.mxu0 0.0
      %4525 = vmatpush1.msra.mxu0 0.0
      %4526 = vmatprep.subr.mxu0 0.0
      %4527 = vmatpush1.msra.mxu0 0.0
      %4528 = vmatprep.subr.mxu0 0.0
      %4529 = vmatpush1.msra.mxu0 0.0
      %4530 = vmatprep.subr.mxu0 0.0
      %4531 = vmatpush1.msra.mxu0 0.0
      %4532 = vmatprep.subr.mxu0 0.0
      %4533 = vmatpush1.msra.mxu0 0.0
      %4534 = vmatprep.subr.mxu0 0.0
      %4535 = vmatpush1.msra.mxu0 0.0
      %4536 = vmatprep.subr.mxu0 0.0
      %4537 = vmatpush1.msra.mxu0 0.0
      %4538 = vmatprep.subr.mxu0 0.0
      %4539 = vmatpush1.msra.mxu0 0.0
      %4540 = vmatprep.subr.mxu0 0.0
      %4541 = vmatpush1.msra.mxu0 0.0
      %4542 = vmatprep.subr.mxu0 0.0
      %4543 = vmatpush1.msra.mxu0 0.0
      %v4544 = vand.u32 %v4275, 4294901760
      %4545 = vmatprep.subr.mxu0 %v4544
      %v4546 = vand.u32 %v4272, 4294901760
      %4547 = vmatpush1.msra.mxu0 %v4546
      %4548 = vmatprep.subr.mxu0 0.0
      %4549 = vmatpush2.msra.mxu0 0.0
      %4550 = vmatprep.subr.mxu0 0.0
      %4551 = vmatpush2.msra.mxu0 0.0
      %4552 = vmatprep.subr.mxu0 0.0
      %4553 = vmatpush2.msra.mxu0 0.0
      %4554 = vmatprep.subr.mxu0 0.0
      %4555 = vmatpush2.msra.mxu0 0.0
      %4556 = vmatprep.subr.mxu0 0.0
      %4557 = vmatpush2.msra.mxu0 0.0
      %4558 = vmatprep.subr.mxu0 0.0
      %4559 = vmatpush2.msra.mxu0 0.0
      %4560 = vmatprep.subr.mxu0 0.0
      %4561 = vmatpush2.msra.mxu0 0.0
      %4562 = vmatprep.subr.mxu0 0.0
      %4563 = vmatpush2.msra.mxu0 0.0
      %4564 = vmatprep.subr.mxu0 0.0
      %4565 = vmatpush2.msra.mxu0 0.0
      %4566 = vmatprep.subr.mxu0 0.0
      %4567 = vmatpush2.msra.mxu0 0.0
      %4568 = vmatprep.subr.mxu0 0.0
      %4569 = vmatpush2.msra.mxu0 0.0
      %4570 = vmatprep.subr.mxu0 0.0
      %4571 = vmatpush2.msra.mxu0 0.0
      %4572 = vmatprep.subr.mxu0 0.0
      %4573 = vmatpush2.msra.mxu0 0.0
      %4574 = vmatprep.subr.mxu0 0.0
      %4575 = vmatpush2.msra.mxu0 0.0
      %4576 = vmatprep.subr.mxu0 0.0
      %4577 = vmatpush2.msra.mxu0 0.0
      %4578 = vmatprep.subr.mxu0 0.0
      %4579 = vmatpush2.msra.mxu0 0.0
      %4580 = vmatprep.mubr.f32.mxu0 0.0
      %v4581 = vand.u32 %v4269, 4294901760
      %v4582 = vsub.f32 %v4269, %v4581
      %v4583 = vand.u32 %v4582, 4294901760
      %4584 = vmatmul.mubr.f32.gmra.mxu0 %v4583
      %v4585 = vpop.f32.mrf.mxu0
      %v4586 = vadd.f32 %v4510, %v4585
      %v4587 = vpop.f32.mrf.mxu0
      %v4588 = vadd.f32 %v4512, %v4587
      %4589 = vdwg.mxu0
      %4590 = vmatprep.subr.mxu0 0.0
      %4591 = vmatpush1.msra.mxu0 0.0
      %4592 = vmatprep.subr.mxu0 0.0
      %4593 = vmatpush1.msra.mxu0 0.0
      %4594 = vmatprep.subr.mxu0 0.0
      %4595 = vmatpush1.msra.mxu0 0.0
      %4596 = vmatprep.subr.mxu0 0.0
      %4597 = vmatpush1.msra.mxu0 0.0
      %4598 = vmatprep.subr.mxu0 0.0
      %4599 = vmatpush1.msra.mxu0 0.0
      %4600 = vmatprep.subr.mxu0 0.0
      %4601 = vmatpush1.msra.mxu0 0.0
      %4602 = vmatprep.subr.mxu0 0.0
      %4603 = vmatpush1.msra.mxu0 0.0
      %4604 = vmatprep.subr.mxu0 0.0
      %4605 = vmatpush1.msra.mxu0 0.0
      %4606 = vmatprep.subr.mxu0 0.0
      %4607 = vmatpush1.msra.mxu0 0.0
      %4608 = vmatprep.subr.mxu0 0.0
      %4609 = vmatpush1.msra.mxu0 0.0
      %4610 = vmatprep.subr.mxu0 0.0
      %4611 = vmatpush1.msra.mxu0 0.0
      %4612 = vmatprep.subr.mxu0 0.0
      %4613 = vmatpush1.msra.mxu0 0.0
      %4614 = vmatprep.subr.mxu0 0.0
      %4615 = vmatpush1.msra.mxu0 0.0
      %4616 = vmatprep.subr.mxu0 0.0
      %4617 = vmatpush1.msra.mxu0 0.0
      %4618 = vmatprep.subr.mxu0 0.0
      %4619 = vmatpush1.msra.mxu0 0.0
      %v4620 = vand.u32 %v4275, 4294901760
      %v4621 = vsub.f32 %v4275, %v4620
      %v4622 = vand.u32 %v4621, 4294901760
      %4623 = vmatprep.subr.mxu0 %v4622
      %v4624 = vand.u32 %v4272, 4294901760
      %v4625 = vsub.f32 %v4272, %v4624
      %v4626 = vand.u32 %v4625, 4294901760
      %4627 = vmatpush1.msra.mxu0 %v4626
      %4628 = vmatprep.subr.mxu0 0.0
      %4629 = vmatpush2.msra.mxu0 0.0
      %4630 = vmatprep.subr.mxu0 0.0
      %4631 = vmatpush2.msra.mxu0 0.0
      %4632 = vmatprep.subr.mxu0 0.0
      %4633 = vmatpush2.msra.mxu0 0.0
      %4634 = vmatprep.subr.mxu0 0.0
      %4635 = vmatpush2.msra.mxu0 0.0
      %4636 = vmatprep.subr.mxu0 0.0
      %4637 = vmatpush2.msra.mxu0 0.0
      %4638 = vmatprep.subr.mxu0 0.0
      %4639 = vmatpush2.msra.mxu0 0.0
      %4640 = vmatprep.subr.mxu0 0.0
      %4641 = vmatpush2.msra.mxu0 0.0
      %4642 = vmatprep.subr.mxu0 0.0
      %4643 = vmatpush2.msra.mxu0 0.0
      %4644 = vmatprep.subr.mxu0 0.0
      %4645 = vmatpush2.msra.mxu0 0.0
      %4646 = vmatprep.subr.mxu0 0.0
      %4647 = vmatpush2.msra.mxu0 0.0
      %4648 = vmatprep.subr.mxu0 0.0
      %4649 = vmatpush2.msra.mxu0 0.0
      %4650 = vmatprep.subr.mxu0 0.0
      %4651 = vmatpush2.msra.mxu0 0.0
      %4652 = vmatprep.subr.mxu0 0.0
      %4653 = vmatpush2.msra.mxu0 0.0
      %4654 = vmatprep.subr.mxu0 0.0
      %4655 = vmatpush2.msra.mxu0 0.0
      %4656 = vmatprep.subr.mxu0 0.0
      %4657 = vmatpush2.msra.mxu0 0.0
      %4658 = vmatprep.subr.mxu0 0.0
      %4659 = vmatpush2.msra.mxu0 0.0
      %4660 = vmatprep.mubr.f32.mxu0 0.0
      %v4661 = vand.u32 %v4269, 4294901760
      %4662 = vmatmul.mubr.f32.gmra.mxu0 %v4661
      %v4663 = vpop.f32.mrf.mxu0
      %v4664 = vadd.f32 %v4586, %v4663
      %v4665 = vpop.f32.mrf.mxu0
      %v4666 = vadd.f32 %v4588, %v4665
      %4667 = vdwg.mxu0
      %4668 = vmatprep.subr.mxu0 0.0
      %4669 = vmatpush1.msra.mxu0 0.0
      %4670 = vmatprep.subr.mxu0 0.0
      %4671 = vmatpush1.msra.mxu0 0.0
      %4672 = vmatprep.subr.mxu0 0.0
      %4673 = vmatpush1.msra.mxu0 0.0
      %4674 = vmatprep.subr.mxu0 0.0
      %4675 = vmatpush1.msra.mxu0 0.0
      %4676 = vmatprep.subr.mxu0 0.0
      %4677 = vmatpush1.msra.mxu0 0.0
      %4678 = vmatprep.subr.mxu0 0.0
      %4679 = vmatpush1.msra.mxu0 0.0
      %4680 = vmatprep.subr.mxu0 0.0
      %4681 = vmatpush1.msra.mxu0 0.0
      %4682 = vmatprep.subr.mxu0 0.0
      %4683 = vmatpush1.msra.mxu0 0.0
      %4684 = vmatprep.subr.mxu0 0.0
      %4685 = vmatpush1.msra.mxu0 0.0
      %4686 = vmatprep.subr.mxu0 0.0
      %4687 = vmatpush1.msra.mxu0 0.0
      %4688 = vmatprep.subr.mxu0 0.0
      %4689 = vmatpush1.msra.mxu0 0.0
      %4690 = vmatprep.subr.mxu0 0.0
      %4691 = vmatpush1.msra.mxu0 0.0
      %4692 = vmatprep.subr.mxu0 0.0
      %4693 = vmatpush1.msra.mxu0 0.0
      %4694 = vmatprep.subr.mxu0 0.0
      %4695 = vmatpush1.msra.mxu0 0.0
      %4696 = vmatprep.subr.mxu0 0.0
      %4697 = vmatpush1.msra.mxu0 0.0
      %v4698 = vand.u32 %v4275, 4294901760
      %4699 = vmatprep.subr.mxu0 %v4698
      %v4700 = vand.u32 %v4272, 4294901760
      %4701 = vmatpush1.msra.mxu0 %v4700
      %4702 = vmatprep.subr.mxu0 0.0
      %4703 = vmatpush2.msra.mxu0 0.0
      %4704 = vmatprep.subr.mxu0 0.0
      %4705 = vmatpush2.msra.mxu0 0.0
      %4706 = vmatprep.subr.mxu0 0.0
      %4707 = vmatpush2.msra.mxu0 0.0
      %4708 = vmatprep.subr.mxu0 0.0
      %4709 = vmatpush2.msra.mxu0 0.0
      %4710 = vmatprep.subr.mxu0 0.0
      %4711 = vmatpush2.msra.mxu0 0.0
      %4712 = vmatprep.subr.mxu0 0.0
      %4713 = vmatpush2.msra.mxu0 0.0
      %4714 = vmatprep.subr.mxu0 0.0
      %4715 = vmatpush2.msra.mxu0 0.0
      %4716 = vmatprep.subr.mxu0 0.0
      %4717 = vmatpush2.msra.mxu0 0.0
      %4718 = vmatprep.subr.mxu0 0.0
      %4719 = vmatpush2.msra.mxu0 0.0
      %4720 = vmatprep.subr.mxu0 0.0
      %4721 = vmatpush2.msra.mxu0 0.0
      %4722 = vmatprep.subr.mxu0 0.0
      %4723 = vmatpush2.msra.mxu0 0.0
      %4724 = vmatprep.subr.mxu0 0.0
      %4725 = vmatpush2.msra.mxu0 0.0
      %4726 = vmatprep.subr.mxu0 0.0
      %4727 = vmatpush2.msra.mxu0 0.0
      %4728 = vmatprep.subr.mxu0 0.0
      %4729 = vmatpush2.msra.mxu0 0.0
      %4730 = vmatprep.subr.mxu0 0.0
      %4731 = vmatpush2.msra.mxu0 0.0
      %4732 = vmatprep.subr.mxu0 0.0
      %4733 = vmatpush2.msra.mxu0 0.0
      %4734 = vmatprep.mubr.f32.mxu0 0.0
      %v4735 = vand.u32 %v4269, 4294901760
      %4736 = vmatmul.mubr.f32.gmra.mxu0 %v4735
      %v4737 = vpop.f32.mrf.mxu0
      %v4738 = vadd.f32 %v4664, %v4737
      %v4739 = vpop.f32.mrf.mxu0
      %v4740 = vadd.f32 %v4666, %v4739
      %4741 = vdwg.mxu0
      %vm4742 = vmand %vm245, %vm1757
      %vm4743 = vmand %vm246, %vm1758
      %v4744 = vsel %vm4742, 1, 0
      %v4745 = vsel %vm4743, 1, 0
      %v4746 = vcvt.s32.f32 %v4744
      %v4747 = vcvt.s32.f32 %v4745
      %v4748 = vlaneseq
      %v4749 = vshrl.u32 %v4748, 7
      %v4750 = vsub.s32 0, %v4749
      %v4751 = vrot.slane %v4746, %v4750
      %v4752 = vlaneseq
      %v4753 = vshrl.u32 %v4752, 7
      %v4754 = vsub.s32 0, %v4753
      %v4755 = vrot.slane %v4747, %v4754
      %v4756 = vmul.f32 %v4738, %v4751
      %v4757 = vmul.f32 %v4740, %v4755
      %v4758 = vadd.f32 %v4254, %v4756
      %v4759 = vadd.f32 %v4255, %v4757
      %v4760 = vld [vmem:[%s2] sm:$0x3]
      %4762 = vset.pattern.permute.xlu0 0
      %4763 = vperm.xlu0 %4762, %v4760
      %v4764 = vpop.permute.xlu0 %4763
      %v4766 = vadd.f32 %v4758, %v4764
      %v4767 = vadd.f32 %v4759, %v4764
      %v4770 = vcombine.low %v4766, %v4767
      %v4772 = vunpack.c.l.s4 1983009808
      %v4773 = vunpack.c.0.s8 %v4772
      %v4774 = vlaneseq
      %v4775 = vshrl.u32 %v4774, 7
      %v4776 = vsub.s32 %v4773, %v4775
      %v4777 = vrot.slane %v4770, %v4776
      %4779 = vst [vmem:[%s219] sm:$0xf] %v4777
      %s4780 = smul.u32 2, %s20
      %p4781 = scmp.lt.s32.totalorder %s19, 1
      %s4782 = scalar_select %p4781, %s19, 1
      %p4783 = scmp.lt.s32.totalorder %s4780, 1
      %s4784 = scalar_select %p4783, %s4780, 1
      %s4785 = smul.addr %s4782, 2
      %s4786 = sadd.s32 %s4784, %s4785
      %s4787 = smul.addr %s4786, 2
      %s4788 = scalar_lea.vmem %s4, %s4787
      // Predicated region
      $region41: #{db1_forward.1} parent=35 // pred_check
        %p4789 = pneg %p136
      $region42: #{db1_forward.1} parent=35 // pred_check_branch
        %4791 = sbr.rel (%p4789) target = $region44
      $region43: #{db1_forward.1} parent=35 // pred_region
        %s4792 = smul.u32 2, %s20
      $region44: #{db1_forward.1} parent=35 // pred_fallthru
        _
    $region36: #{db1_forward.1} parent=5 // pred_fallthru
      _
    %p4793 = scmp.le.s32.totalorder 2, %s10
    // Predicated region
    $region45: #{db1_forward.1} parent=5 // pred_check
      %p4794 = pneg %p4793
    $region46: #{db1_forward.1} parent=5 // pred_check_branch
      %4796 = sbr.rel (%p4794) target = $region48
    $region47: #{db1_forward.1} parent=5 // pred_region
      %s4797 = ssub.s32 %s10, 2
      // Predicated region
      $region49: #{db1_forward.1} parent=47 // pred_check
        %p4798 = pneg %p142
      $region50: #{db1_forward.1} parent=47 // pred_check_branch
        %4800 = sbr.rel (%p4798) target = $region52
      $region51: #{db1_forward.1} parent=47 // pred_region
        %s4801 = smul.u32 2, %s22
        %p4802 = scmp.lt.s32.totalorder %s21, 1
        %s4803 = scalar_select %p4802, %s21, 1
        %p4804 = scmp.lt.s32.totalorder %s4801, 1
        %s4805 = scalar_select %p4804, %s4801, 1
        %s4806 = smul.addr %s4803, 2
        %s4807 = sadd.s32 %s4805, %s4806
        %s4808 = smul.addr %s4807, 2
        %s4809 = scalar_lea.vmem %s4, %s4808
      $region52: #{db1_forward.1} parent=47 // pred_fallthru
        _
    $region48: #{db1_forward.1} parent=5 // pred_fallthru
      _
  $region6: #{db1_forward.1} parent=0 // loop_footer
    %s14 = sadd.s32 1, %s10
  $region7: #{db1_forward.1} parent=0 // loop_footer_branch
    %9 = sbr.rel target = $region3
  $region8: #{db1_forward.1} parent=0 // loop_exit
    _

</llo_original>
